<compile_context>
chip_gen: v5e
topology: v5e:2x2
jax: 0.10.0
libtpu: 0.0.40
codegen_flags: <defaults>
</compile_context>

<pallas_src>
from functools import partial

import numpy as np
import jax
import jax.numpy as jnp
from jax import lax
from jax.experimental import pallas as pl
from jax.experimental.pallas import tpu as pltpu

LEAKY_SLOPE = 0.01
BN_EPS = 1e-5
KSIZE = 4

# (Cin, Cout, H_in, stride, pad) for deconvs 1..5; H_out = (H_in-1)*stride - 2*pad + 4
_DECONV_CFG = [
    (64, 64, 1, 1, 0),
    (64, 32, 4, 2, 1),
    (32, 16, 8, 2, 1),
    (16, 8, 16, 2, 1),
    (8, 1, 32, 2, 1),
]


def _leaky(x, slope):
    return jnp.where(x >= 0, x, slope * x)


# ----------------------------- fused decoder kernel -----------------------------

def _decoder_kernel(feat_ref, sfc_ref, tfc_ref,
                    m1_ref, b1_ref, l1_ref,
                    m2_ref, b2_ref, l2_ref,
                    m3_ref, b3_ref, l3_ref,
                    m4_ref, b4_ref, l4_ref,
                    m5_ref, b5_ref, s5_ref,
                    out_ref):
    """One grid step == bs batch samples, full fc + 5-deconv chain in VMEM/vregs."""
    f32 = jnp.float32
    bf16 = jnp.bfloat16

    # fc: folded BatchNorm1d -> LeakyReLU  (the fc Linear is folded into m1)
    h = _leaky(feat_ref[...] * sfc_ref[...] + tfc_ref[...], LEAKY_SLOPE)     # (bs, 64) f32

    # ---- layer 1 (fc Linear + ConvT 1x1->4x4 + BN1): one wide MXU dot ----
    q = jnp.dot(h.astype(bf16), m1_ref[...], preferred_element_type=f32)     # (bs, 1024)
    a1 = _leaky(q + b1_ref[...], LEAKY_SLOPE)
    k1 = l1_ref.shape[-1]                      # = 8 when bs == 1 (K padding), else = bs
    if a1.shape[0] != k1:                      # only the bs == 1 case: replicate the row
        a1 = jnp.broadcast_to(a1, (k1, a1.shape[1]))
    x = None
    for k in range(KSIZE):                     # tiny row-expansion selector dots
        t = jnp.dot(l1_ref[k], a1[:, 256 * k:256 * (k + 1)], preferred_element_type=f32)
        x = t if x is None else x + t          # (4*bs, 256)

    # ---- layers 2..4: one wide lane-map dot + 4 small row-placement dots each ----
    for m_ref, beta_ref, l_ref in ((m2_ref, b2_ref, l2_ref),
                                   (m3_ref, b3_ref, l3_ref),
                                   (m4_ref, b4_ref, l4_ref)):
        p = jnp.dot(x.astype(bf16), m_ref[...], preferred_element_type=f32)  # (bs*Hin, 1024)
        y = None
        for k in range(KSIZE):
            t = jnp.dot(l_ref[k], p[:, 256 * k:256 * (k + 1)],
                        preferred_element_type=f32)                          # (bs*Hout, 256)
            y = t if y is None else y + t
        x = _leaky(y + beta_ref[...], LEAKY_SLOPE)

    # ---- layer 5: lane-dense packed output (row j = [out row 2j | out row 2j+1]) ----
    p = jnp.dot(x.astype(bf16), m5_ref[...], preferred_element_type=f32)     # (bs*32, 384)
    y = (p[:, 0:128]                                                          # ky=1 / ky=2
         + jnp.dot(s5_ref[0], p[:, 128:256], preferred_element_type=f32)      # ky=3, shift +1
         + jnp.dot(s5_ref[1], p[:, 256:384], preferred_element_type=f32)      # ky=0, shift -1
         + b5_ref[...])
    out_ref[...] = y                                                          # (bs*32, 128)


# ----------------------------- one-time parameter prep -----------------------------

def _lane_map(wt, ky, w_in, w_out, stride, pad, scale):
    """M[ix*Cin+ci, ox*Cout+co] = wt[ci,co,ky,kx]*scale[co], ox = stride*ix - pad + kx."""
    cin, cout = wt.shape[:2]
    M = np.zeros((w_in * cin, w_out * cout), np.float32)
    for ix in range(w_in):
        for kx in range(KSIZE):
            ox = stride * ix - pad + kx
            if 0 <= ox < w_out:
                M[ix * cin:(ix + 1) * cin, ox * cout:(ox + 1) * cout] = (
                    wt[:, :, ky, kx] * scale[None, :])
    return M


def _row_selector(ky, h_in, h_out, stride, pad, bs, k_cols=None):
    """Block-diagonal 0/1 selector placing sample-b input row iy at output row
    b*h_out + (stride*iy - pad + ky).  k_cols overrides the column count
    (layer-1 K padding for the bs == 1 broadcast path)."""
    cols = bs * h_in if k_cols is None else k_cols
    L = np.zeros((bs * h_out, cols), np.float32)
    for b in range(bs):
        for iy in range(h_in):
            oy = stride * iy - pad + ky
            if 0 <= oy < h_out:
                col = b * h_in + iy if k_cols is None else b
                L[b * h_out + oy, col] = 1.0
    return L


def prepare_decoder_params(p, bs):
    """Hoisted weight preprocessing (outside the jitted forward).

    Per layer: one wide bf16 lane-map matrix (all 4 kernel rows ky concatenated on
    lanes, BN scale folded), small f32 block-diagonal row-placement selectors, and
    a per-lane f32 bias (conv bias + folded BN shift).  The fc Linear is folded
    into layer-1's map; layer 5 is built to emit the lane-dense packed layout.
    """
    assert bs == 1 or bs % 8 == 0, bs
    s_fc = np.asarray(p["fc_bn_scale"], np.float32).reshape(1, -1)
    t_fc = np.asarray(p["fc_bn_shift"], np.float32).reshape(1, -1)
    Wl = np.asarray(p["Wl"], np.float32)                    # torch Linear: z = h @ Wl.T + bl
    bl = np.asarray(p["bl"], np.float32)

    prepped = [jnp.asarray(s_fc), jnp.asarray(t_fc)]
    for i, (cin, cout, h_in, stride, pad) in enumerate(_DECONV_CFG, start=1):
        wt = np.asarray(p[f"Wd{i}"], np.float32)
        b = np.asarray(p[f"bd{i}"], np.float32)
        if i < len(_DECONV_CFG):                 # layers 1..4 carry a folded BatchNorm2d
            s = np.asarray(p[f"bn{i}_scale"], np.float32)
            t = np.asarray(p[f"bn{i}_shift"], np.float32)
        else:                                    # layer 5: bias only
            s = np.ones((cout,), np.float32)
            t = np.zeros((cout,), np.float32)
        h_out = (h_in - 1) * stride - 2 * pad + KSIZE
        w_in, w_out = h_in, h_out
        maps = [_lane_map(wt, ky, w_in, w_out, stride, pad, s) for ky in range(KSIZE)]
        bias_lane = np.tile(b * s + t, w_out).astype(np.float32)        # (w_out*cout,)

        if i == 1:
            # fold the fc Linear (z = h @ Wl.T + bl) into layer-1's maps / bias
            mcat = np.concatenate([Wl.T @ a for a in maps], axis=1)      # (64, 1024)
            bias = np.concatenate([bl @ a + bias_lane for a in maps])    # (1024,)
            Ls = np.stack([_row_selector(ky, h_in, h_out, stride, pad, bs,
                                         k_cols=max(8, bs)) for ky in range(KSIZE)])
            prepped += [jnp.asarray(mcat, jnp.bfloat16),
                        jnp.asarray(bias.reshape(1, -1), jnp.float32),
                        jnp.asarray(Ls, jnp.float32)]
        elif i < len(_DECONV_CFG):
            mcat = np.concatenate(maps, axis=1)                          # (256, 1024)
            Ls = np.stack([_row_selector(ky, h_in, h_out, stride, pad, bs)
                           for ky in range(KSIZE)])
            prepped += [jnp.asarray(mcat, jnp.bfloat16),
                        jnp.asarray(bias_lane.reshape(1, -1), jnp.float32),
                        jnp.asarray(Ls, jnp.float32)]
        else:
            # layer 5: packed output -- phase 0 lanes [0:64] hold even output rows
            # (ky=1 no shift, ky=3 shift +1), phase 1 lanes [64:128] hold odd rows
            # (ky=2 no shift, ky=0 shift -1).
            n = w_out * cout                                             # 64

            def _embed(m, phase):
                out = np.zeros((m.shape[0], 2 * n), np.float32)
                out[:, phase * n:(phase + 1) * n] = m
                return out

            m_mid = _embed(maps[1], 0) + _embed(maps[2], 1)
            m_dn = _embed(maps[3], 0)
            m_up = _embed(maps[0], 1)
            mcat = np.concatenate([m_mid, m_dn, m_up], axis=1)           # (256, 384)
            half = h_out // 2                                            # 32
            rows = bs * half
            s_dn = np.zeros((rows, rows), np.float32)
            s_up = np.zeros((rows, rows), np.float32)
            for bb in range(bs):
                for j in range(half):
                    if j >= 1:
                        s_dn[bb * half + j, bb * half + j - 1] = 1.0
                    if j + 1 < half:
                        s_up[bb * half + j, bb * half + j + 1] = 1.0
            beta5 = np.full((1, 2 * n), float((b * s + t)[0]), np.float32)
            prepped += [jnp.asarray(mcat, jnp.bfloat16),
                        jnp.asarray(beta5, jnp.float32),
                        jnp.asarray(np.stack([s_dn, s_up]), jnp.float32)]
    return tuple(prepped)


# ----------------------------- forward -----------------------------

def _choose_block_batch(B):
    """Samples per grid step: stack 8 samples' rows on sublanes when the batch
    still allows >= 2 grid steps (keeps both v7x TensorCores busy); otherwise 1."""
    return 8 if (B % 8 == 0 and B >= 16) else 1


@partial(jax.jit, static_argnames=("bs",))
def forward(feat_nchw, prepped, bs):
    B = feat_nchw.shape[0]
    assert B % bs == 0
    steps = B // bs
    feat = feat_nchw.reshape(steps, bs, 64)          # x.view(x.size(0), -1), bs rows per step

    def _full_spec(a):
        nd = a.ndim
        return pl.BlockSpec(a.shape, lambda i, nd=nd: (0,) * nd)

    in_specs = [pl.BlockSpec((None, bs, 64), lambda i: (i, 0, 0))]
    in_specs += [_full_spec(a) for a in prepped]

    out = pl.pallas_call(
        _decoder_kernel,
        out_shape=jax.ShapeDtypeStruct((steps, bs * 32, 128), jnp.float32),
        grid=(steps,),
        in_specs=in_specs,
        out_specs=pl.BlockSpec((None, bs * 32, 128), lambda i: (i, 0, 0)),
        compiler_params=pltpu.CompilerParams(dimension_semantics=("parallel",)),
    )(feat, *prepped)
    # packed row j of sample b holds [output row 2j | output row 2j+1] -> plain reshape
    return out.reshape(B, 64, 64)


# ----------------------------- parameters -----------------------------

def _fold_bn(key, c):
    k1, k2, k3, k4 = jax.random.split(key, 4)
    gamma = 1.0 + 0.1 * jax.random.normal(k1, (c,), jnp.float32)
    beta = 0.05 * jax.random.normal(k2, (c,), jnp.float32)
    mean = 0.1 * jax.random.normal(k3, (c,), jnp.float32)
    var = jax.random.uniform(k4, (c,), jnp.float32, 0.5, 1.5)
    scale = gamma / jnp.sqrt(var + BN_EPS)
    shift = beta - mean * scale
    return scale, shift


def init_params(key):
    ks = jax.random.split(key, 20)
    p = {}
    p["fc_bn_scale"], p["fc_bn_shift"] = _fold_bn(ks[0], 64)
    p["Wl"] = 0.1 * jax.random.normal(ks[1], (64, 64), jnp.float32)
    p["bl"] = 0.05 * jax.random.normal(ks[2], (64,), jnp.float32)
    chans = [(64, 64), (64, 32), (32, 16), (16, 8), (8, 1)]
    for i, (cin, cout) in enumerate(chans, start=1):
        p[f"Wd{i}"] = 0.1 * jax.random.normal(ks[2 + i], (cin, cout, 4, 4), jnp.float32)
        p[f"bd{i}"] = 0.05 * jax.random.normal(ks[7 + i], (cout,), jnp.float32)
        if i < 5:
            p[f"bn{i}_scale"], p[f"bn{i}_shift"] = _fold_bn(ks[12 + i], cout)
    return p


# ----------------------------- pure-JAX reference -----------------------------

def _conv_transpose_ref(x, Wt, b, stride, pad):
    k = Wt.shape[-1]
    Wr = jnp.transpose(Wt, (1, 0, 2, 3))[:, :, ::-1, ::-1]
    out = lax.conv_general_dilated(
        x, Wr, window_strides=(1, 1),
        padding=((k - 1 - pad, k - 1 - pad), (k - 1 - pad, k - 1 - pad)),
        lhs_dilation=(stride, stride),
        dimension_numbers=("NCHW", "OIHW", "NCHW"))
    return out + b[None, :, None, None]


def reference_forward(feat_nchw, p):
    B = feat_nchw.shape[0]
    x = feat_nchw.reshape(B, -1)
    x = _leaky(x * p["fc_bn_scale"] + p["fc_bn_shift"], LEAKY_SLOPE)
    x = x @ p["Wl"].T + p["bl"]
    x = x[:, :, None, None]                       # (B, 64, 1, 1)
    x = _conv_transpose_ref(x, p["Wd1"], p["bd1"], 1, 0)
    x = _leaky(x * p["bn1_scale"][None, :, None, None]
               + p["bn1_shift"][None, :, None, None], LEAKY_SLOPE)
    for i in (2, 3, 4):
        x = _conv_transpose_ref(x, p[f"Wd{i}"], p[f"bd{i}"], 2, 1)
        x = _leaky(x * p[f"bn{i}_scale"][None, :, None, None]
                   + p[f"bn{i}_shift"][None, :, None, None], LEAKY_SLOPE)
    x = _conv_transpose_ref(x, p["Wd5"], p["bd5"], 2, 1)
    return x.reshape(-1, 64, 64)


if __name__ == "__main__":
    key = jax.random.PRNGKey(0)
    pkey, dkey = jax.random.split(key)
    params = init_params(pkey)

    def check(B):
        bs = _choose_block_batch(B)
        prepped = prepare_decoder_params(params, bs)   # one-time weight prep (hoisted)
        feat = jax.random.normal(jax.random.fold_in(dkey, B), (B, 64, 1, 1), jnp.float32)
        out = jax.block_until_ready(forward(feat, prepped, bs))
        assert out.shape == (B, 64, 64), out.shape
        ref = reference_forward(feat, params)
        max_err = float(jnp.max(jnp.abs(out - ref)))
        # 2e-2 tolerance covers the deliberate bf16 lane-map weights plus the
        # default-precision matmuls on both the kernel and XLA reference sides.
        assert jnp.allclose(out, ref, rtol=2e-2, atol=2e-2), max_err

    check(2)      # bs=1  -> grid=(2,): two steps keep both v7x TensorCores busy
    check(16)     # bs=8  -> grid=(2,): batched-rows fast path (main throughput lever)
    print("KERNEL_OK")
</pallas_src>

<mosaic_0001>
module attributes {stable_mosaic.version = 11 : i64} {
  func.func @_decoder_kernel(%arg0: i32, %arg1: memref<1x1x64xf32, #tpu.memory_space<vmem>>, %arg2: memref<1x64xf32, #tpu.memory_space<vmem>>, %arg3: memref<1x64xf32, #tpu.memory_space<vmem>>, %arg4: memref<64x1024xbf16, #tpu.memory_space<vmem>>, %arg5: memref<1x1024xf32, #tpu.memory_space<vmem>>, %arg6: memref<4x4x8xf32, #tpu.memory_space<vmem>>, %arg7: memref<256x1024xbf16, #tpu.memory_space<vmem>>, %arg8: memref<1x256xf32, #tpu.memory_space<vmem>>, %arg9: memref<4x8x4xf32, #tpu.memory_space<vmem>>, %arg10: memref<256x1024xbf16, #tpu.memory_space<vmem>>, %arg11: memref<1x256xf32, #tpu.memory_space<vmem>>, %arg12: memref<4x16x8xf32, #tpu.memory_space<vmem>>, %arg13: memref<256x1024xbf16, #tpu.memory_space<vmem>>, %arg14: memref<1x256xf32, #tpu.memory_space<vmem>>, %arg15: memref<4x32x16xf32, #tpu.memory_space<vmem>>, %arg16: memref<256x384xbf16, #tpu.memory_space<vmem>>, %arg17: memref<1x128xf32, #tpu.memory_space<vmem>>, %arg18: memref<2x32x32xf32, #tpu.memory_space<vmem>>, %arg19: memref<1x32x128xf32, #tpu.memory_space<vmem>>) attributes {dimension_semantics = [#tpu.dimension_semantics<parallel>], iteration_bounds = array<i64: 2>, scalar_prefetch = 0 : i64, scratch_operands = 0 : i64, tpu.core_type = #tpu.core_type<tc>, window_params = [{transform_indices = @transform_0, window_bounds = array<i64: 1, 1, 64>}, {pipeline_mode = #tpu.pipeline_mode<synchronous>, transform_indices = @transform_1, window_bounds = array<i64: 1, 64>}, {pipeline_mode = #tpu.pipeline_mode<synchronous>, transform_indices = @transform_2, window_bounds = array<i64: 1, 64>}, {pipeline_mode = #tpu.pipeline_mode<synchronous>, transform_indices = @transform_3, window_bounds = array<i64: 64, 1024>}, {pipeline_mode = #tpu.pipeline_mode<synchronous>, transform_indices = @transform_4, window_bounds = array<i64: 1, 1024>}, {pipeline_mode = #tpu.pipeline_mode<synchronous>, transform_indices = @transform_5, window_bounds = array<i64: 4, 4, 8>}, {pipeline_mode = #tpu.pipeline_mode<synchronous>, transform_indices = @transform_6, window_bounds = array<i64: 256, 1024>}, {pipeline_mode = #tpu.pipeline_mode<synchronous>, transform_indices = @transform_7, window_bounds = array<i64: 1, 256>}, {pipeline_mode = #tpu.pipeline_mode<synchronous>, transform_indices = @transform_8, window_bounds = array<i64: 4, 8, 4>}, {pipeline_mode = #tpu.pipeline_mode<synchronous>, transform_indices = @transform_9, window_bounds = array<i64: 256, 1024>}, {pipeline_mode = #tpu.pipeline_mode<synchronous>, transform_indices = @transform_10, window_bounds = array<i64: 1, 256>}, {pipeline_mode = #tpu.pipeline_mode<synchronous>, transform_indices = @transform_11, window_bounds = array<i64: 4, 16, 8>}, {pipeline_mode = #tpu.pipeline_mode<synchronous>, transform_indices = @transform_12, window_bounds = array<i64: 256, 1024>}, {pipeline_mode = #tpu.pipeline_mode<synchronous>, transform_indices = @transform_13, window_bounds = array<i64: 1, 256>}, {pipeline_mode = #tpu.pipeline_mode<synchronous>, transform_indices = @transform_14, window_bounds = array<i64: 4, 32, 16>}, {pipeline_mode = #tpu.pipeline_mode<synchronous>, transform_indices = @transform_15, window_bounds = array<i64: 256, 384>}, {pipeline_mode = #tpu.pipeline_mode<synchronous>, transform_indices = @transform_16, window_bounds = array<i64: 1, 128>}, {pipeline_mode = #tpu.pipeline_mode<synchronous>, transform_indices = @transform_17, window_bounds = array<i64: 2, 32, 32>}, {transform_indices = @transform_18, window_bounds = array<i64: 1, 32, 128>}]} {
    %c0 = arith.constant 0 : index
    %c0_0 = arith.constant 0 : index
    %c0_1 = arith.constant 0 : index
    %0 = vector.load %arg1[%c0, %c0_0, %c0_1] : memref<1x1x64xf32, #tpu.memory_space<vmem>>, vector<1x1x64xf32>
    %1 = vector.shape_cast %0 : vector<1x1x64xf32> to vector<1x64xf32>
    %c0_2 = arith.constant 0 : index
    %c0_3 = arith.constant 0 : index
    %2 = vector.load %arg2[%c0_2, %c0_3] : memref<1x64xf32, #tpu.memory_space<vmem>>, vector<1x64xf32>
    %3 = arith.mulf %1, %2 : vector<1x64xf32>
    %c0_4 = arith.constant 0 : index
    %c0_5 = arith.constant 0 : index
    %4 = vector.load %arg3[%c0_4, %c0_5] : memref<1x64xf32, #tpu.memory_space<vmem>>, vector<1x64xf32>
    %5 = arith.addf %3, %4 : vector<1x64xf32>
    %cst = arith.constant 0.000000e+00 : f32
    %6 = vector.broadcast %cst : f32 to vector<1x64xf32>
    %7 = arith.cmpf oge, %5, %6 : vector<1x64xf32>
    %cst_6 = arith.constant 0.00999999977 : f32
    %8 = vector.broadcast %cst_6 : f32 to vector<1x64xf32>
    %9 = arith.mulf %8, %5 : vector<1x64xf32>
    %10 = arith.select %7, %5, %9 : vector<1x64xi1>, vector<1x64xf32>
    %11 = arith.truncf %10 : vector<1x64xf32> to vector<1x64xbf16>
    %c0_7 = arith.constant 0 : index
    %c0_8 = arith.constant 0 : index
    %12 = vector.load %arg4[%c0_7, %c0_8] : memref<64x1024xbf16, #tpu.memory_space<vmem>>, vector<64x1024xbf16>
    %cst_9 = arith.constant dense<0.000000e+00> : vector<1x1024xf32>
    %13 = tpu.matmul %11, %12, %cst_9 {dimension_numbers = #tpu.dot_dimension_numbers<[1], [0], [0], [1], [0, 0, 1, 1], [], []>} : vector<1x64xbf16>, vector<64x1024xbf16>, vector<1x1024xf32> -> vector<1x1024xf32>
    %c0_10 = arith.constant 0 : index
    %c0_11 = arith.constant 0 : index
    %14 = vector.load %arg5[%c0_10, %c0_11] : memref<1x1024xf32, #tpu.memory_space<vmem>>, vector<1x1024xf32>
    %15 = arith.addf %13, %14 : vector<1x1024xf32>
    %cst_12 = arith.constant 0.000000e+00 : f32
    %16 = vector.broadcast %cst_12 : f32 to vector<1x1024xf32>
    %17 = arith.cmpf oge, %15, %16 : vector<1x1024xf32>
    %cst_13 = arith.constant 0.00999999977 : f32
    %18 = vector.broadcast %cst_13 : f32 to vector<1x1024xf32>
    %19 = arith.mulf %18, %15 : vector<1x1024xf32>
    %20 = arith.select %17, %15, %19 : vector<1x1024xi1>, vector<1x1024xf32>
    %21 = vector.shape_cast %20 : vector<1x1024xf32> to vector<1x1024xf32>
    %22 = vector.broadcast %21 : vector<1x1024xf32> to vector<8x1024xf32>
    %c0_14 = arith.constant 0 : index
    %c0_15 = arith.constant 0 : index
    %c0_16 = arith.constant 0 : index
    %23 = vector.load %arg6[%c0_14, %c0_15, %c0_16] : memref<4x4x8xf32, #tpu.memory_space<vmem>>, vector<1x4x8xf32>
    %24 = vector.shape_cast %23 : vector<1x4x8xf32> to vector<4x8xf32>
    %25 = vector.extract_strided_slice %22 {offsets = [0, 0], sizes = [8, 256], strides = [1, 1]} : vector<8x1024xf32> to vector<8x256xf32>
    %cst_17 = arith.constant dense<0.000000e+00> : vector<4x256xf32>
    %26 = tpu.matmul %24, %25, %cst_17 {dimension_numbers = #tpu.dot_dimension_numbers<[1], [0], [0], [1], [0, 0, 1, 1], [], []>} : vector<4x8xf32>, vector<8x256xf32>, vector<4x256xf32> -> vector<4x256xf32>
    %c1 = arith.constant 1 : index
    %c0_18 = arith.constant 0 : index
    %c0_19 = arith.constant 0 : index
    %27 = vector.load %arg6[%c1, %c0_18, %c0_19] : memref<4x4x8xf32, #tpu.memory_space<vmem>>, vector<1x4x8xf32>
    %28 = vector.shape_cast %27 : vector<1x4x8xf32> to vector<4x8xf32>
    %29 = vector.extract_strided_slice %22 {offsets = [0, 256], sizes = [8, 256], strides = [1, 1]} : vector<8x1024xf32> to vector<8x256xf32>
    %cst_20 = arith.constant dense<0.000000e+00> : vector<4x256xf32>
    %30 = tpu.matmul %28, %29, %cst_20 {dimension_numbers = #tpu.dot_dimension_numbers<[1], [0], [0], [1], [0, 0, 1, 1], [], []>} : vector<4x8xf32>, vector<8x256xf32>, vector<4x256xf32> -> vector<4x256xf32>
    %31 = arith.addf %26, %30 : vector<4x256xf32>
    %c2 = arith.constant 2 : index
    %c0_21 = arith.constant 0 : index
    %c0_22 = arith.constant 0 : index
    %32 = vector.load %arg6[%c2, %c0_21, %c0_22] : memref<4x4x8xf32, #tpu.memory_space<vmem>>, vector<1x4x8xf32>
    %33 = vector.shape_cast %32 : vector<1x4x8xf32> to vector<4x8xf32>
    %34 = vector.extract_strided_slice %22 {offsets = [0, 512], sizes = [8, 256], strides = [1, 1]} : vector<8x1024xf32> to vector<8x256xf32>
    %cst_23 = arith.constant dense<0.000000e+00> : vector<4x256xf32>
    %35 = tpu.matmul %33, %34, %cst_23 {dimension_numbers = #tpu.dot_dimension_numbers<[1], [0], [0], [1], [0, 0, 1, 1], [], []>} : vector<4x8xf32>, vector<8x256xf32>, vector<4x256xf32> -> vector<4x256xf32>
    %36 = arith.addf %31, %35 : vector<4x256xf32>
    %c3 = arith.constant 3 : index
    %c0_24 = arith.constant 0 : index
    %c0_25 = arith.constant 0 : index
    %37 = vector.load %arg6[%c3, %c0_24, %c0_25] : memref<4x4x8xf32, #tpu.memory_space<vmem>>, vector<1x4x8xf32>
    %38 = vector.shape_cast %37 : vector<1x4x8xf32> to vector<4x8xf32>
    %39 = vector.extract_strided_slice %22 {offsets = [0, 768], sizes = [8, 256], strides = [1, 1]} : vector<8x1024xf32> to vector<8x256xf32>
    %cst_26 = arith.constant dense<0.000000e+00> : vector<4x256xf32>
    %40 = tpu.matmul %38, %39, %cst_26 {dimension_numbers = #tpu.dot_dimension_numbers<[1], [0], [0], [1], [0, 0, 1, 1], [], []>} : vector<4x8xf32>, vector<8x256xf32>, vector<4x256xf32> -> vector<4x256xf32>
    %41 = arith.addf %36, %40 : vector<4x256xf32>
    %42 = arith.truncf %41 : vector<4x256xf32> to vector<4x256xbf16>
    %c0_27 = arith.constant 0 : index
    %c0_28 = arith.constant 0 : index
    %43 = vector.load %arg7[%c0_27, %c0_28] : memref<256x1024xbf16, #tpu.memory_space<vmem>>, vector<256x1024xbf16>
    %cst_29 = arith.constant dense<0.000000e+00> : vector<4x1024xf32>
    %44 = tpu.matmul %42, %43, %cst_29 {dimension_numbers = #tpu.dot_dimension_numbers<[1], [0], [0], [1], [0, 0, 1, 1], [], []>} : vector<4x256xbf16>, vector<256x1024xbf16>, vector<4x1024xf32> -> vector<4x1024xf32>
    %c0_30 = arith.constant 0 : index
    %c0_31 = arith.constant 0 : index
    %c0_32 = arith.constant 0 : index
    %45 = vector.load %arg9[%c0_30, %c0_31, %c0_32] : memref<4x8x4xf32, #tpu.memory_space<vmem>>, vector<1x8x4xf32>
    %46 = vector.shape_cast %45 : vector<1x8x4xf32> to vector<8x4xf32>
    %47 = vector.extract_strided_slice %44 {offsets = [0, 0], sizes = [4, 256], strides = [1, 1]} : vector<4x1024xf32> to vector<4x256xf32>
    %cst_33 = arith.constant dense<0.000000e+00> : vector<8x256xf32>
    %48 = tpu.matmul %46, %47, %cst_33 {dimension_numbers = #tpu.dot_dimension_numbers<[1], [0], [0], [1], [0, 0, 1, 1], [], []>} : vector<8x4xf32>, vector<4x256xf32>, vector<8x256xf32> -> vector<8x256xf32>
    %c1_34 = arith.constant 1 : index
    %c0_35 = arith.constant 0 : index
    %c0_36 = arith.constant 0 : index
    %49 = vector.load %arg9[%c1_34, %c0_35, %c0_36] : memref<4x8x4xf32, #tpu.memory_space<vmem>>, vector<1x8x4xf32>
    %50 = vector.shape_cast %49 : vector<1x8x4xf32> to vector<8x4xf32>
    %51 = vector.extract_strided_slice %44 {offsets = [0, 256], sizes = [4, 256], strides = [1, 1]} : vector<4x1024xf32> to vector<4x256xf32>
    %cst_37 = arith.constant dense<0.000000e+00> : vector<8x256xf32>
    %52 = tpu.matmul %50, %51, %cst_37 {dimension_numbers = #tpu.dot_dimension_numbers<[1], [0], [0], [1], [0, 0, 1, 1], [], []>} : vector<8x4xf32>, vector<4x256xf32>, vector<8x256xf32> -> vector<8x256xf32>
    %53 = arith.addf %48, %52 : vector<8x256xf32>
    %c2_38 = arith.constant 2 : index
    %c0_39 = arith.constant 0 : index
    %c0_40 = arith.constant 0 : index
    %54 = vector.load %arg9[%c2_38, %c0_39, %c0_40] : memref<4x8x4xf32, #tpu.memory_space<vmem>>, vector<1x8x4xf32>
    %55 = vector.shape_cast %54 : vector<1x8x4xf32> to vector<8x4xf32>
    %56 = vector.extract_strided_slice %44 {offsets = [0, 512], sizes = [4, 256], strides = [1, 1]} : vector<4x1024xf32> to vector<4x256xf32>
    %cst_41 = arith.constant dense<0.000000e+00> : vector<8x256xf32>
    %57 = tpu.matmul %55, %56, %cst_41 {dimension_numbers = #tpu.dot_dimension_numbers<[1], [0], [0], [1], [0, 0, 1, 1], [], []>} : vector<8x4xf32>, vector<4x256xf32>, vector<8x256xf32> -> vector<8x256xf32>
    %58 = arith.addf %53, %57 : vector<8x256xf32>
    %c3_42 = arith.constant 3 : index
    %c0_43 = arith.constant 0 : index
    %c0_44 = arith.constant 0 : index
    %59 = vector.load %arg9[%c3_42, %c0_43, %c0_44] : memref<4x8x4xf32, #tpu.memory_space<vmem>>, vector<1x8x4xf32>
    %60 = vector.shape_cast %59 : vector<1x8x4xf32> to vector<8x4xf32>
    %61 = vector.extract_strided_slice %44 {offsets = [0, 768], sizes = [4, 256], strides = [1, 1]} : vector<4x1024xf32> to vector<4x256xf32>
    %cst_45 = arith.constant dense<0.000000e+00> : vector<8x256xf32>
    %62 = tpu.matmul %60, %61, %cst_45 {dimension_numbers = #tpu.dot_dimension_numbers<[1], [0], [0], [1], [0, 0, 1, 1], [], []>} : vector<8x4xf32>, vector<4x256xf32>, vector<8x256xf32> -> vector<8x256xf32>
    %63 = arith.addf %58, %62 : vector<8x256xf32>
    %c0_46 = arith.constant 0 : index
    %c0_47 = arith.constant 0 : index
    %64 = vector.load %arg8[%c0_46, %c0_47] : memref<1x256xf32, #tpu.memory_space<vmem>>, vector<1x256xf32>
    %65 = vector.broadcast %64 : vector<1x256xf32> to vector<8x256xf32>
    %66 = arith.addf %63, %65 : vector<8x256xf32>
    %cst_48 = arith.constant 0.000000e+00 : f32
    %67 = vector.broadcast %cst_48 : f32 to vector<8x256xf32>
    %68 = arith.cmpf oge, %66, %67 : vector<8x256xf32>
    %cst_49 = arith.constant 0.00999999977 : f32
    %69 = vector.broadcast %cst_49 : f32 to vector<8x256xf32>
    %70 = arith.mulf %69, %66 : vector<8x256xf32>
    %71 = arith.select %68, %66, %70 : vector<8x256xi1>, vector<8x256xf32>
    %72 = arith.truncf %71 : vector<8x256xf32> to vector<8x256xbf16>
    %c0_50 = arith.constant 0 : index
    %c0_51 = arith.constant 0 : index
    %73 = vector.load %arg10[%c0_50, %c0_51] : memref<256x1024xbf16, #tpu.memory_space<vmem>>, vector<256x1024xbf16>
    %cst_52 = arith.constant dense<0.000000e+00> : vector<8x1024xf32>
    %74 = tpu.matmul %72, %73, %cst_52 {dimension_numbers = #tpu.dot_dimension_numbers<[1], [0], [0], [1], [0, 0, 1, 1], [], []>} : vector<8x256xbf16>, vector<256x1024xbf16>, vector<8x1024xf32> -> vector<8x1024xf32>
    %c0_53 = arith.constant 0 : index
    %c0_54 = arith.constant 0 : index
    %c0_55 = arith.constant 0 : index
    %75 = vector.load %arg12[%c0_53, %c0_54, %c0_55] : memref<4x16x8xf32, #tpu.memory_space<vmem>>, vector<1x16x8xf32>
    %76 = vector.shape_cast %75 : vector<1x16x8xf32> to vector<16x8xf32>
    %77 = vector.extract_strided_slice %74 {offsets = [0, 0], sizes = [8, 256], strides = [1, 1]} : vector<8x1024xf32> to vector<8x256xf32>
    %cst_56 = arith.constant dense<0.000000e+00> : vector<16x256xf32>
    %78 = tpu.matmul %76, %77, %cst_56 {dimension_numbers = #tpu.dot_dimension_numbers<[1], [0], [0], [1], [0, 0, 1, 1], [], []>} : vector<16x8xf32>, vector<8x256xf32>, vector<16x256xf32> -> vector<16x256xf32>
    %c1_57 = arith.constant 1 : index
    %c0_58 = arith.constant 0 : index
    %c0_59 = arith.constant 0 : index
    %79 = vector.load %arg12[%c1_57, %c0_58, %c0_59] : memref<4x16x8xf32, #tpu.memory_space<vmem>>, vector<1x16x8xf32>
    %80 = vector.shape_cast %79 : vector<1x16x8xf32> to vector<16x8xf32>
    %81 = vector.extract_strided_slice %74 {offsets = [0, 256], sizes = [8, 256], strides = [1, 1]} : vector<8x1024xf32> to vector<8x256xf32>
    %cst_60 = arith.constant dense<0.000000e+00> : vector<16x256xf32>
    %82 = tpu.matmul %80, %81, %cst_60 {dimension_numbers = #tpu.dot_dimension_numbers<[1], [0], [0], [1], [0, 0, 1, 1], [], []>} : vector<16x8xf32>, vector<8x256xf32>, vector<16x256xf32> -> vector<16x256xf32>
    %83 = arith.addf %78, %82 : vector<16x256xf32>
    %c2_61 = arith.constant 2 : index
    %c0_62 = arith.constant 0 : index
    %c0_63 = arith.constant 0 : index
    %84 = vector.load %arg12[%c2_61, %c0_62, %c0_63] : memref<4x16x8xf32, #tpu.memory_space<vmem>>, vector<1x16x8xf32>
    %85 = vector.shape_cast %84 : vector<1x16x8xf32> to vector<16x8xf32>
    %86 = vector.extract_strided_slice %74 {offsets = [0, 512], sizes = [8, 256], strides = [1, 1]} : vector<8x1024xf32> to vector<8x256xf32>
    %cst_64 = arith.constant dense<0.000000e+00> : vector<16x256xf32>
    %87 = tpu.matmul %85, %86, %cst_64 {dimension_numbers = #tpu.dot_dimension_numbers<[1], [0], [0], [1], [0, 0, 1, 1], [], []>} : vector<16x8xf32>, vector<8x256xf32>, vector<16x256xf32> -> vector<16x256xf32>
    %88 = arith.addf %83, %87 : vector<16x256xf32>
    %c3_65 = arith.constant 3 : index
    %c0_66 = arith.constant 0 : index
    %c0_67 = arith.constant 0 : index
    %89 = vector.load %arg12[%c3_65, %c0_66, %c0_67] : memref<4x16x8xf32, #tpu.memory_space<vmem>>, vector<1x16x8xf32>
    %90 = vector.shape_cast %89 : vector<1x16x8xf32> to vector<16x8xf32>
    %91 = vector.extract_strided_slice %74 {offsets = [0, 768], sizes = [8, 256], strides = [1, 1]} : vector<8x1024xf32> to vector<8x256xf32>
    %cst_68 = arith.constant dense<0.000000e+00> : vector<16x256xf32>
    %92 = tpu.matmul %90, %91, %cst_68 {dimension_numbers = #tpu.dot_dimension_numbers<[1], [0], [0], [1], [0, 0, 1, 1], [], []>} : vector<16x8xf32>, vector<8x256xf32>, vector<16x256xf32> -> vector<16x256xf32>
    %93 = arith.addf %88, %92 : vector<16x256xf32>
    %c0_69 = arith.constant 0 : index
    %c0_70 = arith.constant 0 : index
    %94 = vector.load %arg11[%c0_69, %c0_70] : memref<1x256xf32, #tpu.memory_space<vmem>>, vector<1x256xf32>
    %95 = vector.broadcast %94 : vector<1x256xf32> to vector<16x256xf32>
    %96 = arith.addf %93, %95 : vector<16x256xf32>
    %cst_71 = arith.constant 0.000000e+00 : f32
    %97 = vector.broadcast %cst_71 : f32 to vector<16x256xf32>
    %98 = arith.cmpf oge, %96, %97 : vector<16x256xf32>
    %cst_72 = arith.constant 0.00999999977 : f32
    %99 = vector.broadcast %cst_72 : f32 to vector<16x256xf32>
    %100 = arith.mulf %99, %96 : vector<16x256xf32>
    %101 = arith.select %98, %96, %100 : vector<16x256xi1>, vector<16x256xf32>
    %102 = arith.truncf %101 : vector<16x256xf32> to vector<16x256xbf16>
    %c0_73 = arith.constant 0 : index
    %c0_74 = arith.constant 0 : index
    %103 = vector.load %arg13[%c0_73, %c0_74] : memref<256x1024xbf16, #tpu.memory_space<vmem>>, vector<256x1024xbf16>
    %cst_75 = arith.constant dense<0.000000e+00> : vector<16x1024xf32>
    %104 = tpu.matmul %102, %103, %cst_75 {dimension_numbers = #tpu.dot_dimension_numbers<[1], [0], [0], [1], [0, 0, 1, 1], [], []>} : vector<16x256xbf16>, vector<256x1024xbf16>, vector<16x1024xf32> -> vector<16x1024xf32>
    %c0_76 = arith.constant 0 : index
    %c0_77 = arith.constant 0 : index
    %c0_78 = arith.constant 0 : index
    %105 = vector.load %arg15[%c0_76, %c0_77, %c0_78] : memref<4x32x16xf32, #tpu.memory_space<vmem>>, vector<1x32x16xf32>
    %106 = vector.shape_cast %105 : vector<1x32x16xf32> to vector<32x16xf32>
    %107 = vector.extract_strided_slice %104 {offsets = [0, 0], sizes = [16, 256], strides = [1, 1]} : vector<16x1024xf32> to vector<16x256xf32>
    %cst_79 = arith.constant dense<0.000000e+00> : vector<32x256xf32>
    %108 = tpu.matmul %106, %107, %cst_79 {dimension_numbers = #tpu.dot_dimension_numbers<[1], [0], [0], [1], [0, 0, 1, 1], [], []>} : vector<32x16xf32>, vector<16x256xf32>, vector<32x256xf32> -> vector<32x256xf32>
    %c1_80 = arith.constant 1 : index
    %c0_81 = arith.constant 0 : index
    %c0_82 = arith.constant 0 : index
    %109 = vector.load %arg15[%c1_80, %c0_81, %c0_82] : memref<4x32x16xf32, #tpu.memory_space<vmem>>, vector<1x32x16xf32>
    %110 = vector.shape_cast %109 : vector<1x32x16xf32> to vector<32x16xf32>
    %111 = vector.extract_strided_slice %104 {offsets = [0, 256], sizes = [16, 256], strides = [1, 1]} : vector<16x1024xf32> to vector<16x256xf32>
    %cst_83 = arith.constant dense<0.000000e+00> : vector<32x256xf32>
    %112 = tpu.matmul %110, %111, %cst_83 {dimension_numbers = #tpu.dot_dimension_numbers<[1], [0], [0], [1], [0, 0, 1, 1], [], []>} : vector<32x16xf32>, vector<16x256xf32>, vector<32x256xf32> -> vector<32x256xf32>
    %113 = arith.addf %108, %112 : vector<32x256xf32>
    %c2_84 = arith.constant 2 : index
    %c0_85 = arith.constant 0 : index
    %c0_86 = arith.constant 0 : index
    %114 = vector.load %arg15[%c2_84, %c0_85, %c0_86] : memref<4x32x16xf32, #tpu.memory_space<vmem>>, vector<1x32x16xf32>
    %115 = vector.shape_cast %114 : vector<1x32x16xf32> to vector<32x16xf32>
    %116 = vector.extract_strided_slice %104 {offsets = [0, 512], sizes = [16, 256], strides = [1, 1]} : vector<16x1024xf32> to vector<16x256xf32>
    %cst_87 = arith.constant dense<0.000000e+00> : vector<32x256xf32>
    %117 = tpu.matmul %115, %116, %cst_87 {dimension_numbers = #tpu.dot_dimension_numbers<[1], [0], [0], [1], [0, 0, 1, 1], [], []>} : vector<32x16xf32>, vector<16x256xf32>, vector<32x256xf32> -> vector<32x256xf32>
    %118 = arith.addf %113, %117 : vector<32x256xf32>
    %c3_88 = arith.constant 3 : index
    %c0_89 = arith.constant 0 : index
    %c0_90 = arith.constant 0 : index
    %119 = vector.load %arg15[%c3_88, %c0_89, %c0_90] : memref<4x32x16xf32, #tpu.memory_space<vmem>>, vector<1x32x16xf32>
    %120 = vector.shape_cast %119 : vector<1x32x16xf32> to vector<32x16xf32>
    %121 = vector.extract_strided_slice %104 {offsets = [0, 768], sizes = [16, 256], strides = [1, 1]} : vector<16x1024xf32> to vector<16x256xf32>
    %cst_91 = arith.constant dense<0.000000e+00> : vector<32x256xf32>
    %122 = tpu.matmul %120, %121, %cst_91 {dimension_numbers = #tpu.dot_dimension_numbers<[1], [0], [0], [1], [0, 0, 1, 1], [], []>} : vector<32x16xf32>, vector<16x256xf32>, vector<32x256xf32> -> vector<32x256xf32>
    %123 = arith.addf %118, %122 : vector<32x256xf32>
    %c0_92 = arith.constant 0 : index
    %c0_93 = arith.constant 0 : index
    %124 = vector.load %arg14[%c0_92, %c0_93] : memref<1x256xf32, #tpu.memory_space<vmem>>, vector<1x256xf32>
    %125 = vector.broadcast %124 : vector<1x256xf32> to vector<32x256xf32>
    %126 = arith.addf %123, %125 : vector<32x256xf32>
    %cst_94 = arith.constant 0.000000e+00 : f32
    %127 = vector.broadcast %cst_94 : f32 to vector<32x256xf32>
    %128 = arith.cmpf oge, %126, %127 : vector<32x256xf32>
    %cst_95 = arith.constant 0.00999999977 : f32
    %129 = vector.broadcast %cst_95 : f32 to vector<32x256xf32>
    %130 = arith.mulf %129, %126 : vector<32x256xf32>
    %131 = arith.select %128, %126, %130 : vector<32x256xi1>, vector<32x256xf32>
    %132 = arith.truncf %131 : vector<32x256xf32> to vector<32x256xbf16>
    %c0_96 = arith.constant 0 : index
    %c0_97 = arith.constant 0 : index
    %133 = vector.load %arg16[%c0_96, %c0_97] : memref<256x384xbf16, #tpu.memory_space<vmem>>, vector<256x384xbf16>
    %cst_98 = arith.constant dense<0.000000e+00> : vector<32x384xf32>
    %134 = tpu.matmul %132, %133, %cst_98 {dimension_numbers = #tpu.dot_dimension_numbers<[1], [0], [0], [1], [0, 0, 1, 1], [], []>} : vector<32x256xbf16>, vector<256x384xbf16>, vector<32x384xf32> -> vector<32x384xf32>
    %135 = vector.extract_strided_slice %134 {offsets = [0, 0], sizes = [32, 128], strides = [1, 1]} : vector<32x384xf32> to vector<32x128xf32>
    %c0_99 = arith.constant 0 : index
    %c0_100 = arith.constant 0 : index
    %c0_101 = arith.constant 0 : index
    %136 = vector.load %arg18[%c0_99, %c0_100, %c0_101] : memref<2x32x32xf32, #tpu.memory_space<vmem>>, vector<1x32x32xf32>
    %137 = vector.shape_cast %136 : vector<1x32x32xf32> to vector<32x32xf32>
    %138 = vector.extract_strided_slice %134 {offsets = [0, 128], sizes = [32, 128], strides = [1, 1]} : vector<32x384xf32> to vector<32x128xf32>
    %cst_102 = arith.constant dense<0.000000e+00> : vector<32x128xf32>
    %139 = tpu.matmul %137, %138, %cst_102 {dimension_numbers = #tpu.dot_dimension_numbers<[1], [0], [0], [1], [0, 0, 1, 1], [], []>} : vector<32x32xf32>, vector<32x128xf32>, vector<32x128xf32> -> vector<32x128xf32>
    %140 = arith.addf %135, %139 : vector<32x128xf32>
    %c1_103 = arith.constant 1 : index
    %c0_104 = arith.constant 0 : index
    %c0_105 = arith.constant 0 : index
    %141 = vector.load %arg18[%c1_103, %c0_104, %c0_105] : memref<2x32x32xf32, #tpu.memory_space<vmem>>, vector<1x32x32xf32>
    %142 = vector.shape_cast %141 : vector<1x32x32xf32> to vector<32x32xf32>
    %143 = vector.extract_strided_slice %134 {offsets = [0, 256], sizes = [32, 128], strides = [1, 1]} : vector<32x384xf32> to vector<32x128xf32>
    %cst_106 = arith.constant dense<0.000000e+00> : vector<32x128xf32>
    %144 = tpu.matmul %142, %143, %cst_106 {dimension_numbers = #tpu.dot_dimension_numbers<[1], [0], [0], [1], [0, 0, 1, 1], [], []>} : vector<32x32xf32>, vector<32x128xf32>, vector<32x128xf32> -> vector<32x128xf32>
    %145 = arith.addf %140, %144 : vector<32x128xf32>
    %c0_107 = arith.constant 0 : index
    %c0_108 = arith.constant 0 : index
    %146 = vector.load %arg17[%c0_107, %c0_108] : memref<1x128xf32, #tpu.memory_space<vmem>>, vector<1x128xf32>
    %147 = vector.broadcast %146 : vector<1x128xf32> to vector<32x128xf32>
    %148 = arith.addf %145, %147 : vector<32x128xf32>
    %c0_109 = arith.constant 0 : index
    %c0_110 = arith.constant 0 : index
    %c0_111 = arith.constant 0 : index
    %149 = vector.load %arg19[%c0_109, %c0_110, %c0_111] : memref<1x32x128xf32, #tpu.memory_space<vmem>>, vector<1x32x128xf32>
    %150 = vector.shape_cast %149 : vector<1x32x128xf32> to vector<32x128xf32>
    %151 = vector.shape_cast %148 : vector<32x128xf32> to vector<1x32x128xf32>
    tpu.vector_store %arg19[%c0_109, %c0_110, %c0_111], %151 {strides = array<i32>} : memref<1x32x128xf32, #tpu.memory_space<vmem>>, vector<1x32x128xf32>,
    return
  }
  func.func @transform_0(%arg0: i32) -> (i32, i32, i32) {
    %c0_i32 = arith.constant 0 : i32
    %c0_i32_0 = arith.constant 0 : i32
    %c0_i32_1 = arith.constant 0 : i32
    return %arg0, %c0_i32, %c0_i32_0 : i32, i32, i32
  }
  func.func @transform_1(%arg0: i32) -> (i32, i32) {
    %c0_i32 = arith.constant 0 : i32
    %c0_i32_0 = arith.constant 0 : i32
    %c0_i32_1 = arith.constant 0 : i32
    return %c0_i32, %c0_i32_0 : i32, i32
  }
  func.func @transform_2(%arg0: i32) -> (i32, i32) {
    %c0_i32 = arith.constant 0 : i32
    %c0_i32_0 = arith.constant 0 : i32
    %c0_i32_1 = arith.constant 0 : i32
    return %c0_i32, %c0_i32_0 : i32, i32
  }
  func.func @transform_3(%arg0: i32) -> (i32, i32) {
    %c0_i32 = arith.constant 0 : i32
    %c0_i32_0 = arith.constant 0 : i32
    %c0_i32_1 = arith.constant 0 : i32
    return %c0_i32, %c0_i32_0 : i32, i32
  }
  func.func @transform_4(%arg0: i32) -> (i32, i32) {
    %c0_i32 = arith.constant 0 : i32
    %c0_i32_0 = arith.constant 0 : i32
    %c0_i32_1 = arith.constant 0 : i32
    return %c0_i32, %c0_i32_0 : i32, i32
  }
  func.func @transform_5(%arg0: i32) -> (i32, i32, i32) {
    %c0_i32 = arith.constant 0 : i32
    %c0_i32_0 = arith.constant 0 : i32
    %c0_i32_1 = arith.constant 0 : i32
    %c0_i32_2 = arith.constant 0 : i32
    return %c0_i32, %c0_i32_0, %c0_i32_1 : i32, i32, i32
  }
  func.func @transform_6(%arg0: i32) -> (i32, i32) {
    %c0_i32 = arith.constant 0 : i32
    %c0_i32_0 = arith.constant 0 : i32
    %c0_i32_1 = arith.constant 0 : i32
    return %c0_i32, %c0_i32_0 : i32, i32
  }
  func.func @transform_7(%arg0: i32) -> (i32, i32) {
    %c0_i32 = arith.constant 0 : i32
    %c0_i32_0 = arith.constant 0 : i32
    %c0_i32_1 = arith.constant 0 : i32
    return %c0_i32, %c0_i32_0 : i32, i32
  }
  func.func @transform_8(%arg0: i32) -> (i32, i32, i32) {
    %c0_i32 = arith.constant 0 : i32
    %c0_i32_0 = arith.constant 0 : i32
    %c0_i32_1 = arith.constant 0 : i32
    %c0_i32_2 = arith.constant 0 : i32
    return %c0_i32, %c0_i32_0, %c0_i32_1 : i32, i32, i32
  }
  func.func @transform_9(%arg0: i32) -> (i32, i32) {
    %c0_i32 = arith.constant 0 : i32
    %c0_i32_0 = arith.constant 0 : i32
    %c0_i32_1 = arith.constant 0 : i32
    return %c0_i32, %c0_i32_0 : i32, i32
  }
  func.func @transform_10(%arg0: i32) -> (i32, i32) {
    %c0_i32 = arith.constant 0 : i32
    %c0_i32_0 = arith.constant 0 : i32
    %c0_i32_1 = arith.constant 0 : i32
    return %c0_i32, %c0_i32_0 : i32, i32
  }
  func.func @transform_11(%arg0: i32) -> (i32, i32, i32) {
    %c0_i32 = arith.constant 0 : i32
    %c0_i32_0 = arith.constant 0 : i32
    %c0_i32_1 = arith.constant 0 : i32
    %c0_i32_2 = arith.constant 0 : i32
    return %c0_i32, %c0_i32_0, %c0_i32_1 : i32, i32, i32
  }
  func.func @transform_12(%arg0: i32) -> (i32, i32) {
    %c0_i32 = arith.constant 0 : i32
    %c0_i32_0 = arith.constant 0 : i32
    %c0_i32_1 = arith.constant 0 : i32
    return %c0_i32, %c0_i32_0 : i32, i32
  }
  func.func @transform_13(%arg0: i32) -> (i32, i32) {
    %c0_i32 = arith.constant 0 : i32
    %c0_i32_0 = arith.constant 0 : i32
    %c0_i32_1 = arith.constant 0 : i32
    return %c0_i32, %c0_i32_0 : i32, i32
  }
  func.func @transform_14(%arg0: i32) -> (i32, i32, i32) {
    %c0_i32 = arith.constant 0 : i32
    %c0_i32_0 = arith.constant 0 : i32
    %c0_i32_1 = arith.constant 0 : i32
    %c0_i32_2 = arith.constant 0 : i32
    return %c0_i32, %c0_i32_0, %c0_i32_1 : i32, i32, i32
  }
  func.func @transform_15(%arg0: i32) -> (i32, i32) {
    %c0_i32 = arith.constant 0 : i32
    %c0_i32_0 = arith.constant 0 : i32
    %c0_i32_1 = arith.constant 0 : i32
    return %c0_i32, %c0_i32_0 : i32, i32
  }
  func.func @transform_16(%arg0: i32) -> (i32, i32) {
    %c0_i32 = arith.constant 0 : i32
    %c0_i32_0 = arith.constant 0 : i32
    %c0_i32_1 = arith.constant 0 : i32
    return %c0_i32, %c0_i32_0 : i32, i32
  }
  func.func @transform_17(%arg0: i32) -> (i32, i32, i32) {
    %c0_i32 = arith.constant 0 : i32
    %c0_i32_0 = arith.constant 0 : i32
    %c0_i32_1 = arith.constant 0 : i32
    %c0_i32_2 = arith.constant 0 : i32
    return %c0_i32, %c0_i32_0, %c0_i32_1 : i32, i32, i32
  }
  func.func @transform_18(%arg0: i32) -> (i32, i32, i32) {
    %c0_i32 = arith.constant 0 : i32
    %c0_i32_0 = arith.constant 0 : i32
    %c0_i32_1 = arith.constant 0 : i32
    return %arg0, %c0_i32, %c0_i32_0 : i32, i32, i32
  }
}

</mosaic_0001>

<llo_original>
// kernel: forward.1
$region0: #{forward.1}
  #allocation0 [shape = 'u32[]', space=smem, size = 0x4, offset = 0x4, fixed_abs, tag = 'smem constant byte address 0x4 - core index']
  #allocation1 [shape = 'u32[72,128]{1,0:T(1,128)}', space=vmem, size = 0x9000, scoped, tag = 'internal scratch']
  %s0 = inlined_call_operand.vmem [shape: f32[2,1,64], index: 0, kind: input, shape index: {}]
  %s1 = inlined_call_operand.vmem [shape: f32[1,64], index: 1, kind: input, shape index: {}]
  %s2 = inlined_call_operand.vmem [shape: f32[1,64], index: 2, kind: input, shape index: {}]
  %s3 = inlined_call_operand.hbm [shape: bf16[64,1024], index: 3, kind: input, shape index: {}]
  %s4 = inlined_call_operand.vmem [shape: f32[1,1024], index: 4, kind: input, shape index: {}]
  %s5 = inlined_call_operand.vmem [shape: f32[4,4,8], index: 5, kind: input, shape index: {}]
  %s6 = inlined_call_operand.hbm [shape: bf16[256,1024], index: 6, kind: input, shape index: {}]
  %s7 = inlined_call_operand.vmem [shape: f32[1,256], index: 7, kind: input, shape index: {}]
  %s8 = inlined_call_operand.vmem [shape: f32[4,8,4], index: 8, kind: input, shape index: {}]
  %s9 = inlined_call_operand.hbm [shape: bf16[256,1024], index: 9, kind: input, shape index: {}]
  %s10 = inlined_call_operand.vmem [shape: f32[1,256], index: 10, kind: input, shape index: {}]
  %s11 = inlined_call_operand.vmem [shape: f32[4,16,8], index: 11, kind: input, shape index: {}]
  %s12 = inlined_call_operand.hbm [shape: bf16[256,1024], index: 12, kind: input, shape index: {}]
  %s13 = inlined_call_operand.vmem [shape: f32[1,256], index: 13, kind: input, shape index: {}]
  %s14 = inlined_call_operand.vmem [shape: f32[4,32,16], index: 14, kind: input, shape index: {}]
  %s15 = inlined_call_operand.hbm [shape: bf16[256,384], index: 15, kind: input, shape index: {}]
  %s16 = inlined_call_operand.vmem [shape: f32[1,128], index: 16, kind: input, shape index: {}]
  %s17 = inlined_call_operand.vmem [shape: f32[2,32,32], index: 17, kind: input, shape index: {}]
  %s18 = inlined_call_operand.vmem [shape: f32[2,32,128], index: 18, kind: output, shape index: {}]
  %s19 = sld [smem:[#allocation0]]
  $region125: #{forward.1} parent=0
    _
  %s21 = ssub.s32 1, %s19
  %s22 = scalar_select 0, %s21, %s19
  $region1: #{forward.1} parent=0
    #allocation2 [shape = 'u8[131072]{0}', space=vmem, size = 0x20000, scoped, tag = 'input window, operand 3, single buffered']
    #allocation3 [shape = 's32[2]{0}', space=sflag, size = 0x8, scoped, tag = 'scoped memory for forward.1']
    #allocation4 [shape = 'u8[524288]{0}', space=vmem, size = 0x80000, scoped, tag = 'input window, operand 6, single buffered']
    #allocation5 [shape = 's32[1]{0}', space=sflag, size = 0x4, scoped, tag = 'scoped memory for forward.1']
    #allocation6 [shape = 'u8[524288]{0}', space=vmem, size = 0x80000, scoped, tag = 'input window, operand 9, single buffered']
    #allocation7 [shape = 'u8[524288]{0}', space=vmem, size = 0x80000, scoped, tag = 'input window, operand 12, single buffered']
    #allocation8 [shape = 's32[1]{0}', space=sflag, size = 0x4, scoped, tag = 'scoped memory for forward.1']
    #allocation9 [shape = 'u8[196608]{0}', space=vmem, size = 0x30000, scoped, tag = 'input window, operand 15, single buffered']
    %23 = vsyncpa [#allocation3], 0
    %24 = vsyncpa [#allocation5], 0
    %25 = vsyncpa [#allocation8], 0
    loop: start=0, step=1, limit=4
    $region2: #{forward.1} parent=1 // loop_pre_header
      _
    $region3: #{forward.1} parent=1 // loop_header
      %s27 = sphi 0, %s31
      %p28 = scmp.ge.s32.totalorder %s27, 4
      %s37 = sphi 0, %s39
      %s40 = sphi 0, %s37
      %s41 = sphi 0, %s40
      %s57 = sphi 0, %s41
      %s61 = sphi 0, %s61
      %s63 = sphi 0, %s61
      %s64 = sphi 0, %s63
      %s78 = sphi 0, %s64
      %s82 = sphi 0, %s82
      %s84 = sphi 0, %s82
      %s85 = sphi 0, %s84
      %s99 = sphi 0, %s85
      %s103 = sphi 0, %s103
      %s105 = sphi 0, %s103
      %s106 = sphi 0, %s105
      %s120 = sphi 0, %s106
      %s124 = sphi 0, %s124
      %s126 = sphi 0, %s124
      %s127 = sphi 0, %s126
      %s141 = sphi 0, %s127
      %s145 = sphi 0, %s145
      %s147 = sphi 0, %s145
      %s148 = sphi 0, %s147
      %s162 = sphi 0, %s148
      %s166 = sphi 0, %s166
      %s168 = sphi 0, %s166
      %s169 = sphi 0, %s168
      %s183 = sphi 0, %s169
      %s187 = sphi 0, %s187
      %s189 = sphi 0, %s187
      %s190 = sphi 0, %s189
      %s204 = sphi 0, %s190
      %s208 = sphi 0, %s208
      %s210 = sphi 0, %s208
      %s211 = sphi 0, %s210
      %s225 = sphi 0, %s211
      %s229 = sphi 0, %s229
      %s231 = sphi 0, %s229
      %s232 = sphi 0, %s231
      %s246 = sphi 0, %s232
      %s250 = sphi 0, %s250
      %s252 = sphi 0, %s250
      %s253 = sphi 0, %s252
      %s267 = sphi 0, %s253
      %s271 = sphi 0, %s271
      %s273 = sphi 0, %s271
      %s274 = sphi 0, %s273
      %s288 = sphi 0, %s274
      %s292 = sphi 0, %s292
      %s294 = sphi 0, %s292
      %s295 = sphi 0, %s294
      %s309 = sphi 0, %s295
      %s313 = sphi 0, %s313
      %s315 = sphi 0, %s313
      %s316 = sphi 0, %s315
      %s330 = sphi 0, %s316
      %s334 = sphi 0, %s334
      %s336 = sphi 0, %s334
      %s337 = sphi 0, %s336
      %s351 = sphi 0, %s337
      %s355 = sphi 0, %s355
      %s357 = sphi 0, %s355
      %s358 = sphi 0, %s357
      %s372 = sphi 0, %s358
      %s376 = sphi 0, %s376
      %s378 = sphi 0, %s376
      %s379 = sphi 0, %s378
      %s393 = sphi 0, %s379
      %s397 = sphi 0, %s397
      %s399 = sphi 0, %s397
      %s400 = sphi 0, %s399
      %s414 = sphi 0, %s400
      %s420 = sphi 0, %s422
      %s423 = sphi 0, %s420
      %s424 = sphi 0, %s423
      %s440 = sphi 0, %s424
    $region4: #{forward.1} parent=1 // loop_header_branch
      %30 = sbr.rel (%p28) target = $region8
    $region5: #{forward.1} parent=1 // loop_body
      %s32 = ssub.s32 %s27, 1
      %s33 = ssub.s32 %s27, 2
      %s34 = sadd.s32 %s27, 1
      %s35 = ssub.s32 %s27, %s34
      %p36 = scmp.eq.s32.totalorder %s35, 0
      %s38 = sadd.s32 %s37, 1
      %s39 = scalar_select %p36, %s37, %s38
      %p42 = pneg %p36
      %p43 = scmp.eq.s32.totalorder %s27, 1
      %p44 = por %p42, %p43
      %p45 = scmp.ne.s32.totalorder %s37, %s40
      %p46 = scmp.eq.s32.totalorder %s27, 0
      %p47 = por %p45, %p46
      %p48 = scmp.ne.s32.totalorder %s37, %s40
      %p49 = scmp.eq.s32.totalorder %s32, 1
      %p50 = por %p48, %p49
      %p51 = scmp.ne.s32.totalorder %s40, %s41
      %p52 = scmp.eq.s32.totalorder %s32, 0
      %p53 = por %p51, %p52
      %p54 = scmp.ne.s32.totalorder %s40, %s41
      %p55 = scmp.eq.s32.totalorder %s33, 1
      %p56 = por %p54, %p55
      %p58 = scmp.ne.s32.totalorder %s41, %s57
      %p59 = scmp.eq.s32.totalorder %s33, 0
      %p60 = por %p58, %p59
      %s62 = sadd.s32 %s61, 1
      %p65 = scmp.eq.s32.totalorder %s27, 1
      %p66 = scmp.ne.s32.totalorder %s61, %s63
      %p67 = scmp.eq.s32.totalorder %s27, 0
      %p68 = por %p66, %p67
      %p69 = scmp.ne.s32.totalorder %s61, %s63
      %p70 = scmp.eq.s32.totalorder %s32, 1
      %p71 = por %p69, %p70
      %p72 = scmp.ne.s32.totalorder %s63, %s64
      %p73 = scmp.eq.s32.totalorder %s32, 0
      %p74 = por %p72, %p73
      %p75 = scmp.ne.s32.totalorder %s63, %s64
      %p76 = scmp.eq.s32.totalorder %s33, 1
      %p77 = por %p75, %p76
      %p79 = scmp.ne.s32.totalorder %s64, %s78
      %p80 = scmp.eq.s32.totalorder %s33, 0
      %p81 = por %p79, %p80
      %s83 = sadd.s32 %s82, 1
      %p86 = scmp.eq.s32.totalorder %s27, 1
      %p87 = scmp.ne.s32.totalorder %s82, %s84
      %p88 = scmp.eq.s32.totalorder %s27, 0
      %p89 = por %p87, %p88
      %p90 = scmp.ne.s32.totalorder %s82, %s84
      %p91 = scmp.eq.s32.totalorder %s32, 1
      %p92 = por %p90, %p91
      %p93 = scmp.ne.s32.totalorder %s84, %s85
      %p94 = scmp.eq.s32.totalorder %s32, 0
      %p95 = por %p93, %p94
      %p96 = scmp.ne.s32.totalorder %s84, %s85
      %p97 = scmp.eq.s32.totalorder %s33, 1
      %p98 = por %p96, %p97
      %p100 = scmp.ne.s32.totalorder %s85, %s99
      %p101 = scmp.eq.s32.totalorder %s33, 0
      %p102 = por %p100, %p101
      %s104 = sadd.s32 %s103, 1
      %p107 = scmp.eq.s32.totalorder %s27, 1
      %p108 = scmp.ne.s32.totalorder %s103, %s105
      %p109 = scmp.eq.s32.totalorder %s27, 0
      %p110 = por %p108, %p109
      %p111 = scmp.ne.s32.totalorder %s103, %s105
      %p112 = scmp.eq.s32.totalorder %s32, 1
      %p113 = por %p111, %p112
      %p114 = scmp.ne.s32.totalorder %s105, %s106
      %p115 = scmp.eq.s32.totalorder %s32, 0
      %p116 = por %p114, %p115
      %p117 = scmp.ne.s32.totalorder %s105, %s106
      %p118 = scmp.eq.s32.totalorder %s33, 1
      %p119 = por %p117, %p118
      %p121 = scmp.ne.s32.totalorder %s106, %s120
      %p122 = scmp.eq.s32.totalorder %s33, 0
      %p123 = por %p121, %p122
      %s125 = sadd.s32 %s124, 1
      %p128 = scmp.eq.s32.totalorder %s27, 1
      %p129 = scmp.ne.s32.totalorder %s124, %s126
      %p130 = scmp.eq.s32.totalorder %s27, 0
      %p131 = por %p129, %p130
      %p132 = scmp.ne.s32.totalorder %s124, %s126
      %p133 = scmp.eq.s32.totalorder %s32, 1
      %p134 = por %p132, %p133
      %p135 = scmp.ne.s32.totalorder %s126, %s127
      %p136 = scmp.eq.s32.totalorder %s32, 0
      %p137 = por %p135, %p136
      %p138 = scmp.ne.s32.totalorder %s126, %s127
      %p139 = scmp.eq.s32.totalorder %s33, 1
      %p140 = por %p138, %p139
      %p142 = scmp.ne.s32.totalorder %s127, %s141
      %p143 = scmp.eq.s32.totalorder %s33, 0
      %p144 = por %p142, %p143
      %s146 = sadd.s32 %s145, 1
      %p149 = scmp.eq.s32.totalorder %s27, 1
      %p150 = scmp.ne.s32.totalorder %s145, %s147
      %p151 = scmp.eq.s32.totalorder %s27, 0
      %p152 = por %p150, %p151
      %p153 = scmp.ne.s32.totalorder %s145, %s147
      %p154 = scmp.eq.s32.totalorder %s32, 1
      %p155 = por %p153, %p154
      %p156 = scmp.ne.s32.totalorder %s147, %s148
      %p157 = scmp.eq.s32.totalorder %s32, 0
      %p158 = por %p156, %p157
      %p159 = scmp.ne.s32.totalorder %s147, %s148
      %p160 = scmp.eq.s32.totalorder %s33, 1
      %p161 = por %p159, %p160
      %p163 = scmp.ne.s32.totalorder %s148, %s162
      %p164 = scmp.eq.s32.totalorder %s33, 0
      %p165 = por %p163, %p164
      %s167 = sadd.s32 %s166, 1
      %p170 = scmp.eq.s32.totalorder %s27, 1
      %p171 = scmp.ne.s32.totalorder %s166, %s168
      %p172 = scmp.eq.s32.totalorder %s27, 0
      %p173 = por %p171, %p172
      %p174 = scmp.ne.s32.totalorder %s166, %s168
      %p175 = scmp.eq.s32.totalorder %s32, 1
      %p176 = por %p174, %p175
      %p177 = scmp.ne.s32.totalorder %s168, %s169
      %p178 = scmp.eq.s32.totalorder %s32, 0
      %p179 = por %p177, %p178
      %p180 = scmp.ne.s32.totalorder %s168, %s169
      %p181 = scmp.eq.s32.totalorder %s33, 1
      %p182 = por %p180, %p181
      %p184 = scmp.ne.s32.totalorder %s169, %s183
      %p185 = scmp.eq.s32.totalorder %s33, 0
      %p186 = por %p184, %p185
      %s188 = sadd.s32 %s187, 1
      %p191 = scmp.eq.s32.totalorder %s27, 1
      %p192 = scmp.ne.s32.totalorder %s187, %s189
      %p193 = scmp.eq.s32.totalorder %s27, 0
      %p194 = por %p192, %p193
      %p195 = scmp.ne.s32.totalorder %s187, %s189
      %p196 = scmp.eq.s32.totalorder %s32, 1
      %p197 = por %p195, %p196
      %p198 = scmp.ne.s32.totalorder %s189, %s190
      %p199 = scmp.eq.s32.totalorder %s32, 0
      %p200 = por %p198, %p199
      %p201 = scmp.ne.s32.totalorder %s189, %s190
      %p202 = scmp.eq.s32.totalorder %s33, 1
      %p203 = por %p201, %p202
      %p205 = scmp.ne.s32.totalorder %s190, %s204
      %p206 = scmp.eq.s32.totalorder %s33, 0
      %p207 = por %p205, %p206
      %s209 = sadd.s32 %s208, 1
      %p212 = scmp.eq.s32.totalorder %s27, 1
      %p213 = scmp.ne.s32.totalorder %s208, %s210
      %p214 = scmp.eq.s32.totalorder %s27, 0
      %p215 = por %p213, %p214
      %p216 = scmp.ne.s32.totalorder %s208, %s210
      %p217 = scmp.eq.s32.totalorder %s32, 1
      %p218 = por %p216, %p217
      %p219 = scmp.ne.s32.totalorder %s210, %s211
      %p220 = scmp.eq.s32.totalorder %s32, 0
      %p221 = por %p219, %p220
      %p222 = scmp.ne.s32.totalorder %s210, %s211
      %p223 = scmp.eq.s32.totalorder %s33, 1
      %p224 = por %p222, %p223
      %p226 = scmp.ne.s32.totalorder %s211, %s225
      %p227 = scmp.eq.s32.totalorder %s33, 0
      %p228 = por %p226, %p227
      %s230 = sadd.s32 %s229, 1
      %p233 = scmp.eq.s32.totalorder %s27, 1
      %p234 = scmp.ne.s32.totalorder %s229, %s231
      %p235 = scmp.eq.s32.totalorder %s27, 0
      %p236 = por %p234, %p235
      %p237 = scmp.ne.s32.totalorder %s229, %s231
      %p238 = scmp.eq.s32.totalorder %s32, 1
      %p239 = por %p237, %p238
      %p240 = scmp.ne.s32.totalorder %s231, %s232
      %p241 = scmp.eq.s32.totalorder %s32, 0
      %p242 = por %p240, %p241
      %p243 = scmp.ne.s32.totalorder %s231, %s232
      %p244 = scmp.eq.s32.totalorder %s33, 1
      %p245 = por %p243, %p244
      %p247 = scmp.ne.s32.totalorder %s232, %s246
      %p248 = scmp.eq.s32.totalorder %s33, 0
      %p249 = por %p247, %p248
      %s251 = sadd.s32 %s250, 1
      %p254 = scmp.eq.s32.totalorder %s27, 1
      %p255 = scmp.ne.s32.totalorder %s250, %s252
      %p256 = scmp.eq.s32.totalorder %s27, 0
      %p257 = por %p255, %p256
      %p258 = scmp.ne.s32.totalorder %s250, %s252
      %p259 = scmp.eq.s32.totalorder %s32, 1
      %p260 = por %p258, %p259
      %p261 = scmp.ne.s32.totalorder %s252, %s253
      %p262 = scmp.eq.s32.totalorder %s32, 0
      %p263 = por %p261, %p262
      %p264 = scmp.ne.s32.totalorder %s252, %s253
      %p265 = scmp.eq.s32.totalorder %s33, 1
      %p266 = por %p264, %p265
      %p268 = scmp.ne.s32.totalorder %s253, %s267
      %p269 = scmp.eq.s32.totalorder %s33, 0
      %p270 = por %p268, %p269
      %s272 = sadd.s32 %s271, 1
      %p275 = scmp.eq.s32.totalorder %s27, 1
      %p276 = scmp.ne.s32.totalorder %s271, %s273
      %p277 = scmp.eq.s32.totalorder %s27, 0
      %p278 = por %p276, %p277
      %p279 = scmp.ne.s32.totalorder %s271, %s273
      %p280 = scmp.eq.s32.totalorder %s32, 1
      %p281 = por %p279, %p280
      %p282 = scmp.ne.s32.totalorder %s273, %s274
      %p283 = scmp.eq.s32.totalorder %s32, 0
      %p284 = por %p282, %p283
      %p285 = scmp.ne.s32.totalorder %s273, %s274
      %p286 = scmp.eq.s32.totalorder %s33, 1
      %p287 = por %p285, %p286
      %p289 = scmp.ne.s32.totalorder %s274, %s288
      %p290 = scmp.eq.s32.totalorder %s33, 0
      %p291 = por %p289, %p290
      %s293 = sadd.s32 %s292, 1
      %p296 = scmp.eq.s32.totalorder %s27, 1
      %p297 = scmp.ne.s32.totalorder %s292, %s294
      %p298 = scmp.eq.s32.totalorder %s27, 0
      %p299 = por %p297, %p298
      %p300 = scmp.ne.s32.totalorder %s292, %s294
      %p301 = scmp.eq.s32.totalorder %s32, 1
      %p302 = por %p300, %p301
      %p303 = scmp.ne.s32.totalorder %s294, %s295
      %p304 = scmp.eq.s32.totalorder %s32, 0
      %p305 = por %p303, %p304
      %p306 = scmp.ne.s32.totalorder %s294, %s295
      %p307 = scmp.eq.s32.totalorder %s33, 1
      %p308 = por %p306, %p307
      %p310 = scmp.ne.s32.totalorder %s295, %s309
      %p311 = scmp.eq.s32.totalorder %s33, 0
      %p312 = por %p310, %p311
      %s314 = sadd.s32 %s313, 1
      %p317 = scmp.eq.s32.totalorder %s27, 1
      %p318 = scmp.ne.s32.totalorder %s313, %s315
      %p319 = scmp.eq.s32.totalorder %s27, 0
      %p320 = por %p318, %p319
      %p321 = scmp.ne.s32.totalorder %s313, %s315
      %p322 = scmp.eq.s32.totalorder %s32, 1
      %p323 = por %p321, %p322
      %p324 = scmp.ne.s32.totalorder %s315, %s316
      %p325 = scmp.eq.s32.totalorder %s32, 0
      %p326 = por %p324, %p325
      %p327 = scmp.ne.s32.totalorder %s315, %s316
      %p328 = scmp.eq.s32.totalorder %s33, 1
      %p329 = por %p327, %p328
      %p331 = scmp.ne.s32.totalorder %s316, %s330
      %p332 = scmp.eq.s32.totalorder %s33, 0
      %p333 = por %p331, %p332
      %s335 = sadd.s32 %s334, 1
      %p338 = scmp.eq.s32.totalorder %s27, 1
      %p339 = scmp.ne.s32.totalorder %s334, %s336
      %p340 = scmp.eq.s32.totalorder %s27, 0
      %p341 = por %p339, %p340
      %p342 = scmp.ne.s32.totalorder %s334, %s336
      %p343 = scmp.eq.s32.totalorder %s32, 1
      %p344 = por %p342, %p343
      %p345 = scmp.ne.s32.totalorder %s336, %s337
      %p346 = scmp.eq.s32.totalorder %s32, 0
      %p347 = por %p345, %p346
      %p348 = scmp.ne.s32.totalorder %s336, %s337
      %p349 = scmp.eq.s32.totalorder %s33, 1
      %p350 = por %p348, %p349
      %p352 = scmp.ne.s32.totalorder %s337, %s351
      %p353 = scmp.eq.s32.totalorder %s33, 0
      %p354 = por %p352, %p353
      %s356 = sadd.s32 %s355, 1
      %p359 = scmp.eq.s32.totalorder %s27, 1
      %p360 = scmp.ne.s32.totalorder %s355, %s357
      %p361 = scmp.eq.s32.totalorder %s27, 0
      %p362 = por %p360, %p361
      %p363 = scmp.ne.s32.totalorder %s355, %s357
      %p364 = scmp.eq.s32.totalorder %s32, 1
      %p365 = por %p363, %p364
      %p366 = scmp.ne.s32.totalorder %s357, %s358
      %p367 = scmp.eq.s32.totalorder %s32, 0
      %p368 = por %p366, %p367
      %p369 = scmp.ne.s32.totalorder %s357, %s358
      %p370 = scmp.eq.s32.totalorder %s33, 1
      %p371 = por %p369, %p370
      %p373 = scmp.ne.s32.totalorder %s358, %s372
      %p374 = scmp.eq.s32.totalorder %s33, 0
      %p375 = por %p373, %p374
      %s377 = sadd.s32 %s376, 1
      %p380 = scmp.eq.s32.totalorder %s27, 1
      %p381 = scmp.ne.s32.totalorder %s376, %s378
      %p382 = scmp.eq.s32.totalorder %s27, 0
      %p383 = por %p381, %p382
      %p384 = scmp.ne.s32.totalorder %s376, %s378
      %p385 = scmp.eq.s32.totalorder %s32, 1
      %p386 = por %p384, %p385
      %p387 = scmp.ne.s32.totalorder %s378, %s379
      %p388 = scmp.eq.s32.totalorder %s32, 0
      %p389 = por %p387, %p388
      %p390 = scmp.ne.s32.totalorder %s378, %s379
      %p391 = scmp.eq.s32.totalorder %s33, 1
      %p392 = por %p390, %p391
      %p394 = scmp.ne.s32.totalorder %s379, %s393
      %p395 = scmp.eq.s32.totalorder %s33, 0
      %p396 = por %p394, %p395
      %s398 = sadd.s32 %s397, 1
      %p401 = scmp.eq.s32.totalorder %s27, 1
      %p402 = scmp.ne.s32.totalorder %s397, %s399
      %p403 = scmp.eq.s32.totalorder %s27, 0
      %p404 = por %p402, %p403
      %p405 = scmp.ne.s32.totalorder %s397, %s399
      %p406 = scmp.eq.s32.totalorder %s32, 1
      %p407 = por %p405, %p406
      %p408 = scmp.ne.s32.totalorder %s399, %s400
      %p409 = scmp.eq.s32.totalorder %s32, 0
      %p410 = por %p408, %p409
      %p411 = scmp.ne.s32.totalorder %s399, %s400
      %p412 = scmp.eq.s32.totalorder %s33, 1
      %p413 = por %p411, %p412
      %p415 = scmp.ne.s32.totalorder %s400, %s414
      %p416 = scmp.eq.s32.totalorder %s33, 0
      %p417 = por %p415, %p416
      %s418 = ssub.s32 %s27, %s34
      %p419 = scmp.eq.s32.totalorder %s418, 0
      %s421 = sadd.s32 %s420, 1
      %s422 = scalar_select %p419, %s420, %s421
      %p425 = pneg %p419
      %p426 = scmp.eq.s32.totalorder %s27, 1
      %p427 = por %p425, %p426
      %p428 = scmp.ne.s32.totalorder %s420, %s423
      %p429 = scmp.eq.s32.totalorder %s27, 0
      %p430 = por %p428, %p429
      %p431 = scmp.ne.s32.totalorder %s420, %s423
      %p432 = scmp.eq.s32.totalorder %s32, 1
      %p433 = por %p431, %p432
      %p434 = scmp.ne.s32.totalorder %s423, %s424
      %p435 = scmp.eq.s32.totalorder %s32, 0
      %p436 = por %p434, %p435
      %p437 = scmp.ne.s32.totalorder %s423, %s424
      %p438 = scmp.eq.s32.totalorder %s33, 1
      %p439 = por %p437, %p438
      %p441 = scmp.ne.s32.totalorder %s424, %s440
      %p442 = scmp.eq.s32.totalorder %s33, 0
      %p443 = por %p441, %p442
      %p444 = scmp.le.s32.totalorder 1, %s27
      %p445 = scmp.lt.s32.totalorder %s27, 3
      %p446 = pnand %p444, %p445
      %p447 = pneg %p446
      // Predicated region
      $region9: #{forward.1} parent=5 // pred_check
        _
      $region10: #{forward.1} parent=5 // pred_check_branch
        %449 = sbr.rel (%p446) target = $region12
      $region11: #{forward.1} parent=5 // pred_region
        %s450 = ssub.s32 %s27, 1
        // Predicated region
        $region13: #{forward.1} parent=11 // pred_check
          %p451 = pneg %p74
        $region14: #{forward.1} parent=11 // pred_check_branch
          %453 = sbr.rel (%p451) target = $region16
        $region15: #{forward.1} parent=11 // pred_region
          _
        $region16: #{forward.1} parent=11 // pred_fallthru
          _
        // Predicated region
        $region17: #{forward.1} parent=11 // pred_check
          %p454 = pneg %p95
        $region18: #{forward.1} parent=11 // pred_check_branch
          %456 = sbr.rel (%p454) target = $region20
        $region19: #{forward.1} parent=11 // pred_region
          _
        $region20: #{forward.1} parent=11 // pred_fallthru
          _
        // Predicated region
        $region21: #{forward.1} parent=11 // pred_check
          %p457 = pneg %p116
        $region22: #{forward.1} parent=11 // pred_check_branch
          %459 = sbr.rel (%p457) target = $region24
        $region23: #{forward.1} parent=11 // pred_region
          %461 = vsyncadd [#allocation3], 0
          %s462 = sshll.u32 %s3, 4
          %s463 = int_to_ptr.hbm [resolvable:$true] %s462
          %s464 = sshll.u32 [#allocation2], 4
          %s465 = int_to_ptr.vmem [resolvable:$true] %s464
          %470 = dma.hbm_to_vmem [thread:$0]  %s463, 4096, %s465, [#allocation3], 512, 512, 32
        $region24: #{forward.1} parent=11 // pred_fallthru
          _
        // Predicated region
        $region25: #{forward.1} parent=11 // pred_check
          %p471 = pneg %p137
        $region26: #{forward.1} parent=11 // pred_check_branch
          %473 = sbr.rel (%p471) target = $region28
        $region27: #{forward.1} parent=11 // pred_region
          _
        $region28: #{forward.1} parent=11 // pred_fallthru
          _
        // Predicated region
        $region29: #{forward.1} parent=11 // pred_check
          %p474 = pneg %p158
        $region30: #{forward.1} parent=11 // pred_check_branch
          %476 = sbr.rel (%p474) target = $region32
        $region31: #{forward.1} parent=11 // pred_region
          _
        $region32: #{forward.1} parent=11 // pred_fallthru
          _
        // Predicated region
        $region33: #{forward.1} parent=11 // pred_check
          %p477 = pneg %p179
        $region34: #{forward.1} parent=11 // pred_check_branch
          %479 = sbr.rel (%p477) target = $region36
        $region35: #{forward.1} parent=11 // pred_region
          %481 = vsyncadd [#allocation5], 0
          %s482 = sshll.u32 %s6, 4
          %s483 = int_to_ptr.hbm [resolvable:$true] %s482
          %s484 = sshll.u32 [#allocation4], 4
          %s485 = int_to_ptr.vmem [resolvable:$true] %s484
          %490 = dma.hbm_to_vmem [thread:$0]  %s483, 16384, %s485, [#allocation5], 512, 512, 32
        $region36: #{forward.1} parent=11 // pred_fallthru
          _
        // Predicated region
        $region37: #{forward.1} parent=11 // pred_check
          %p491 = pneg %p200
        $region38: #{forward.1} parent=11 // pred_check_branch
          %493 = sbr.rel (%p491) target = $region40
        $region39: #{forward.1} parent=11 // pred_region
          _
        $region40: #{forward.1} parent=11 // pred_fallthru
          _
        // Predicated region
        $region41: #{forward.1} parent=11 // pred_check
          %p494 = pneg %p221
        $region42: #{forward.1} parent=11 // pred_check_branch
          %496 = sbr.rel (%p494) target = $region44
        $region43: #{forward.1} parent=11 // pred_region
          _
        $region44: #{forward.1} parent=11 // pred_fallthru
          _
        // Predicated region
        $region45: #{forward.1} parent=11 // pred_check
          %p497 = pneg %p242
        $region46: #{forward.1} parent=11 // pred_check_branch
          %499 = sbr.rel (%p497) target = $region48
        $region47: #{forward.1} parent=11 // pred_region
          %501 = vsyncadd [#allocation5], 0
          %s502 = sshll.u32 %s9, 4
          %s503 = int_to_ptr.hbm [resolvable:$true] %s502
          %s504 = sshll.u32 [#allocation6], 4
          %s505 = int_to_ptr.vmem [resolvable:$true] %s504
          %510 = dma.hbm_to_vmem [thread:$0]  %s503, 16384, %s505, [#allocation5], 512, 512, 32
        $region48: #{forward.1} parent=11 // pred_fallthru
          _
        // Predicated region
        $region49: #{forward.1} parent=11 // pred_check
          %p511 = pneg %p263
        $region50: #{forward.1} parent=11 // pred_check_branch
          %513 = sbr.rel (%p511) target = $region52
        $region51: #{forward.1} parent=11 // pred_region
          _
        $region52: #{forward.1} parent=11 // pred_fallthru
          _
        // Predicated region
        $region53: #{forward.1} parent=11 // pred_check
          %p514 = pneg %p284
        $region54: #{forward.1} parent=11 // pred_check_branch
          %516 = sbr.rel (%p514) target = $region56
        $region55: #{forward.1} parent=11 // pred_region
          _
        $region56: #{forward.1} parent=11 // pred_fallthru
          _
        // Predicated region
        $region57: #{forward.1} parent=11 // pred_check
          %p517 = pneg %p305
        $region58: #{forward.1} parent=11 // pred_check_branch
          %519 = sbr.rel (%p517) target = $region60
        $region59: #{forward.1} parent=11 // pred_region
          %521 = vsyncadd [#allocation8], 0
          %s522 = sshll.u32 %s12, 4
          %s523 = int_to_ptr.hbm [resolvable:$true] %s522
          %s524 = sshll.u32 [#allocation7], 4
          %s525 = int_to_ptr.vmem [resolvable:$true] %s524
          %530 = dma.hbm_to_vmem [thread:$0]  %s523, 16384, %s525, [#allocation8], 512, 512, 32
        $region60: #{forward.1} parent=11 // pred_fallthru
          _
        // Predicated region
        $region61: #{forward.1} parent=11 // pred_check
          %p531 = pneg %p326
        $region62: #{forward.1} parent=11 // pred_check_branch
          %533 = sbr.rel (%p531) target = $region64
        $region63: #{forward.1} parent=11 // pred_region
          _
        $region64: #{forward.1} parent=11 // pred_fallthru
          _
        // Predicated region
        $region65: #{forward.1} parent=11 // pred_check
          %p534 = pneg %p347
        $region66: #{forward.1} parent=11 // pred_check_branch
          %536 = sbr.rel (%p534) target = $region68
        $region67: #{forward.1} parent=11 // pred_region
          _
        $region68: #{forward.1} parent=11 // pred_fallthru
          _
        // Predicated region
        $region69: #{forward.1} parent=11 // pred_check
          %p537 = pneg %p368
        $region70: #{forward.1} parent=11 // pred_check_branch
          %539 = sbr.rel (%p537) target = $region72
        $region71: #{forward.1} parent=11 // pred_region
          %541 = vsyncadd [#allocation8], 0
          %s542 = sshll.u32 %s15, 4
          %s543 = int_to_ptr.hbm [resolvable:$true] %s542
          %s544 = sshll.u32 [#allocation9], 4
          %s545 = int_to_ptr.vmem [resolvable:$true] %s544
          %550 = dma.hbm_to_vmem [thread:$0]  %s543, 6144, %s545, [#allocation8], 192, 192, 12
        $region72: #{forward.1} parent=11 // pred_fallthru
          _
        // Predicated region
        $region73: #{forward.1} parent=11 // pred_check
          %p551 = pneg %p389
        $region74: #{forward.1} parent=11 // pred_check_branch
          %553 = sbr.rel (%p551) target = $region76
        $region75: #{forward.1} parent=11 // pred_region
          _
        $region76: #{forward.1} parent=11 // pred_fallthru
          _
        // Predicated region
        $region77: #{forward.1} parent=11 // pred_check
          %p554 = pneg %p410
        $region78: #{forward.1} parent=11 // pred_check_branch
          %556 = sbr.rel (%p554) target = $region80
        $region79: #{forward.1} parent=11 // pred_region
          _
        $region80: #{forward.1} parent=11 // pred_fallthru
          _
      $region12: #{forward.1} parent=5 // pred_fallthru
        _
      %p557 = scmp.lt.s32.totalorder %s27, 2
      // Predicated region
      $region81: #{forward.1} parent=5 // pred_check
        %p558 = pneg %p557
      $region82: #{forward.1} parent=5 // pred_check_branch
        %560 = sbr.rel (%p558) target = $region84
      $region83: #{forward.1} parent=5 // pred_region
        // Predicated region
        $region85: #{forward.1} parent=83 // pred_check
          %p561 = pneg %p47
        $region86: #{forward.1} parent=83 // pred_check_branch
          %563 = sbr.rel (%p561) target = $region88
        $region87: #{forward.1} parent=83 // pred_region
          %p564 = scmp.lt.s32.totalorder %s27, 1
          %s565 = scalar_select %p564, %s27, 1
          %s566 = scalar_lea.vmem %s0, %s565
        $region88: #{forward.1} parent=83 // pred_fallthru
          _
      $region84: #{forward.1} parent=5 // pred_fallthru
        _
      %p567 = scmp.le.s32.totalorder 1, %s27
      %p568 = scmp.lt.s32.totalorder %s27, 3
      %p569 = pnand %p567, %p568
      %p570 = pneg %p569
      // Predicated region
      $region89: #{forward.1} parent=5 // pred_check
        _
      $region90: #{forward.1} parent=5 // pred_check_branch
        %572 = sbr.rel (%p569) target = $region92
      $region91: #{forward.1} parent=5 // pred_region
        %s573 = ssub.s32 %s27, 1
        // Predicated region
        $region93: #{forward.1} parent=91 // pred_check
          %p574 = pneg %p116
        $region94: #{forward.1} parent=91 // pred_check_branch
          %576 = sbr.rel (%p574) target = $region96
        $region95: #{forward.1} parent=91 // pred_region
          %578 = dma.done [#allocation3], 4096
        $region96: #{forward.1} parent=91 // pred_fallthru
          _
        // Predicated region
        $region97: #{forward.1} parent=91 // pred_check
          %p579 = pneg %p179
        $region98: #{forward.1} parent=91 // pred_check_branch
          %581 = sbr.rel (%p579) target = $region100
        $region99: #{forward.1} parent=91 // pred_region
          %583 = dma.done [#allocation5], 16384
        $region100: #{forward.1} parent=91 // pred_fallthru
          _
        // Predicated region
        $region101: #{forward.1} parent=91 // pred_check
          %p584 = pneg %p242
        $region102: #{forward.1} parent=91 // pred_check_branch
          %586 = sbr.rel (%p584) target = $region104
        $region103: #{forward.1} parent=91 // pred_region
          %588 = dma.done [#allocation5], 16384
        $region104: #{forward.1} parent=91 // pred_fallthru
          _
        // Predicated region
        $region105: #{forward.1} parent=91 // pred_check
          %p589 = pneg %p305
        $region106: #{forward.1} parent=91 // pred_check_branch
          %591 = sbr.rel (%p589) target = $region108
        $region107: #{forward.1} parent=91 // pred_region
          %593 = dma.done [#allocation8], 16384
        $region108: #{forward.1} parent=91 // pred_fallthru
          _
        // Predicated region
        $region109: #{forward.1} parent=91 // pred_check
          %p594 = pneg %p368
        $region110: #{forward.1} parent=91 // pred_check_branch
          %596 = sbr.rel (%p594) target = $region112
        $region111: #{forward.1} parent=91 // pred_region
          %598 = dma.done [#allocation8], 6144
        $region112: #{forward.1} parent=91 // pred_fallthru
          _
        %p599 = scmp.lt.s32.totalorder %s32, 1
        %s600 = scalar_select %p599, %s32, 1
        %s601 = scalar_lea.vmem %s0, %s600
        %p602 = pneg %p53
        %p603 = pneg %p50
        %p604 = pneg %p74
        %p605 = pneg %p71
        %p606 = pneg %p95
        %p607 = pneg %p92
        %p608 = pneg %p116
        %p609 = pneg %p113
        %p610 = pneg %p137
        %p611 = pneg %p134
        %p612 = pneg %p158
        %p613 = pneg %p155
        %p614 = pneg %p179
        %p615 = pneg %p176
        %p616 = pneg %p200
        %p617 = pneg %p197
        %p618 = pneg %p221
        %p619 = pneg %p218
        %p620 = pneg %p242
        %p621 = pneg %p239
        %p622 = pneg %p263
        %p623 = pneg %p260
        %p624 = pneg %p284
        %p625 = pneg %p281
        %p626 = pneg %p305
        %p627 = pneg %p302
        %p628 = pneg %p326
        %p629 = pneg %p323
        %p630 = pneg %p347
        %p631 = pneg %p344
        %p632 = pneg %p368
        %p633 = pneg %p365
        %p634 = pneg %p389
        %p635 = pneg %p386
        %p636 = pneg %p410
        %p637 = pneg %p407
        %p638 = pneg %p436
        %p639 = pneg %p433
        %p640 = scmp.lt.s32.totalorder %s32, 1
        %s641 = scalar_select %p640, %s32, 1
        %s642 = smul.addr %s641, 4
        %s643 = smul.addr %s642, 8
        %s644 = scalar_lea.vmem %s18, %s643
        %p645 = scmp.lt.s32.totalorder %s32, 1
        %s646 = scalar_select %p645, %s32, 1
        %s647 = scalar_lea.vmem %s0, %s646
        %p648 = scmp.lt.s32.totalorder %s32, 1
        %s649 = scalar_select %p648, %s32, 1
        %s650 = smul.addr %s649, 4
        %s651 = smul.addr %s650, 8
        %s652 = scalar_lea.vmem %s18, %s651
        %v654 = vld [vmem:[%s647] sm:$0x1]
        %v655 = vld [vmem:[%s1] sm:$0x1]
        %v656 = vmul.f32 %v654, %v655
        %v657 = vld [vmem:[%s2] sm:$0x1]
        %v658 = vadd.f32 %v656, %v657
        %vm659 = vcmp.ge.f32.partialorder %v658, 0.0
        %v660 = vmul.f32 %v658, 0.01
        %v661 = vsel %vm659, %v658, %v660
        %v662 = vpack.c.bf16 %v661, %v661
        %v663 = vld [vmem:[#allocation2] sm:$0xff]
        %v664 = vld [vmem:[#allocation2 + $0x8] sm:$0xff]
        %v665 = vld [vmem:[#allocation2 + $0x10] sm:$0xff]
        %v666 = vld [vmem:[#allocation2 + $0x18] sm:$0xff]
        %v667 = vld [vmem:[#allocation2 + $0x20] sm:$0xff]
        %v668 = vld [vmem:[#allocation2 + $0x28] sm:$0xff]
        %v669 = vld [vmem:[#allocation2 + $0x30] sm:$0xff]
        %v670 = vld [vmem:[#allocation2 + $0x38] sm:$0xff]
        %v671 = vld [vmem:[#allocation2 + $0x40] sm:$0xff]
        %v672 = vld [vmem:[#allocation2 + $0x48] sm:$0xff]
        %v673 = vld [vmem:[#allocation2 + $0x50] sm:$0xff]
        %v674 = vld [vmem:[#allocation2 + $0x58] sm:$0xff]
        %v675 = vld [vmem:[#allocation2 + $0x60] sm:$0xff]
        %v676 = vld [vmem:[#allocation2 + $0x68] sm:$0xff]
        %v677 = vld [vmem:[#allocation2 + $0x70] sm:$0xff]
        %v678 = vld [vmem:[#allocation2 + $0x78] sm:$0xff]
        %v679 = vld [vmem:[#allocation2 + $0x80] sm:$0xff]
        %v680 = vld [vmem:[#allocation2 + $0x88] sm:$0xff]
        %v681 = vld [vmem:[#allocation2 + $0x90] sm:$0xff]
        %v682 = vld [vmem:[#allocation2 + $0x98] sm:$0xff]
        %v683 = vld [vmem:[#allocation2 + $0xa0] sm:$0xff]
        %v684 = vld [vmem:[#allocation2 + $0xa8] sm:$0xff]
        %v685 = vld [vmem:[#allocation2 + $0xb0] sm:$0xff]
        %v686 = vld [vmem:[#allocation2 + $0xb8] sm:$0xff]
        %v687 = vld [vmem:[#allocation2 + $0xc0] sm:$0xff]
        %v688 = vld [vmem:[#allocation2 + $0xc8] sm:$0xff]
        %v689 = vld [vmem:[#allocation2 + $0xd0] sm:$0xff]
        %v690 = vld [vmem:[#allocation2 + $0xd8] sm:$0xff]
        %v691 = vld [vmem:[#allocation2 + $0xe0] sm:$0xff]
        %v692 = vld [vmem:[#allocation2 + $0xe8] sm:$0xff]
        %v693 = vld [vmem:[#allocation2 + $0xf0] sm:$0xff]
        %v694 = vld [vmem:[#allocation2 + $0xf8] sm:$0xff]
        %v695 = vld [vmem:[%s4] sm:$0xff]
        %v728 = vunpack.c.l.b16 %v663
        %v729 = vunpack.c.h.b16 %v663
        %v730 = vunpack.c.l.b16 %v664
        %v731 = vunpack.c.h.b16 %v664
        %v732 = vunpack.c.l.b16 %v665
        %v733 = vunpack.c.h.b16 %v665
        %v734 = vunpack.c.l.b16 %v666
        %v735 = vunpack.c.h.b16 %v666
        %v736 = vunpack.c.l.b16 %v667
        %v737 = vunpack.c.h.b16 %v667
        %v738 = vunpack.c.l.b16 %v668
        %v739 = vunpack.c.h.b16 %v668
        %v740 = vunpack.c.l.b16 %v669
        %v741 = vunpack.c.h.b16 %v669
        %v742 = vunpack.c.l.b16 %v670
        %v743 = vunpack.c.h.b16 %v670
        %v744 = vunpack.c.l.b16 %v671
        %v745 = vunpack.c.h.b16 %v671
        %v746 = vunpack.c.l.b16 %v672
        %v747 = vunpack.c.h.b16 %v672
        %v748 = vunpack.c.l.b16 %v673
        %v749 = vunpack.c.h.b16 %v673
        %v750 = vunpack.c.l.b16 %v674
        %v751 = vunpack.c.h.b16 %v674
        %v752 = vunpack.c.l.b16 %v675
        %v753 = vunpack.c.h.b16 %v675
        %v754 = vunpack.c.l.b16 %v676
        %v755 = vunpack.c.h.b16 %v676
        %v756 = vunpack.c.l.b16 %v677
        %v757 = vunpack.c.h.b16 %v677
        %v758 = vunpack.c.l.b16 %v678
        %v759 = vunpack.c.h.b16 %v678
        %v760 = vunpack.c.l.b16 %v679
        %v761 = vunpack.c.h.b16 %v679
        %v762 = vunpack.c.l.b16 %v680
        %v763 = vunpack.c.h.b16 %v680
        %v764 = vunpack.c.l.b16 %v681
        %v765 = vunpack.c.h.b16 %v681
        %v766 = vunpack.c.l.b16 %v682
        %v767 = vunpack.c.h.b16 %v682
        %v768 = vunpack.c.l.b16 %v683
        %v769 = vunpack.c.h.b16 %v683
        %v770 = vunpack.c.l.b16 %v684
        %v771 = vunpack.c.h.b16 %v684
        %v772 = vunpack.c.l.b16 %v685
        %v773 = vunpack.c.h.b16 %v685
        %v774 = vunpack.c.l.b16 %v686
        %v775 = vunpack.c.h.b16 %v686
        %v776 = vunpack.c.l.b16 %v687
        %v777 = vunpack.c.h.b16 %v687
        %v778 = vunpack.c.l.b16 %v688
        %v779 = vunpack.c.h.b16 %v688
        %v780 = vunpack.c.l.b16 %v689
        %v781 = vunpack.c.h.b16 %v689
        %v782 = vunpack.c.l.b16 %v690
        %v783 = vunpack.c.h.b16 %v690
        %v784 = vunpack.c.l.b16 %v691
        %v785 = vunpack.c.h.b16 %v691
        %v786 = vunpack.c.l.b16 %v692
        %v787 = vunpack.c.h.b16 %v692
        %v788 = vunpack.c.l.b16 %v693
        %v789 = vunpack.c.h.b16 %v693
        %v790 = vunpack.c.l.b16 %v694
        %v791 = vunpack.c.h.b16 %v694
        %v792 = vpack.c.b16 %v736, %v728
        %v793 = vpack.c.b16 %v737, %v729
        %v794 = vpack.c.b16 %v738, %v730
        %v795 = vpack.c.b16 %v739, %v731
        %v796 = vpack.c.b16 %v740, %v732
        %v797 = vpack.c.b16 %v741, %v733
        %v798 = vpack.c.b16 %v742, %v734
        %v799 = vpack.c.b16 %v743, %v735
        %v800 = vpack.c.b16 %v752, %v744
        %v801 = vpack.c.b16 %v753, %v745
        %v802 = vpack.c.b16 %v754, %v746
        %v803 = vpack.c.b16 %v755, %v747
        %v804 = vpack.c.b16 %v756, %v748
        %v805 = vpack.c.b16 %v757, %v749
        %v806 = vpack.c.b16 %v758, %v750
        %v807 = vpack.c.b16 %v759, %v751
        %v808 = vpack.c.b16 %v768, %v760
        %v809 = vpack.c.b16 %v769, %v761
        %v810 = vpack.c.b16 %v770, %v762
        %v811 = vpack.c.b16 %v771, %v763
        %v812 = vpack.c.b16 %v772, %v764
        %v813 = vpack.c.b16 %v773, %v765
        %v814 = vpack.c.b16 %v774, %v766
        %v815 = vpack.c.b16 %v775, %v767
        %v816 = vpack.c.b16 %v784, %v776
        %v817 = vpack.c.b16 %v785, %v777
        %v818 = vpack.c.b16 %v786, %v778
        %v819 = vpack.c.b16 %v787, %v779
        %v820 = vpack.c.b16 %v788, %v780
        %v821 = vpack.c.b16 %v789, %v781
        %v822 = vpack.c.b16 %v790, %v782
        %v823 = vpack.c.b16 %v791, %v783
        %v857 = vperm.slane %v695, 0
        %v858 = vperm.slane %v695, 1
        %v859 = vperm.slane %v695, 2
        %v860 = vperm.slane %v695, 3
        %v861 = vperm.slane %v695, 4
        %v862 = vperm.slane %v695, 5
        %v863 = vperm.slane %v695, 6
        %v864 = vperm.slane %v695, 7
        %vm873 = vcmask 523264
        %v875 = vsel %vm873, %v662, 0
        %877 = vmatpush.bf16.msra.mxu0 0
        %878 = vmatpush.bf16.msra.mxu0 0
        %879 = vmatpush.bf16.msra.mxu0 0
        %880 = vmatpush.bf16.msra.mxu0 0
        %881 = vmatpush.bf16.msra.mxu0 %v816
        %882 = vmatpush.bf16.msra.mxu0 %v808
        %883 = vmatpush.bf16.msra.mxu0 %v800
        %884 = vmatpush.bf16.msra.mxu0 %v792
        %885 = vmatmul.bf16.gmra.mxu0 %v875
        %v886 = vpop.f32.mrf.mxu0
        %v887 = vadd.f32 %v857, %v886
        %v888 = vpop.f32.mrf.mxu0
        %889 = vdwg.mxu0
        %890 = vmatpush.bf16.msra.mxu0 0
        %891 = vmatpush.bf16.msra.mxu0 0
        %892 = vmatpush.bf16.msra.mxu0 0
        %893 = vmatpush.bf16.msra.mxu0 0
        %894 = vmatpush.bf16.msra.mxu0 %v817
        %895 = vmatpush.bf16.msra.mxu0 %v809
        %896 = vmatpush.bf16.msra.mxu0 %v801
        %897 = vmatpush.bf16.msra.mxu0 %v793
        %898 = vmatmul.bf16.gmra.mxu0 %v875
        %v899 = vpop.f32.mrf.mxu0
        %v900 = vadd.f32 %v858, %v899
        %v901 = vpop.f32.mrf.mxu0
        %902 = vdwg.mxu0
        %903 = vmatpush.bf16.msra.mxu0 0
        %904 = vmatpush.bf16.msra.mxu0 0
        %905 = vmatpush.bf16.msra.mxu0 0
        %906 = vmatpush.bf16.msra.mxu0 0
        %907 = vmatpush.bf16.msra.mxu0 %v818
        %908 = vmatpush.bf16.msra.mxu0 %v810
        %909 = vmatpush.bf16.msra.mxu0 %v802
        %910 = vmatpush.bf16.msra.mxu0 %v794
        %911 = vmatmul.bf16.gmra.mxu0 %v875
        %v912 = vpop.f32.mrf.mxu0
        %v913 = vadd.f32 %v859, %v912
        %v914 = vpop.f32.mrf.mxu0
        %915 = vdwg.mxu0
        %916 = vmatpush.bf16.msra.mxu0 0
        %917 = vmatpush.bf16.msra.mxu0 0
        %918 = vmatpush.bf16.msra.mxu0 0
        %919 = vmatpush.bf16.msra.mxu0 0
        %920 = vmatpush.bf16.msra.mxu0 %v819
        %921 = vmatpush.bf16.msra.mxu0 %v811
        %922 = vmatpush.bf16.msra.mxu0 %v803
        %923 = vmatpush.bf16.msra.mxu0 %v795
        %924 = vmatmul.bf16.gmra.mxu0 %v875
        %v925 = vpop.f32.mrf.mxu0
        %v926 = vadd.f32 %v860, %v925
        %v927 = vpop.f32.mrf.mxu0
        %928 = vdwg.mxu0
        %929 = vmatpush.bf16.msra.mxu0 0
        %930 = vmatpush.bf16.msra.mxu0 0
        %931 = vmatpush.bf16.msra.mxu0 0
        %932 = vmatpush.bf16.msra.mxu0 0
        %933 = vmatpush.bf16.msra.mxu0 %v820
        %934 = vmatpush.bf16.msra.mxu0 %v812
        %935 = vmatpush.bf16.msra.mxu0 %v804
        %936 = vmatpush.bf16.msra.mxu0 %v796
        %937 = vmatmul.bf16.gmra.mxu0 %v875
        %v938 = vpop.f32.mrf.mxu0
        %v939 = vadd.f32 %v861, %v938
        %v940 = vpop.f32.mrf.mxu0
        %941 = vdwg.mxu0
        %942 = vmatpush.bf16.msra.mxu0 0
        %943 = vmatpush.bf16.msra.mxu0 0
        %944 = vmatpush.bf16.msra.mxu0 0
        %945 = vmatpush.bf16.msra.mxu0 0
        %946 = vmatpush.bf16.msra.mxu0 %v821
        %947 = vmatpush.bf16.msra.mxu0 %v813
        %948 = vmatpush.bf16.msra.mxu0 %v805
        %949 = vmatpush.bf16.msra.mxu0 %v797
        %950 = vmatmul.bf16.gmra.mxu0 %v875
        %v951 = vpop.f32.mrf.mxu0
        %v952 = vadd.f32 %v862, %v951
        %v953 = vpop.f32.mrf.mxu0
        %954 = vdwg.mxu0
        %955 = vmatpush.bf16.msra.mxu0 0
        %956 = vmatpush.bf16.msra.mxu0 0
        %957 = vmatpush.bf16.msra.mxu0 0
        %958 = vmatpush.bf16.msra.mxu0 0
        %959 = vmatpush.bf16.msra.mxu0 %v822
        %960 = vmatpush.bf16.msra.mxu0 %v814
        %961 = vmatpush.bf16.msra.mxu0 %v806
        %962 = vmatpush.bf16.msra.mxu0 %v798
        %963 = vmatmul.bf16.gmra.mxu0 %v875
        %v964 = vpop.f32.mrf.mxu0
        %v965 = vadd.f32 %v863, %v964
        %v966 = vpop.f32.mrf.mxu0
        %967 = vdwg.mxu0
        %968 = vmatpush.bf16.msra.mxu0 0
        %969 = vmatpush.bf16.msra.mxu0 0
        %970 = vmatpush.bf16.msra.mxu0 0
        %971 = vmatpush.bf16.msra.mxu0 0
        %972 = vmatpush.bf16.msra.mxu0 %v823
        %973 = vmatpush.bf16.msra.mxu0 %v815
        %974 = vmatpush.bf16.msra.mxu0 %v807
        %975 = vmatpush.bf16.msra.mxu0 %v799
        %976 = vmatmul.bf16.gmra.mxu0 %v875
        %v977 = vpop.f32.mrf.mxu0
        %v978 = vadd.f32 %v864, %v977
        %v979 = vpop.f32.mrf.mxu0
        %980 = vdwg.mxu0
        %vm981 = vcmp.ge.f32.partialorder %v887, 0.0
        %vm982 = vcmp.ge.f32.partialorder %v900, 0.0
        %vm983 = vcmp.ge.f32.partialorder %v913, 0.0
        %vm984 = vcmp.ge.f32.partialorder %v926, 0.0
        %vm985 = vcmp.ge.f32.partialorder %v939, 0.0
        %vm986 = vcmp.ge.f32.partialorder %v952, 0.0
        %vm987 = vcmp.ge.f32.partialorder %v965, 0.0
        %vm988 = vcmp.ge.f32.partialorder %v978, 0.0
        %v989 = vmul.f32 %v887, 0.01
        %v990 = vmul.f32 %v900, 0.01
        %v991 = vmul.f32 %v913, 0.01
        %v992 = vmul.f32 %v926, 0.01
        %v993 = vmul.f32 %v939, 0.01
        %v994 = vmul.f32 %v952, 0.01
        %v995 = vmul.f32 %v965, 0.01
        %v996 = vmul.f32 %v978, 0.01
        %v997 = vsel %vm981, %v887, %v989
        %v998 = vsel %vm982, %v900, %v990
        %v999 = vsel %vm983, %v913, %v991
        %v1000 = vsel %vm984, %v926, %v992
        %v1001 = vsel %vm985, %v939, %v993
        %v1002 = vsel %vm986, %v952, %v994
        %v1003 = vsel %vm987, %v965, %v995
        %v1004 = vsel %vm988, %v978, %v996
        %v1005 = vld [vmem:[%s5] sm:$0xf]
        %v1006 = vperm.slane %v997, 0
        %v1007 = vperm.slane %v998, 0
        %s1008 = scalar_lea.vmem %s5, 4
        %v1009 = vld [vmem:[%s1008] sm:$0xf]
        %v1010 = vperm.slane %v999, 0
        %v1011 = vperm.slane %v1000, 0
        %vm1012 = vcmask 64512
        %v1014 = vsel %vm1012, %v1009, 0
        %1016 = vmatpush.msra.mxu0 0.0
        %1017 = vmatpush.msra.mxu0 0.0
        %1018 = vmatpush.msra.mxu0 0.0
        %1019 = vmatpush.msra.mxu0 0.0
        %1020 = vmatpush.msra.mxu0 0.0
        %1021 = vmatpush.msra.mxu0 0.0
        %1022 = vmatpush.msra.mxu0 0.0
        %1023 = vmatpush.msra.mxu0 0.0
        %1024 = vmatpush.msra.mxu0 0.0
        %1025 = vmatpush.msra.mxu0 0.0
        %1026 = vmatpush.msra.mxu0 0.0
        %1027 = vmatpush.msra.mxu0 0.0
        %1028 = vmatpush.msra.mxu0 0.0
        %1029 = vmatpush.msra.mxu0 0.0
        %1030 = vmatpush.msra.mxu0 0.0
        %1031 = vmatpush.msra.mxu0 %v1010
        %1032 = vmatmul.f32.gmra.mxu0 %v1014
        %v1033 = vpop.f32.mrf.mxu0
        %v1034 = vadd.f32 0.0, %v1033
        %1035 = vdwg.mxu0
        %1036 = vmatpush.msra.mxu0 0.0
        %1037 = vmatpush.msra.mxu0 0.0
        %1038 = vmatpush.msra.mxu0 0.0
        %1039 = vmatpush.msra.mxu0 0.0
        %1040 = vmatpush.msra.mxu0 0.0
        %1041 = vmatpush.msra.mxu0 0.0
        %1042 = vmatpush.msra.mxu0 0.0
        %1043 = vmatpush.msra.mxu0 0.0
        %1044 = vmatpush.msra.mxu0 0.0
        %1045 = vmatpush.msra.mxu0 0.0
        %1046 = vmatpush.msra.mxu0 0.0
        %1047 = vmatpush.msra.mxu0 0.0
        %1048 = vmatpush.msra.mxu0 0.0
        %1049 = vmatpush.msra.mxu0 0.0
        %1050 = vmatpush.msra.mxu0 0.0
        %1051 = vmatpush.msra.mxu0 %v1011
        %1052 = vmatmul.f32.gmra.mxu0 %v1014
        %v1053 = vpop.f32.mrf.mxu0
        %v1054 = vadd.f32 0.0, %v1053
        %1055 = vdwg.mxu0
        %v1057 = vsel %vm1012, %v1005, 0
        %1059 = vmatpush.msra.mxu0 0.0
        %1060 = vmatpush.msra.mxu0 0.0
        %1061 = vmatpush.msra.mxu0 0.0
        %1062 = vmatpush.msra.mxu0 0.0
        %1063 = vmatpush.msra.mxu0 0.0
        %1064 = vmatpush.msra.mxu0 0.0
        %1065 = vmatpush.msra.mxu0 0.0
        %1066 = vmatpush.msra.mxu0 0.0
        %1067 = vmatpush.msra.mxu0 0.0
        %1068 = vmatpush.msra.mxu0 0.0
        %1069 = vmatpush.msra.mxu0 0.0
        %1070 = vmatpush.msra.mxu0 0.0
        %1071 = vmatpush.msra.mxu0 0.0
        %1072 = vmatpush.msra.mxu0 0.0
        %1073 = vmatpush.msra.mxu0 0.0
        %1074 = vmatpush.msra.mxu0 %v1006
        %1075 = vmatmul.f32.gmra.mxu0 %v1057
        %v1076 = vpop.f32.mrf.mxu0
        %v1077 = vadd.f32 %v1034, %v1076
        %1078 = vdwg.mxu0
        %1079 = vmatpush.msra.mxu0 0.0
        %1080 = vmatpush.msra.mxu0 0.0
        %1081 = vmatpush.msra.mxu0 0.0
        %1082 = vmatpush.msra.mxu0 0.0
        %1083 = vmatpush.msra.mxu0 0.0
        %1084 = vmatpush.msra.mxu0 0.0
        %1085 = vmatpush.msra.mxu0 0.0
        %1086 = vmatpush.msra.mxu0 0.0
        %1087 = vmatpush.msra.mxu0 0.0
        %1088 = vmatpush.msra.mxu0 0.0
        %1089 = vmatpush.msra.mxu0 0.0
        %1090 = vmatpush.msra.mxu0 0.0
        %1091 = vmatpush.msra.mxu0 0.0
        %1092 = vmatpush.msra.mxu0 0.0
        %1093 = vmatpush.msra.mxu0 0.0
        %1094 = vmatpush.msra.mxu0 %v1007
        %1095 = vmatmul.f32.gmra.mxu0 %v1057
        %v1096 = vpop.f32.mrf.mxu0
        %v1097 = vadd.f32 %v1054, %v1096
        %1098 = vdwg.mxu0
        %s1099 = scalar_lea.vmem %s5, 8
        %v1100 = vld [vmem:[%s1099] sm:$0xf]
        %v1101 = vperm.slane %v1001, 0
        %v1102 = vperm.slane %v1002, 0
        %v1104 = vsel %vm1012, %v1100, 0
        %1106 = vmatpush.msra.mxu0 0.0
        %1107 = vmatpush.msra.mxu0 0.0
        %1108 = vmatpush.msra.mxu0 0.0
        %1109 = vmatpush.msra.mxu0 0.0
        %1110 = vmatpush.msra.mxu0 0.0
        %1111 = vmatpush.msra.mxu0 0.0
        %1112 = vmatpush.msra.mxu0 0.0
        %1113 = vmatpush.msra.mxu0 0.0
        %1114 = vmatpush.msra.mxu0 0.0
        %1115 = vmatpush.msra.mxu0 0.0
        %1116 = vmatpush.msra.mxu0 0.0
        %1117 = vmatpush.msra.mxu0 0.0
        %1118 = vmatpush.msra.mxu0 0.0
        %1119 = vmatpush.msra.mxu0 0.0
        %1120 = vmatpush.msra.mxu0 0.0
        %1121 = vmatpush.msra.mxu0 %v1101
        %1122 = vmatmul.f32.gmra.mxu0 %v1104
        %v1123 = vpop.f32.mrf.mxu0
        %v1124 = vadd.f32 0.0, %v1123
        %1125 = vdwg.mxu0
        %1126 = vmatpush.msra.mxu0 0.0
        %1127 = vmatpush.msra.mxu0 0.0
        %1128 = vmatpush.msra.mxu0 0.0
        %1129 = vmatpush.msra.mxu0 0.0
        %1130 = vmatpush.msra.mxu0 0.0
        %1131 = vmatpush.msra.mxu0 0.0
        %1132 = vmatpush.msra.mxu0 0.0
        %1133 = vmatpush.msra.mxu0 0.0
        %1134 = vmatpush.msra.mxu0 0.0
        %1135 = vmatpush.msra.mxu0 0.0
        %1136 = vmatpush.msra.mxu0 0.0
        %1137 = vmatpush.msra.mxu0 0.0
        %1138 = vmatpush.msra.mxu0 0.0
        %1139 = vmatpush.msra.mxu0 0.0
        %1140 = vmatpush.msra.mxu0 0.0
        %1141 = vmatpush.msra.mxu0 %v1102
        %1142 = vmatmul.f32.gmra.mxu0 %v1104
        %v1143 = vpop.f32.mrf.mxu0
        %v1144 = vadd.f32 0.0, %v1143
        %1145 = vdwg.mxu0
        %v1146 = vadd.f32 %v1077, %v1124
        %v1147 = vadd.f32 %v1097, %v1144
        %s1148 = scalar_lea.vmem %s5, 12
        %v1149 = vld [vmem:[%s1148] sm:$0xf]
        %v1150 = vperm.slane %v1003, 0
        %v1151 = vperm.slane %v1004, 0
        %v1153 = vsel %vm1012, %v1149, 0
        %1155 = vmatpush.msra.mxu0 0.0
        %1156 = vmatpush.msra.mxu0 0.0
        %1157 = vmatpush.msra.mxu0 0.0
        %1158 = vmatpush.msra.mxu0 0.0
        %1159 = vmatpush.msra.mxu0 0.0
        %1160 = vmatpush.msra.mxu0 0.0
        %1161 = vmatpush.msra.mxu0 0.0
        %1162 = vmatpush.msra.mxu0 0.0
        %1163 = vmatpush.msra.mxu0 0.0
        %1164 = vmatpush.msra.mxu0 0.0
        %1165 = vmatpush.msra.mxu0 0.0
        %1166 = vmatpush.msra.mxu0 0.0
        %1167 = vmatpush.msra.mxu0 0.0
        %1168 = vmatpush.msra.mxu0 0.0
        %1169 = vmatpush.msra.mxu0 0.0
        %1170 = vmatpush.msra.mxu0 %v1150
        %1171 = vmatmul.f32.gmra.mxu0 %v1153
        %v1172 = vpop.f32.mrf.mxu0
        %v1173 = vadd.f32 0.0, %v1172
        %1174 = vdwg.mxu0
        %1175 = vmatpush.msra.mxu0 0.0
        %1176 = vmatpush.msra.mxu0 0.0
        %1177 = vmatpush.msra.mxu0 0.0
        %1178 = vmatpush.msra.mxu0 0.0
        %1179 = vmatpush.msra.mxu0 0.0
        %1180 = vmatpush.msra.mxu0 0.0
        %1181 = vmatpush.msra.mxu0 0.0
        %1182 = vmatpush.msra.mxu0 0.0
        %1183 = vmatpush.msra.mxu0 0.0
        %1184 = vmatpush.msra.mxu0 0.0
        %1185 = vmatpush.msra.mxu0 0.0
        %1186 = vmatpush.msra.mxu0 0.0
        %1187 = vmatpush.msra.mxu0 0.0
        %1188 = vmatpush.msra.mxu0 0.0
        %1189 = vmatpush.msra.mxu0 0.0
        %1190 = vmatpush.msra.mxu0 %v1151
        %1191 = vmatmul.f32.gmra.mxu0 %v1153
        %v1192 = vpop.f32.mrf.mxu0
        %v1193 = vadd.f32 0.0, %v1192
        %1194 = vdwg.mxu0
        %v1195 = vadd.f32 %v1146, %v1173
        %v1196 = vadd.f32 %v1147, %v1193
        %v1197 = vpack.c.bf16 %v1195, %v1195
        %v1198 = vpack.c.bf16 %v1196, %v1196
        %v1199 = vld [vmem:[#allocation4] sm:$0xff]
        %v1200 = vld [vmem:[#allocation4 + $0x8] sm:$0xff]
        %v1201 = vld [vmem:[#allocation4 + $0x10] sm:$0xff]
        %v1202 = vld [vmem:[#allocation4 + $0x18] sm:$0xff]
        %v1203 = vld [vmem:[#allocation4 + $0x20] sm:$0xff]
        %v1204 = vld [vmem:[#allocation4 + $0x28] sm:$0xff]
        %v1205 = vld [vmem:[#allocation4 + $0x30] sm:$0xff]
        %v1206 = vld [vmem:[#allocation4 + $0x38] sm:$0xff]
        %v1207 = vld [vmem:[#allocation4 + $0x40] sm:$0xff]
        %v1208 = vld [vmem:[#allocation4 + $0x48] sm:$0xff]
        %v1209 = vld [vmem:[#allocation4 + $0x50] sm:$0xff]
        %v1210 = vld [vmem:[#allocation4 + $0x58] sm:$0xff]
        %v1211 = vld [vmem:[#allocation4 + $0x60] sm:$0xff]
        %v1212 = vld [vmem:[#allocation4 + $0x68] sm:$0xff]
        %v1213 = vld [vmem:[#allocation4 + $0x70] sm:$0xff]
        %v1214 = vld [vmem:[#allocation4 + $0x78] sm:$0xff]
        %v1215 = vld [vmem:[#allocation4 + $0x80] sm:$0xff]
        %v1216 = vld [vmem:[#allocation4 + $0x88] sm:$0xff]
        %v1217 = vld [vmem:[#allocation4 + $0x90] sm:$0xff]
        %v1218 = vld [vmem:[#allocation4 + $0x98] sm:$0xff]
        %v1219 = vld [vmem:[#allocation4 + $0xa0] sm:$0xff]
        %v1220 = vld [vmem:[#allocation4 + $0xa8] sm:$0xff]
        %v1221 = vld [vmem:[#allocation4 + $0xb0] sm:$0xff]
        %v1222 = vld [vmem:[#allocation4 + $0xb8] sm:$0xff]
        %v1223 = vld [vmem:[#allocation4 + $0xc0] sm:$0xff]
        %v1224 = vld [vmem:[#allocation4 + $0xc8] sm:$0xff]
        %v1225 = vld [vmem:[#allocation4 + $0xd0] sm:$0xff]
        %v1226 = vld [vmem:[#allocation4 + $0xd8] sm:$0xff]
        %v1227 = vld [vmem:[#allocation4 + $0xe0] sm:$0xff]
        %v1228 = vld [vmem:[#allocation4 + $0xe8] sm:$0xff]
        %v1229 = vld [vmem:[#allocation4 + $0xf0] sm:$0xff]
        %v1230 = vld [vmem:[#allocation4 + $0xf8] sm:$0xff]
        %v1231 = vld [vmem:[#allocation4 + $0x100] sm:$0xff]
        %v1232 = vld [vmem:[#allocation4 + $0x108] sm:$0xff]
        %v1233 = vld [vmem:[#allocation4 + $0x110] sm:$0xff]
        %v1234 = vld [vmem:[#allocation4 + $0x118] sm:$0xff]
        %v1235 = vld [vmem:[#allocation4 + $0x120] sm:$0xff]
        %v1236 = vld [vmem:[#allocation4 + $0x128] sm:$0xff]
        %v1237 = vld [vmem:[#allocation4 + $0x130] sm:$0xff]
        %v1238 = vld [vmem:[#allocation4 + $0x138] sm:$0xff]
        %v1239 = vld [vmem:[#allocation4 + $0x140] sm:$0xff]
        %v1240 = vld [vmem:[#allocation4 + $0x148] sm:$0xff]
        %v1241 = vld [vmem:[#allocation4 + $0x150] sm:$0xff]
        %v1242 = vld [vmem:[#allocation4 + $0x158] sm:$0xff]
        %v1243 = vld [vmem:[#allocation4 + $0x160] sm:$0xff]
        %v1244 = vld [vmem:[#allocation4 + $0x168] sm:$0xff]
        %v1245 = vld [vmem:[#allocation4 + $0x170] sm:$0xff]
        %v1246 = vld [vmem:[#allocation4 + $0x178] sm:$0xff]
        %v1247 = vld [vmem:[#allocation4 + $0x180] sm:$0xff]
        %v1248 = vld [vmem:[#allocation4 + $0x188] sm:$0xff]
        %v1249 = vld [vmem:[#allocation4 + $0x190] sm:$0xff]
        %v1250 = vld [vmem:[#allocation4 + $0x198] sm:$0xff]
        %v1251 = vld [vmem:[#allocation4 + $0x1a0] sm:$0xff]
        %v1252 = vld [vmem:[#allocation4 + $0x1a8] sm:$0xff]
        %v1253 = vld [vmem:[#allocation4 + $0x1b0] sm:$0xff]
        %v1254 = vld [vmem:[#allocation4 + $0x1b8] sm:$0xff]
        %v1255 = vld [vmem:[#allocation4 + $0x1c0] sm:$0xff]
        %v1256 = vld [vmem:[#allocation4 + $0x1c8] sm:$0xff]
        %v1257 = vld [vmem:[#allocation4 + $0x1d0] sm:$0xff]
        %v1258 = vld [vmem:[#allocation4 + $0x1d8] sm:$0xff]
        %v1259 = vld [vmem:[#allocation4 + $0x1e0] sm:$0xff]
        %v1260 = vld [vmem:[#allocation4 + $0x1e8] sm:$0xff]
        %v1261 = vld [vmem:[#allocation4 + $0x1f0] sm:$0xff]
        %v1262 = vld [vmem:[#allocation4 + $0x1f8] sm:$0xff]
        %v1263 = vld [vmem:[#allocation4 + $0x200] sm:$0xff]
        %v1264 = vld [vmem:[#allocation4 + $0x208] sm:$0xff]
        %v1265 = vld [vmem:[#allocation4 + $0x210] sm:$0xff]
        %v1266 = vld [vmem:[#allocation4 + $0x218] sm:$0xff]
        %v1267 = vld [vmem:[#allocation4 + $0x220] sm:$0xff]
        %v1268 = vld [vmem:[#allocation4 + $0x228] sm:$0xff]
        %v1269 = vld [vmem:[#allocation4 + $0x230] sm:$0xff]
        %v1270 = vld [vmem:[#allocation4 + $0x238] sm:$0xff]
        %v1271 = vld [vmem:[#allocation4 + $0x240] sm:$0xff]
        %v1272 = vld [vmem:[#allocation4 + $0x248] sm:$0xff]
        %v1273 = vld [vmem:[#allocation4 + $0x250] sm:$0xff]
        %v1274 = vld [vmem:[#allocation4 + $0x258] sm:$0xff]
        %v1275 = vld [vmem:[#allocation4 + $0x260] sm:$0xff]
        %v1276 = vld [vmem:[#allocation4 + $0x268] sm:$0xff]
        %v1277 = vld [vmem:[#allocation4 + $0x270] sm:$0xff]
        %v1278 = vld [vmem:[#allocation4 + $0x278] sm:$0xff]
        %v1279 = vld [vmem:[#allocation4 + $0x280] sm:$0xff]
        %v1280 = vld [vmem:[#allocation4 + $0x288] sm:$0xff]
        %v1281 = vld [vmem:[#allocation4 + $0x290] sm:$0xff]
        %v1282 = vld [vmem:[#allocation4 + $0x298] sm:$0xff]
        %v1283 = vld [vmem:[#allocation4 + $0x2a0] sm:$0xff]
        %v1284 = vld [vmem:[#allocation4 + $0x2a8] sm:$0xff]
        %v1285 = vld [vmem:[#allocation4 + $0x2b0] sm:$0xff]
        %v1286 = vld [vmem:[#allocation4 + $0x2b8] sm:$0xff]
        %v1287 = vld [vmem:[#allocation4 + $0x2c0] sm:$0xff]
        %v1288 = vld [vmem:[#allocation4 + $0x2c8] sm:$0xff]
        %v1289 = vld [vmem:[#allocation4 + $0x2d0] sm:$0xff]
        %v1290 = vld [vmem:[#allocation4 + $0x2d8] sm:$0xff]
        %v1291 = vld [vmem:[#allocation4 + $0x2e0] sm:$0xff]
        %v1292 = vld [vmem:[#allocation4 + $0x2e8] sm:$0xff]
        %v1293 = vld [vmem:[#allocation4 + $0x2f0] sm:$0xff]
        %v1294 = vld [vmem:[#allocation4 + $0x2f8] sm:$0xff]
        %v1295 = vld [vmem:[#allocation4 + $0x300] sm:$0xff]
        %v1296 = vld [vmem:[#allocation4 + $0x308] sm:$0xff]
        %v1297 = vld [vmem:[#allocation4 + $0x310] sm:$0xff]
        %v1298 = vld [vmem:[#allocation4 + $0x318] sm:$0xff]
        %v1299 = vld [vmem:[#allocation4 + $0x320] sm:$0xff]
        %v1300 = vld [vmem:[#allocation4 + $0x328] sm:$0xff]
        %v1301 = vld [vmem:[#allocation4 + $0x330] sm:$0xff]
        %v1302 = vld [vmem:[#allocation4 + $0x338] sm:$0xff]
        %v1303 = vld [vmem:[#allocation4 + $0x340] sm:$0xff]
        %v1304 = vld [vmem:[#allocation4 + $0x348] sm:$0xff]
        %v1305 = vld [vmem:[#allocation4 + $0x350] sm:$0xff]
        %v1306 = vld [vmem:[#allocation4 + $0x358] sm:$0xff]
        %v1307 = vld [vmem:[#allocation4 + $0x360] sm:$0xff]
        %v1308 = vld [vmem:[#allocation4 + $0x368] sm:$0xff]
        %v1309 = vld [vmem:[#allocation4 + $0x370] sm:$0xff]
        %v1310 = vld [vmem:[#allocation4 + $0x378] sm:$0xff]
        %v1311 = vld [vmem:[#allocation4 + $0x380] sm:$0xff]
        %v1312 = vld [vmem:[#allocation4 + $0x388] sm:$0xff]
        %v1313 = vld [vmem:[#allocation4 + $0x390] sm:$0xff]
        %v1314 = vld [vmem:[#allocation4 + $0x398] sm:$0xff]
        %v1315 = vld [vmem:[#allocation4 + $0x3a0] sm:$0xff]
        %v1316 = vld [vmem:[#allocation4 + $0x3a8] sm:$0xff]
        %v1317 = vld [vmem:[#allocation4 + $0x3b0] sm:$0xff]
        %v1318 = vld [vmem:[#allocation4 + $0x3b8] sm:$0xff]
        %v1319 = vld [vmem:[#allocation4 + $0x3c0] sm:$0xff]
        %v1320 = vld [vmem:[#allocation4 + $0x3c8] sm:$0xff]
        %v1321 = vld [vmem:[#allocation4 + $0x3d0] sm:$0xff]
        %v1322 = vld [vmem:[#allocation4 + $0x3d8] sm:$0xff]
        %v1323 = vld [vmem:[#allocation4 + $0x3e0] sm:$0xff]
        %v1324 = vld [vmem:[#allocation4 + $0x3e8] sm:$0xff]
        %v1325 = vld [vmem:[#allocation4 + $0x3f0] sm:$0xff]
        %v1326 = vld [vmem:[#allocation4 + $0x3f8] sm:$0xff]
        %v1455 = vunpack.c.l.b16 %v1199
        %v1456 = vunpack.c.h.b16 %v1199
        %v1457 = vunpack.c.l.b16 %v1200
        %v1458 = vunpack.c.h.b16 %v1200
        %v1459 = vunpack.c.l.b16 %v1201
        %v1460 = vunpack.c.h.b16 %v1201
        %v1461 = vunpack.c.l.b16 %v1202
        %v1462 = vunpack.c.h.b16 %v1202
        %v1463 = vunpack.c.l.b16 %v1203
        %v1464 = vunpack.c.h.b16 %v1203
        %v1465 = vunpack.c.l.b16 %v1204
        %v1466 = vunpack.c.h.b16 %v1204
        %v1467 = vunpack.c.l.b16 %v1205
        %v1468 = vunpack.c.h.b16 %v1205
        %v1469 = vunpack.c.l.b16 %v1206
        %v1470 = vunpack.c.h.b16 %v1206
        %v1471 = vunpack.c.l.b16 %v1207
        %v1472 = vunpack.c.h.b16 %v1207
        %v1473 = vunpack.c.l.b16 %v1208
        %v1474 = vunpack.c.h.b16 %v1208
        %v1475 = vunpack.c.l.b16 %v1209
        %v1476 = vunpack.c.h.b16 %v1209
        %v1477 = vunpack.c.l.b16 %v1210
        %v1478 = vunpack.c.h.b16 %v1210
        %v1479 = vunpack.c.l.b16 %v1211
        %v1480 = vunpack.c.h.b16 %v1211
        %v1481 = vunpack.c.l.b16 %v1212
        %v1482 = vunpack.c.h.b16 %v1212
        %v1483 = vunpack.c.l.b16 %v1213
        %v1484 = vunpack.c.h.b16 %v1213
        %v1485 = vunpack.c.l.b16 %v1214
        %v1486 = vunpack.c.h.b16 %v1214
        %v1487 = vunpack.c.l.b16 %v1215
        %v1488 = vunpack.c.h.b16 %v1215
        %v1489 = vunpack.c.l.b16 %v1216
        %v1490 = vunpack.c.h.b16 %v1216
        %v1491 = vunpack.c.l.b16 %v1217
        %v1492 = vunpack.c.h.b16 %v1217
        %v1493 = vunpack.c.l.b16 %v1218
        %v1494 = vunpack.c.h.b16 %v1218
        %v1495 = vunpack.c.l.b16 %v1219
        %v1496 = vunpack.c.h.b16 %v1219
        %v1497 = vunpack.c.l.b16 %v1220
        %v1498 = vunpack.c.h.b16 %v1220
        %v1499 = vunpack.c.l.b16 %v1221
        %v1500 = vunpack.c.h.b16 %v1221
        %v1501 = vunpack.c.l.b16 %v1222
        %v1502 = vunpack.c.h.b16 %v1222
        %v1503 = vunpack.c.l.b16 %v1223
        %v1504 = vunpack.c.h.b16 %v1223
        %v1505 = vunpack.c.l.b16 %v1224
        %v1506 = vunpack.c.h.b16 %v1224
        %v1507 = vunpack.c.l.b16 %v1225
        %v1508 = vunpack.c.h.b16 %v1225
        %v1509 = vunpack.c.l.b16 %v1226
        %v1510 = vunpack.c.h.b16 %v1226
        %v1511 = vunpack.c.l.b16 %v1227
        %v1512 = vunpack.c.h.b16 %v1227
        %v1513 = vunpack.c.l.b16 %v1228
        %v1514 = vunpack.c.h.b16 %v1228
        %v1515 = vunpack.c.l.b16 %v1229
        %v1516 = vunpack.c.h.b16 %v1229
        %v1517 = vunpack.c.l.b16 %v1230
        %v1518 = vunpack.c.h.b16 %v1230
        %v1519 = vunpack.c.l.b16 %v1231
        %v1520 = vunpack.c.h.b16 %v1231
        %v1521 = vunpack.c.l.b16 %v1232
        %v1522 = vunpack.c.h.b16 %v1232
        %v1523 = vunpack.c.l.b16 %v1233
        %v1524 = vunpack.c.h.b16 %v1233
        %v1525 = vunpack.c.l.b16 %v1234
        %v1526 = vunpack.c.h.b16 %v1234
        %v1527 = vunpack.c.l.b16 %v1235
        %v1528 = vunpack.c.h.b16 %v1235
        %v1529 = vunpack.c.l.b16 %v1236
        %v1530 = vunpack.c.h.b16 %v1236
        %v1531 = vunpack.c.l.b16 %v1237
        %v1532 = vunpack.c.h.b16 %v1237
        %v1533 = vunpack.c.l.b16 %v1238
        %v1534 = vunpack.c.h.b16 %v1238
        %v1535 = vunpack.c.l.b16 %v1239
        %v1536 = vunpack.c.h.b16 %v1239
        %v1537 = vunpack.c.l.b16 %v1240
        %v1538 = vunpack.c.h.b16 %v1240
        %v1539 = vunpack.c.l.b16 %v1241
        %v1540 = vunpack.c.h.b16 %v1241
        %v1541 = vunpack.c.l.b16 %v1242
        %v1542 = vunpack.c.h.b16 %v1242
        %v1543 = vunpack.c.l.b16 %v1243
        %v1544 = vunpack.c.h.b16 %v1243
        %v1545 = vunpack.c.l.b16 %v1244
        %v1546 = vunpack.c.h.b16 %v1244
        %v1547 = vunpack.c.l.b16 %v1245
        %v1548 = vunpack.c.h.b16 %v1245
        %v1549 = vunpack.c.l.b16 %v1246
        %v1550 = vunpack.c.h.b16 %v1246
        %v1551 = vunpack.c.l.b16 %v1247
        %v1552 = vunpack.c.h.b16 %v1247
        %v1553 = vunpack.c.l.b16 %v1248
        %v1554 = vunpack.c.h.b16 %v1248
        %v1555 = vunpack.c.l.b16 %v1249
        %v1556 = vunpack.c.h.b16 %v1249
        %v1557 = vunpack.c.l.b16 %v1250
        %v1558 = vunpack.c.h.b16 %v1250
        %v1559 = vunpack.c.l.b16 %v1251
        %v1560 = vunpack.c.h.b16 %v1251
        %v1561 = vunpack.c.l.b16 %v1252
        %v1562 = vunpack.c.h.b16 %v1252
        %v1563 = vunpack.c.l.b16 %v1253
        %v1564 = vunpack.c.h.b16 %v1253
        %v1565 = vunpack.c.l.b16 %v1254
        %v1566 = vunpack.c.h.b16 %v1254
        %v1567 = vunpack.c.l.b16 %v1255
        %v1568 = vunpack.c.h.b16 %v1255
        %v1569 = vunpack.c.l.b16 %v1256
        %v1570 = vunpack.c.h.b16 %v1256
        %v1571 = vunpack.c.l.b16 %v1257
        %v1572 = vunpack.c.h.b16 %v1257
        %v1573 = vunpack.c.l.b16 %v1258
        %v1574 = vunpack.c.h.b16 %v1258
        %v1575 = vunpack.c.l.b16 %v1259
        %v1576 = vunpack.c.h.b16 %v1259
        %v1577 = vunpack.c.l.b16 %v1260
        %v1578 = vunpack.c.h.b16 %v1260
        %v1579 = vunpack.c.l.b16 %v1261
        %v1580 = vunpack.c.h.b16 %v1261
        %v1581 = vunpack.c.l.b16 %v1262
        %v1582 = vunpack.c.h.b16 %v1262
        %v1583 = vunpack.c.l.b16 %v1263
        %v1584 = vunpack.c.h.b16 %v1263
        %v1585 = vunpack.c.l.b16 %v1264
        %v1586 = vunpack.c.h.b16 %v1264
        %v1587 = vunpack.c.l.b16 %v1265
        %v1588 = vunpack.c.h.b16 %v1265
        %v1589 = vunpack.c.l.b16 %v1266
        %v1590 = vunpack.c.h.b16 %v1266
        %v1591 = vunpack.c.l.b16 %v1267
        %v1592 = vunpack.c.h.b16 %v1267
        %v1593 = vunpack.c.l.b16 %v1268
        %v1594 = vunpack.c.h.b16 %v1268
        %v1595 = vunpack.c.l.b16 %v1269
        %v1596 = vunpack.c.h.b16 %v1269
        %v1597 = vunpack.c.l.b16 %v1270
        %v1598 = vunpack.c.h.b16 %v1270
        %v1599 = vunpack.c.l.b16 %v1271
        %v1600 = vunpack.c.h.b16 %v1271
        %v1601 = vunpack.c.l.b16 %v1272
        %v1602 = vunpack.c.h.b16 %v1272
        %v1603 = vunpack.c.l.b16 %v1273
        %v1604 = vunpack.c.h.b16 %v1273
        %v1605 = vunpack.c.l.b16 %v1274
        %v1606 = vunpack.c.h.b16 %v1274
        %v1607 = vunpack.c.l.b16 %v1275
        %v1608 = vunpack.c.h.b16 %v1275
        %v1609 = vunpack.c.l.b16 %v1276
        %v1610 = vunpack.c.h.b16 %v1276
        %v1611 = vunpack.c.l.b16 %v1277
        %v1612 = vunpack.c.h.b16 %v1277
        %v1613 = vunpack.c.l.b16 %v1278
        %v1614 = vunpack.c.h.b16 %v1278
        %v1615 = vunpack.c.l.b16 %v1279
        %v1616 = vunpack.c.h.b16 %v1279
        %v1617 = vunpack.c.l.b16 %v1280
        %v1618 = vunpack.c.h.b16 %v1280
        %v1619 = vunpack.c.l.b16 %v1281
        %v1620 = vunpack.c.h.b16 %v1281
        %v1621 = vunpack.c.l.b16 %v1282
        %v1622 = vunpack.c.h.b16 %v1282
        %v1623 = vunpack.c.l.b16 %v1283
        %v1624 = vunpack.c.h.b16 %v1283
        %v1625 = vunpack.c.l.b16 %v1284
        %v1626 = vunpack.c.h.b16 %v1284
        %v1627 = vunpack.c.l.b16 %v1285
        %v1628 = vunpack.c.h.b16 %v1285
        %v1629 = vunpack.c.l.b16 %v1286
        %v1630 = vunpack.c.h.b16 %v1286
        %v1631 = vunpack.c.l.b16 %v1287
        %v1632 = vunpack.c.h.b16 %v1287
        %v1633 = vunpack.c.l.b16 %v1288
        %v1634 = vunpack.c.h.b16 %v1288
        %v1635 = vunpack.c.l.b16 %v1289
        %v1636 = vunpack.c.h.b16 %v1289
        %v1637 = vunpack.c.l.b16 %v1290
        %v1638 = vunpack.c.h.b16 %v1290
        %v1639 = vunpack.c.l.b16 %v1291
        %v1640 = vunpack.c.h.b16 %v1291
        %v1641 = vunpack.c.l.b16 %v1292
        %v1642 = vunpack.c.h.b16 %v1292
        %v1643 = vunpack.c.l.b16 %v1293
        %v1644 = vunpack.c.h.b16 %v1293
        %v1645 = vunpack.c.l.b16 %v1294
        %v1646 = vunpack.c.h.b16 %v1294
        %v1647 = vunpack.c.l.b16 %v1295
        %v1648 = vunpack.c.h.b16 %v1295
        %v1649 = vunpack.c.l.b16 %v1296
        %v1650 = vunpack.c.h.b16 %v1296
        %v1651 = vunpack.c.l.b16 %v1297
        %v1652 = vunpack.c.h.b16 %v1297
        %v1653 = vunpack.c.l.b16 %v1298
        %v1654 = vunpack.c.h.b16 %v1298
        %v1655 = vunpack.c.l.b16 %v1299
        %v1656 = vunpack.c.h.b16 %v1299
        %v1657 = vunpack.c.l.b16 %v1300
        %v1658 = vunpack.c.h.b16 %v1300
        %v1659 = vunpack.c.l.b16 %v1301
        %v1660 = vunpack.c.h.b16 %v1301
        %v1661 = vunpack.c.l.b16 %v1302
        %v1662 = vunpack.c.h.b16 %v1302
        %v1663 = vunpack.c.l.b16 %v1303
        %v1664 = vunpack.c.h.b16 %v1303
        %v1665 = vunpack.c.l.b16 %v1304
        %v1666 = vunpack.c.h.b16 %v1304
        %v1667 = vunpack.c.l.b16 %v1305
        %v1668 = vunpack.c.h.b16 %v1305
        %v1669 = vunpack.c.l.b16 %v1306
        %v1670 = vunpack.c.h.b16 %v1306
        %v1671 = vunpack.c.l.b16 %v1307
        %v1672 = vunpack.c.h.b16 %v1307
        %v1673 = vunpack.c.l.b16 %v1308
        %v1674 = vunpack.c.h.b16 %v1308
        %v1675 = vunpack.c.l.b16 %v1309
        %v1676 = vunpack.c.h.b16 %v1309
        %v1677 = vunpack.c.l.b16 %v1310
        %v1678 = vunpack.c.h.b16 %v1310
        %v1679 = vunpack.c.l.b16 %v1311
        %v1680 = vunpack.c.h.b16 %v1311
        %v1681 = vunpack.c.l.b16 %v1312
        %v1682 = vunpack.c.h.b16 %v1312
        %v1683 = vunpack.c.l.b16 %v1313
        %v1684 = vunpack.c.h.b16 %v1313
        %v1685 = vunpack.c.l.b16 %v1314
        %v1686 = vunpack.c.h.b16 %v1314
        %v1687 = vunpack.c.l.b16 %v1315
        %v1688 = vunpack.c.h.b16 %v1315
        %v1689 = vunpack.c.l.b16 %v1316
        %v1690 = vunpack.c.h.b16 %v1316
        %v1691 = vunpack.c.l.b16 %v1317
        %v1692 = vunpack.c.h.b16 %v1317
        %v1693 = vunpack.c.l.b16 %v1318
        %v1694 = vunpack.c.h.b16 %v1318
        %v1695 = vunpack.c.l.b16 %v1319
        %v1696 = vunpack.c.h.b16 %v1319
        %v1697 = vunpack.c.l.b16 %v1320
        %v1698 = vunpack.c.h.b16 %v1320
        %v1699 = vunpack.c.l.b16 %v1321
        %v1700 = vunpack.c.h.b16 %v1321
        %v1701 = vunpack.c.l.b16 %v1322
        %v1702 = vunpack.c.h.b16 %v1322
        %v1703 = vunpack.c.l.b16 %v1323
        %v1704 = vunpack.c.h.b16 %v1323
        %v1705 = vunpack.c.l.b16 %v1324
        %v1706 = vunpack.c.h.b16 %v1324
        %v1707 = vunpack.c.l.b16 %v1325
        %v1708 = vunpack.c.h.b16 %v1325
        %v1709 = vunpack.c.l.b16 %v1326
        %v1710 = vunpack.c.h.b16 %v1326
        %v1711 = vpack.c.b16 %v1463, %v1455
        %v1712 = vpack.c.b16 %v1464, %v1456
        %v1713 = vpack.c.b16 %v1465, %v1457
        %v1714 = vpack.c.b16 %v1466, %v1458
        %v1715 = vpack.c.b16 %v1467, %v1459
        %v1716 = vpack.c.b16 %v1468, %v1460
        %v1717 = vpack.c.b16 %v1469, %v1461
        %v1718 = vpack.c.b16 %v1470, %v1462
        %v1719 = vpack.c.b16 %v1479, %v1471
        %v1720 = vpack.c.b16 %v1480, %v1472
        %v1721 = vpack.c.b16 %v1481, %v1473
        %v1722 = vpack.c.b16 %v1482, %v1474
        %v1723 = vpack.c.b16 %v1483, %v1475
        %v1724 = vpack.c.b16 %v1484, %v1476
        %v1725 = vpack.c.b16 %v1485, %v1477
        %v1726 = vpack.c.b16 %v1486, %v1478
        %v1727 = vpack.c.b16 %v1495, %v1487
        %v1728 = vpack.c.b16 %v1496, %v1488
        %v1729 = vpack.c.b16 %v1497, %v1489
        %v1730 = vpack.c.b16 %v1498, %v1490
        %v1731 = vpack.c.b16 %v1499, %v1491
        %v1732 = vpack.c.b16 %v1500, %v1492
        %v1733 = vpack.c.b16 %v1501, %v1493
        %v1734 = vpack.c.b16 %v1502, %v1494
        %v1735 = vpack.c.b16 %v1511, %v1503
        %v1736 = vpack.c.b16 %v1512, %v1504
        %v1737 = vpack.c.b16 %v1513, %v1505
        %v1738 = vpack.c.b16 %v1514, %v1506
        %v1739 = vpack.c.b16 %v1515, %v1507
        %v1740 = vpack.c.b16 %v1516, %v1508
        %v1741 = vpack.c.b16 %v1517, %v1509
        %v1742 = vpack.c.b16 %v1518, %v1510
        %v1743 = vpack.c.b16 %v1527, %v1519
        %v1744 = vpack.c.b16 %v1528, %v1520
        %v1745 = vpack.c.b16 %v1529, %v1521
        %v1746 = vpack.c.b16 %v1530, %v1522
        %v1747 = vpack.c.b16 %v1531, %v1523
        %v1748 = vpack.c.b16 %v1532, %v1524
        %v1749 = vpack.c.b16 %v1533, %v1525
        %v1750 = vpack.c.b16 %v1534, %v1526
        %v1751 = vpack.c.b16 %v1543, %v1535
        %v1752 = vpack.c.b16 %v1544, %v1536
        %v1753 = vpack.c.b16 %v1545, %v1537
        %v1754 = vpack.c.b16 %v1546, %v1538
        %v1755 = vpack.c.b16 %v1547, %v1539
        %v1756 = vpack.c.b16 %v1548, %v1540
        %v1757 = vpack.c.b16 %v1549, %v1541
        %v1758 = vpack.c.b16 %v1550, %v1542
        %v1759 = vpack.c.b16 %v1559, %v1551
        %v1760 = vpack.c.b16 %v1560, %v1552
        %v1761 = vpack.c.b16 %v1561, %v1553
        %v1762 = vpack.c.b16 %v1562, %v1554
        %v1763 = vpack.c.b16 %v1563, %v1555
        %v1764 = vpack.c.b16 %v1564, %v1556
        %v1765 = vpack.c.b16 %v1565, %v1557
        %v1766 = vpack.c.b16 %v1566, %v1558
        %v1767 = vpack.c.b16 %v1575, %v1567
        %v1768 = vpack.c.b16 %v1576, %v1568
        %v1769 = vpack.c.b16 %v1577, %v1569
        %v1770 = vpack.c.b16 %v1578, %v1570
        %v1771 = vpack.c.b16 %v1579, %v1571
        %v1772 = vpack.c.b16 %v1580, %v1572
        %v1773 = vpack.c.b16 %v1581, %v1573
        %v1774 = vpack.c.b16 %v1582, %v1574
        %v1775 = vpack.c.b16 %v1591, %v1583
        %v1776 = vpack.c.b16 %v1592, %v1584
        %v1777 = vpack.c.b16 %v1593, %v1585
        %v1778 = vpack.c.b16 %v1594, %v1586
        %v1779 = vpack.c.b16 %v1595, %v1587
        %v1780 = vpack.c.b16 %v1596, %v1588
        %v1781 = vpack.c.b16 %v1597, %v1589
        %v1782 = vpack.c.b16 %v1598, %v1590
        %v1783 = vpack.c.b16 %v1607, %v1599
        %v1784 = vpack.c.b16 %v1608, %v1600
        %v1785 = vpack.c.b16 %v1609, %v1601
        %v1786 = vpack.c.b16 %v1610, %v1602
        %v1787 = vpack.c.b16 %v1611, %v1603
        %v1788 = vpack.c.b16 %v1612, %v1604
        %v1789 = vpack.c.b16 %v1613, %v1605
        %v1790 = vpack.c.b16 %v1614, %v1606
        %v1791 = vpack.c.b16 %v1623, %v1615
        %v1792 = vpack.c.b16 %v1624, %v1616
        %v1793 = vpack.c.b16 %v1625, %v1617
        %v1794 = vpack.c.b16 %v1626, %v1618
        %v1795 = vpack.c.b16 %v1627, %v1619
        %v1796 = vpack.c.b16 %v1628, %v1620
        %v1797 = vpack.c.b16 %v1629, %v1621
        %v1798 = vpack.c.b16 %v1630, %v1622
        %v1799 = vpack.c.b16 %v1639, %v1631
        %v1800 = vpack.c.b16 %v1640, %v1632
        %v1801 = vpack.c.b16 %v1641, %v1633
        %v1802 = vpack.c.b16 %v1642, %v1634
        %v1803 = vpack.c.b16 %v1643, %v1635
        %v1804 = vpack.c.b16 %v1644, %v1636
        %v1805 = vpack.c.b16 %v1645, %v1637
        %v1806 = vpack.c.b16 %v1646, %v1638
        %v1807 = vpack.c.b16 %v1655, %v1647
        %v1808 = vpack.c.b16 %v1656, %v1648
        %v1809 = vpack.c.b16 %v1657, %v1649
        %v1810 = vpack.c.b16 %v1658, %v1650
        %v1811 = vpack.c.b16 %v1659, %v1651
        %v1812 = vpack.c.b16 %v1660, %v1652
        %v1813 = vpack.c.b16 %v1661, %v1653
        %v1814 = vpack.c.b16 %v1662, %v1654
        %v1815 = vpack.c.b16 %v1671, %v1663
        %v1816 = vpack.c.b16 %v1672, %v1664
        %v1817 = vpack.c.b16 %v1673, %v1665
        %v1818 = vpack.c.b16 %v1674, %v1666
        %v1819 = vpack.c.b16 %v1675, %v1667
        %v1820 = vpack.c.b16 %v1676, %v1668
        %v1821 = vpack.c.b16 %v1677, %v1669
        %v1822 = vpack.c.b16 %v1678, %v1670
        %v1823 = vpack.c.b16 %v1687, %v1679
        %v1824 = vpack.c.b16 %v1688, %v1680
        %v1825 = vpack.c.b16 %v1689, %v1681
        %v1826 = vpack.c.b16 %v1690, %v1682
        %v1827 = vpack.c.b16 %v1691, %v1683
        %v1828 = vpack.c.b16 %v1692, %v1684
        %v1829 = vpack.c.b16 %v1693, %v1685
        %v1830 = vpack.c.b16 %v1694, %v1686
        %v1831 = vpack.c.b16 %v1703, %v1695
        %v1832 = vpack.c.b16 %v1704, %v1696
        %v1833 = vpack.c.b16 %v1705, %v1697
        %v1834 = vpack.c.b16 %v1706, %v1698
        %v1835 = vpack.c.b16 %v1707, %v1699
        %v1836 = vpack.c.b16 %v1708, %v1700
        %v1837 = vpack.c.b16 %v1709, %v1701
        %v1838 = vpack.c.b16 %v1710, %v1702
        %1967 = vmatpush.bf16.msra.mxu0 %v1767
        %1968 = vmatpush.bf16.msra.mxu0 %v1759
        %1969 = vmatpush.bf16.msra.mxu0 %v1751
        %1970 = vmatpush.bf16.msra.mxu0 %v1743
        %1971 = vmatpush.bf16.msra.mxu0 %v1735
        %1972 = vmatpush.bf16.msra.mxu0 %v1727
        %1973 = vmatpush.bf16.msra.mxu0 %v1719
        %1974 = vmatpush.bf16.msra.mxu0 %v1711
        %1975 = vmatmul.bf16.gmra.mxu0 %v1197
        %v1976 = vpop.f32.mrf.mxu0
        %v1977 = vadd.f32 0.0, %v1976
        %v1978 = vpop.f32.mrf.mxu0
        %1979 = vdwg.mxu0
        %1980 = vmatpush.bf16.msra.mxu0 %v1831
        %1981 = vmatpush.bf16.msra.mxu0 %v1823
        %1982 = vmatpush.bf16.msra.mxu0 %v1815
        %1983 = vmatpush.bf16.msra.mxu0 %v1807
        %1984 = vmatpush.bf16.msra.mxu0 %v1799
        %1985 = vmatpush.bf16.msra.mxu0 %v1791
        %1986 = vmatpush.bf16.msra.mxu0 %v1783
        %1987 = vmatpush.bf16.msra.mxu0 %v1775
        %1988 = vmatmul.bf16.gmra.mxu0 %v1198
        %v1989 = vpop.f32.mrf.mxu0
        %v1990 = vadd.f32 %v1977, %v1989
        %v1991 = vpop.f32.mrf.mxu0
        %1992 = vdwg.mxu0
        %1993 = vmatpush.bf16.msra.mxu0 %v1768
        %1994 = vmatpush.bf16.msra.mxu0 %v1760
        %1995 = vmatpush.bf16.msra.mxu0 %v1752
        %1996 = vmatpush.bf16.msra.mxu0 %v1744
        %1997 = vmatpush.bf16.msra.mxu0 %v1736
        %1998 = vmatpush.bf16.msra.mxu0 %v1728
        %1999 = vmatpush.bf16.msra.mxu0 %v1720
        %2000 = vmatpush.bf16.msra.mxu0 %v1712
        %2001 = vmatmul.bf16.gmra.mxu0 %v1197
        %v2002 = vpop.f32.mrf.mxu0
        %v2003 = vadd.f32 0.0, %v2002
        %v2004 = vpop.f32.mrf.mxu0
        %2005 = vdwg.mxu0
        %2006 = vmatpush.bf16.msra.mxu0 %v1832
        %2007 = vmatpush.bf16.msra.mxu0 %v1824
        %2008 = vmatpush.bf16.msra.mxu0 %v1816
        %2009 = vmatpush.bf16.msra.mxu0 %v1808
        %2010 = vmatpush.bf16.msra.mxu0 %v1800
        %2011 = vmatpush.bf16.msra.mxu0 %v1792
        %2012 = vmatpush.bf16.msra.mxu0 %v1784
        %2013 = vmatpush.bf16.msra.mxu0 %v1776
        %2014 = vmatmul.bf16.gmra.mxu0 %v1198
        %v2015 = vpop.f32.mrf.mxu0
        %v2016 = vadd.f32 %v2003, %v2015
        %v2017 = vpop.f32.mrf.mxu0
        %2018 = vdwg.mxu0
        %2019 = vmatpush.bf16.msra.mxu0 %v1769
        %2020 = vmatpush.bf16.msra.mxu0 %v1761
        %2021 = vmatpush.bf16.msra.mxu0 %v1753
        %2022 = vmatpush.bf16.msra.mxu0 %v1745
        %2023 = vmatpush.bf16.msra.mxu0 %v1737
        %2024 = vmatpush.bf16.msra.mxu0 %v1729
        %2025 = vmatpush.bf16.msra.mxu0 %v1721
        %2026 = vmatpush.bf16.msra.mxu0 %v1713
        %2027 = vmatmul.bf16.gmra.mxu0 %v1197
        %v2028 = vpop.f32.mrf.mxu0
        %v2029 = vadd.f32 0.0, %v2028
        %v2030 = vpop.f32.mrf.mxu0
        %2031 = vdwg.mxu0
        %2032 = vmatpush.bf16.msra.mxu0 %v1833
        %2033 = vmatpush.bf16.msra.mxu0 %v1825
        %2034 = vmatpush.bf16.msra.mxu0 %v1817
        %2035 = vmatpush.bf16.msra.mxu0 %v1809
        %2036 = vmatpush.bf16.msra.mxu0 %v1801
        %2037 = vmatpush.bf16.msra.mxu0 %v1793
        %2038 = vmatpush.bf16.msra.mxu0 %v1785
        %2039 = vmatpush.bf16.msra.mxu0 %v1777
        %2040 = vmatmul.bf16.gmra.mxu0 %v1198
        %v2041 = vpop.f32.mrf.mxu0
        %v2042 = vadd.f32 %v2029, %v2041
        %v2043 = vpop.f32.mrf.mxu0
        %2044 = vdwg.mxu0
        %2045 = vmatpush.bf16.msra.mxu0 %v1770
        %2046 = vmatpush.bf16.msra.mxu0 %v1762
        %2047 = vmatpush.bf16.msra.mxu0 %v1754
        %2048 = vmatpush.bf16.msra.mxu0 %v1746
        %2049 = vmatpush.bf16.msra.mxu0 %v1738
        %2050 = vmatpush.bf16.msra.mxu0 %v1730
        %2051 = vmatpush.bf16.msra.mxu0 %v1722
        %2052 = vmatpush.bf16.msra.mxu0 %v1714
        %2053 = vmatmul.bf16.gmra.mxu0 %v1197
        %v2054 = vpop.f32.mrf.mxu0
        %v2055 = vadd.f32 0.0, %v2054
        %v2056 = vpop.f32.mrf.mxu0
        %2057 = vdwg.mxu0
        %2058 = vmatpush.bf16.msra.mxu0 %v1834
        %2059 = vmatpush.bf16.msra.mxu0 %v1826
        %2060 = vmatpush.bf16.msra.mxu0 %v1818
        %2061 = vmatpush.bf16.msra.mxu0 %v1810
        %2062 = vmatpush.bf16.msra.mxu0 %v1802
        %2063 = vmatpush.bf16.msra.mxu0 %v1794
        %2064 = vmatpush.bf16.msra.mxu0 %v1786
        %2065 = vmatpush.bf16.msra.mxu0 %v1778
        %2066 = vmatmul.bf16.gmra.mxu0 %v1198
        %v2067 = vpop.f32.mrf.mxu0
        %v2068 = vadd.f32 %v2055, %v2067
        %v2069 = vpop.f32.mrf.mxu0
        %2070 = vdwg.mxu0
        %2071 = vmatpush.bf16.msra.mxu0 %v1771
        %2072 = vmatpush.bf16.msra.mxu0 %v1763
        %2073 = vmatpush.bf16.msra.mxu0 %v1755
        %2074 = vmatpush.bf16.msra.mxu0 %v1747
        %2075 = vmatpush.bf16.msra.mxu0 %v1739
        %2076 = vmatpush.bf16.msra.mxu0 %v1731
        %2077 = vmatpush.bf16.msra.mxu0 %v1723
        %2078 = vmatpush.bf16.msra.mxu0 %v1715
        %2079 = vmatmul.bf16.gmra.mxu0 %v1197
        %v2080 = vpop.f32.mrf.mxu0
        %v2081 = vadd.f32 0.0, %v2080
        %v2082 = vpop.f32.mrf.mxu0
        %2083 = vdwg.mxu0
        %2084 = vmatpush.bf16.msra.mxu0 %v1835
        %2085 = vmatpush.bf16.msra.mxu0 %v1827
        %2086 = vmatpush.bf16.msra.mxu0 %v1819
        %2087 = vmatpush.bf16.msra.mxu0 %v1811
        %2088 = vmatpush.bf16.msra.mxu0 %v1803
        %2089 = vmatpush.bf16.msra.mxu0 %v1795
        %2090 = vmatpush.bf16.msra.mxu0 %v1787
        %2091 = vmatpush.bf16.msra.mxu0 %v1779
        %2092 = vmatmul.bf16.gmra.mxu0 %v1198
        %v2093 = vpop.f32.mrf.mxu0
        %v2094 = vadd.f32 %v2081, %v2093
        %v2095 = vpop.f32.mrf.mxu0
        %2096 = vdwg.mxu0
        %2097 = vmatpush.bf16.msra.mxu0 %v1772
        %2098 = vmatpush.bf16.msra.mxu0 %v1764
        %2099 = vmatpush.bf16.msra.mxu0 %v1756
        %2100 = vmatpush.bf16.msra.mxu0 %v1748
        %2101 = vmatpush.bf16.msra.mxu0 %v1740
        %2102 = vmatpush.bf16.msra.mxu0 %v1732
        %2103 = vmatpush.bf16.msra.mxu0 %v1724
        %2104 = vmatpush.bf16.msra.mxu0 %v1716
        %2105 = vmatmul.bf16.gmra.mxu0 %v1197
        %v2106 = vpop.f32.mrf.mxu0
        %v2107 = vadd.f32 0.0, %v2106
        %v2108 = vpop.f32.mrf.mxu0
        %2109 = vdwg.mxu0
        %2110 = vmatpush.bf16.msra.mxu0 %v1836
        %2111 = vmatpush.bf16.msra.mxu0 %v1828
        %2112 = vmatpush.bf16.msra.mxu0 %v1820
        %2113 = vmatpush.bf16.msra.mxu0 %v1812
        %2114 = vmatpush.bf16.msra.mxu0 %v1804
        %2115 = vmatpush.bf16.msra.mxu0 %v1796
        %2116 = vmatpush.bf16.msra.mxu0 %v1788
        %2117 = vmatpush.bf16.msra.mxu0 %v1780
        %2118 = vmatmul.bf16.gmra.mxu0 %v1198
        %v2119 = vpop.f32.mrf.mxu0
        %v2120 = vadd.f32 %v2107, %v2119
        %v2121 = vpop.f32.mrf.mxu0
        %2122 = vdwg.mxu0
        %2123 = vmatpush.bf16.msra.mxu0 %v1773
        %2124 = vmatpush.bf16.msra.mxu0 %v1765
        %2125 = vmatpush.bf16.msra.mxu0 %v1757
        %2126 = vmatpush.bf16.msra.mxu0 %v1749
        %2127 = vmatpush.bf16.msra.mxu0 %v1741
        %2128 = vmatpush.bf16.msra.mxu0 %v1733
        %2129 = vmatpush.bf16.msra.mxu0 %v1725
        %2130 = vmatpush.bf16.msra.mxu0 %v1717
        %2131 = vmatmul.bf16.gmra.mxu0 %v1197
        %v2132 = vpop.f32.mrf.mxu0
        %v2133 = vadd.f32 0.0, %v2132
        %v2134 = vpop.f32.mrf.mxu0
        %2135 = vdwg.mxu0
        %2136 = vmatpush.bf16.msra.mxu0 %v1837
        %2137 = vmatpush.bf16.msra.mxu0 %v1829
        %2138 = vmatpush.bf16.msra.mxu0 %v1821
        %2139 = vmatpush.bf16.msra.mxu0 %v1813
        %2140 = vmatpush.bf16.msra.mxu0 %v1805
        %2141 = vmatpush.bf16.msra.mxu0 %v1797
        %2142 = vmatpush.bf16.msra.mxu0 %v1789
        %2143 = vmatpush.bf16.msra.mxu0 %v1781
        %2144 = vmatmul.bf16.gmra.mxu0 %v1198
        %v2145 = vpop.f32.mrf.mxu0
        %v2146 = vadd.f32 %v2133, %v2145
        %v2147 = vpop.f32.mrf.mxu0
        %2148 = vdwg.mxu0
        %2149 = vmatpush.bf16.msra.mxu0 %v1774
        %2150 = vmatpush.bf16.msra.mxu0 %v1766
        %2151 = vmatpush.bf16.msra.mxu0 %v1758
        %2152 = vmatpush.bf16.msra.mxu0 %v1750
        %2153 = vmatpush.bf16.msra.mxu0 %v1742
        %2154 = vmatpush.bf16.msra.mxu0 %v1734
        %2155 = vmatpush.bf16.msra.mxu0 %v1726
        %2156 = vmatpush.bf16.msra.mxu0 %v1718
        %2157 = vmatmul.bf16.gmra.mxu0 %v1197
        %v2158 = vpop.f32.mrf.mxu0
        %v2159 = vadd.f32 0.0, %v2158
        %v2160 = vpop.f32.mrf.mxu0
        %2161 = vdwg.mxu0
        %2162 = vmatpush.bf16.msra.mxu0 %v1838
        %2163 = vmatpush.bf16.msra.mxu0 %v1830
        %2164 = vmatpush.bf16.msra.mxu0 %v1822
        %2165 = vmatpush.bf16.msra.mxu0 %v1814
        %2166 = vmatpush.bf16.msra.mxu0 %v1806
        %2167 = vmatpush.bf16.msra.mxu0 %v1798
        %2168 = vmatpush.bf16.msra.mxu0 %v1790
        %2169 = vmatpush.bf16.msra.mxu0 %v1782
        %2170 = vmatmul.bf16.gmra.mxu0 %v1198
        %v2171 = vpop.f32.mrf.mxu0
        %v2172 = vadd.f32 %v2159, %v2171
        %v2173 = vpop.f32.mrf.mxu0
        %2174 = vdwg.mxu0
        %v2175 = vld [vmem:[%s8] sm:$0xff]
        %s2176 = scalar_lea.vmem %s8, 8
        %v2177 = vld [vmem:[%s2176] sm:$0xff]
        %vm2178 = vcmask 31744
        %v2180 = vsel %vm2178, %v2177, 0
        %vm2182 = vcmask 1043456
        %v2184 = vsel %vm2182, %v2042, 0
        %v2187 = vsel %vm2182, %v2068, 0
        %2189 = vmatpush.msra.mxu0 0.0
        %2190 = vmatpush.msra.mxu0 0.0
        %2191 = vmatpush.msra.mxu0 0.0
        %2192 = vmatpush.msra.mxu0 0.0
        %2193 = vmatpush.msra.mxu0 0.0
        %2194 = vmatpush.msra.mxu0 0.0
        %2195 = vmatpush.msra.mxu0 0.0
        %2196 = vmatpush.msra.mxu0 0.0
        %2197 = vmatpush.msra.mxu0 0.0
        %2198 = vmatpush.msra.mxu0 0.0
        %2199 = vmatpush.msra.mxu0 0.0
        %2200 = vmatpush.msra.mxu0 0.0
        %2201 = vmatpush.msra.mxu0 0.0
        %2202 = vmatpush.msra.mxu0 0.0
        %2203 = vmatpush.msra.mxu0 0.0
        %2204 = vmatpush.msra.mxu0 %v2184
        %2205 = vmatmul.f32.gmra.mxu0 %v2180
        %v2206 = vpop.f32.mrf.mxu0
        %v2207 = vadd.f32 0.0, %v2206
        %2208 = vdwg.mxu0
        %2209 = vmatpush.msra.mxu0 0.0
        %2210 = vmatpush.msra.mxu0 0.0
        %2211 = vmatpush.msra.mxu0 0.0
        %2212 = vmatpush.msra.mxu0 0.0
        %2213 = vmatpush.msra.mxu0 0.0
        %2214 = vmatpush.msra.mxu0 0.0
        %2215 = vmatpush.msra.mxu0 0.0
        %2216 = vmatpush.msra.mxu0 0.0
        %2217 = vmatpush.msra.mxu0 0.0
        %2218 = vmatpush.msra.mxu0 0.0
        %2219 = vmatpush.msra.mxu0 0.0
        %2220 = vmatpush.msra.mxu0 0.0
        %2221 = vmatpush.msra.mxu0 0.0
        %2222 = vmatpush.msra.mxu0 0.0
        %2223 = vmatpush.msra.mxu0 0.0
        %2224 = vmatpush.msra.mxu0 %v2187
        %2225 = vmatmul.f32.gmra.mxu0 %v2180
        %v2226 = vpop.f32.mrf.mxu0
        %v2227 = vadd.f32 0.0, %v2226
        %2228 = vdwg.mxu0
        %v2230 = vsel %vm2178, %v2175, 0
        %v2233 = vsel %vm2182, %v1990, 0
        %v2236 = vsel %vm2182, %v2016, 0
        %2238 = vmatpush.msra.mxu0 0.0
        %2239 = vmatpush.msra.mxu0 0.0
        %2240 = vmatpush.msra.mxu0 0.0
        %2241 = vmatpush.msra.mxu0 0.0
        %2242 = vmatpush.msra.mxu0 0.0
        %2243 = vmatpush.msra.mxu0 0.0
        %2244 = vmatpush.msra.mxu0 0.0
        %2245 = vmatpush.msra.mxu0 0.0
        %2246 = vmatpush.msra.mxu0 0.0
        %2247 = vmatpush.msra.mxu0 0.0
        %2248 = vmatpush.msra.mxu0 0.0
        %2249 = vmatpush.msra.mxu0 0.0
        %2250 = vmatpush.msra.mxu0 0.0
        %2251 = vmatpush.msra.mxu0 0.0
        %2252 = vmatpush.msra.mxu0 0.0
        %2253 = vmatpush.msra.mxu0 %v2233
        %2254 = vmatmul.f32.gmra.mxu0 %v2230
        %v2255 = vpop.f32.mrf.mxu0
        %v2256 = vadd.f32 %v2207, %v2255
        %2257 = vdwg.mxu0
        %2258 = vmatpush.msra.mxu0 0.0
        %2259 = vmatpush.msra.mxu0 0.0
        %2260 = vmatpush.msra.mxu0 0.0
        %2261 = vmatpush.msra.mxu0 0.0
        %2262 = vmatpush.msra.mxu0 0.0
        %2263 = vmatpush.msra.mxu0 0.0
        %2264 = vmatpush.msra.mxu0 0.0
        %2265 = vmatpush.msra.mxu0 0.0
        %2266 = vmatpush.msra.mxu0 0.0
        %2267 = vmatpush.msra.mxu0 0.0
        %2268 = vmatpush.msra.mxu0 0.0
        %2269 = vmatpush.msra.mxu0 0.0
        %2270 = vmatpush.msra.mxu0 0.0
        %2271 = vmatpush.msra.mxu0 0.0
        %2272 = vmatpush.msra.mxu0 0.0
        %2273 = vmatpush.msra.mxu0 %v2236
        %2274 = vmatmul.f32.gmra.mxu0 %v2230
        %v2275 = vpop.f32.mrf.mxu0
        %v2276 = vadd.f32 %v2227, %v2275
        %2277 = vdwg.mxu0
        %s2278 = scalar_lea.vmem %s8, 16
        %v2279 = vld [vmem:[%s2278] sm:$0xff]
        %v2281 = vsel %vm2178, %v2279, 0
        %v2284 = vsel %vm2182, %v2094, 0
        %v2287 = vsel %vm2182, %v2120, 0
        %2289 = vmatpush.msra.mxu0 0.0
        %2290 = vmatpush.msra.mxu0 0.0
        %2291 = vmatpush.msra.mxu0 0.0
        %2292 = vmatpush.msra.mxu0 0.0
        %2293 = vmatpush.msra.mxu0 0.0
        %2294 = vmatpush.msra.mxu0 0.0
        %2295 = vmatpush.msra.mxu0 0.0
        %2296 = vmatpush.msra.mxu0 0.0
        %2297 = vmatpush.msra.mxu0 0.0
        %2298 = vmatpush.msra.mxu0 0.0
        %2299 = vmatpush.msra.mxu0 0.0
        %2300 = vmatpush.msra.mxu0 0.0
        %2301 = vmatpush.msra.mxu0 0.0
        %2302 = vmatpush.msra.mxu0 0.0
        %2303 = vmatpush.msra.mxu0 0.0
        %2304 = vmatpush.msra.mxu0 %v2284
        %2305 = vmatmul.f32.gmra.mxu0 %v2281
        %v2306 = vpop.f32.mrf.mxu0
        %v2307 = vadd.f32 0.0, %v2306
        %2308 = vdwg.mxu0
        %2309 = vmatpush.msra.mxu0 0.0
        %2310 = vmatpush.msra.mxu0 0.0
        %2311 = vmatpush.msra.mxu0 0.0
        %2312 = vmatpush.msra.mxu0 0.0
        %2313 = vmatpush.msra.mxu0 0.0
        %2314 = vmatpush.msra.mxu0 0.0
        %2315 = vmatpush.msra.mxu0 0.0
        %2316 = vmatpush.msra.mxu0 0.0
        %2317 = vmatpush.msra.mxu0 0.0
        %2318 = vmatpush.msra.mxu0 0.0
        %2319 = vmatpush.msra.mxu0 0.0
        %2320 = vmatpush.msra.mxu0 0.0
        %2321 = vmatpush.msra.mxu0 0.0
        %2322 = vmatpush.msra.mxu0 0.0
        %2323 = vmatpush.msra.mxu0 0.0
        %2324 = vmatpush.msra.mxu0 %v2287
        %2325 = vmatmul.f32.gmra.mxu0 %v2281
        %v2326 = vpop.f32.mrf.mxu0
        %v2327 = vadd.f32 0.0, %v2326
        %2328 = vdwg.mxu0
        %v2329 = vadd.f32 %v2256, %v2307
        %v2330 = vadd.f32 %v2276, %v2327
        %s2331 = scalar_lea.vmem %s8, 24
        %v2332 = vld [vmem:[%s2331] sm:$0xff]
        %v2334 = vsel %vm2178, %v2332, 0
        %v2337 = vsel %vm2182, %v2146, 0
        %v2340 = vsel %vm2182, %v2172, 0
        %2342 = vmatpush.msra.mxu0 0.0
        %2343 = vmatpush.msra.mxu0 0.0
        %2344 = vmatpush.msra.mxu0 0.0
        %2345 = vmatpush.msra.mxu0 0.0
        %2346 = vmatpush.msra.mxu0 0.0
        %2347 = vmatpush.msra.mxu0 0.0
        %2348 = vmatpush.msra.mxu0 0.0
        %2349 = vmatpush.msra.mxu0 0.0
        %2350 = vmatpush.msra.mxu0 0.0
        %2351 = vmatpush.msra.mxu0 0.0
        %2352 = vmatpush.msra.mxu0 0.0
        %2353 = vmatpush.msra.mxu0 0.0
        %2354 = vmatpush.msra.mxu0 0.0
        %2355 = vmatpush.msra.mxu0 0.0
        %2356 = vmatpush.msra.mxu0 0.0
        %2357 = vmatpush.msra.mxu0 %v2337
        %2358 = vmatmul.f32.gmra.mxu0 %v2334
        %v2359 = vpop.f32.mrf.mxu0
        %v2360 = vadd.f32 0.0, %v2359
        %2361 = vdwg.mxu0
        %2362 = vmatpush.msra.mxu0 0.0
        %2363 = vmatpush.msra.mxu0 0.0
        %2364 = vmatpush.msra.mxu0 0.0
        %2365 = vmatpush.msra.mxu0 0.0
        %2366 = vmatpush.msra.mxu0 0.0
        %2367 = vmatpush.msra.mxu0 0.0
        %2368 = vmatpush.msra.mxu0 0.0
        %2369 = vmatpush.msra.mxu0 0.0
        %2370 = vmatpush.msra.mxu0 0.0
        %2371 = vmatpush.msra.mxu0 0.0
        %2372 = vmatpush.msra.mxu0 0.0
        %2373 = vmatpush.msra.mxu0 0.0
        %2374 = vmatpush.msra.mxu0 0.0
        %2375 = vmatpush.msra.mxu0 0.0
        %2376 = vmatpush.msra.mxu0 0.0
        %2377 = vmatpush.msra.mxu0 %v2340
        %2378 = vmatmul.f32.gmra.mxu0 %v2334
        %v2379 = vpop.f32.mrf.mxu0
        %v2380 = vadd.f32 0.0, %v2379
        %2381 = vdwg.mxu0
        %v2382 = vadd.f32 %v2329, %v2360
        %v2383 = vadd.f32 %v2330, %v2380
        %v2384 = vld [vmem:[%s7] sm:$0x3]
        %v2386 = vperm.slane %v2384, 0
        %v2387 = vperm.slane %v2384, 1
        %v2390 = vadd.f32 %v2382, %v2386
        %v2391 = vadd.f32 %v2383, %v2387
        %vm2392 = vcmp.ge.f32.partialorder %v2390, 0.0
        %vm2393 = vcmp.ge.f32.partialorder %v2391, 0.0
        %v2394 = vmul.f32 %v2390, 0.01
        %v2395 = vmul.f32 %v2391, 0.01
        %v2396 = vsel %vm2392, %v2390, %v2394
        %v2397 = vsel %vm2393, %v2391, %v2395
        %v2398 = vpack.c.bf16 %v2396, %v2396
        %v2399 = vpack.c.bf16 %v2397, %v2397
        %v2400 = vld [vmem:[#allocation6] sm:$0xff]
        %v2401 = vld [vmem:[#allocation6 + $0x8] sm:$0xff]
        %v2402 = vld [vmem:[#allocation6 + $0x10] sm:$0xff]
        %v2403 = vld [vmem:[#allocation6 + $0x18] sm:$0xff]
        %v2404 = vld [vmem:[#allocation6 + $0x20] sm:$0xff]
        %v2405 = vld [vmem:[#allocation6 + $0x28] sm:$0xff]
        %v2406 = vld [vmem:[#allocation6 + $0x30] sm:$0xff]
        %v2407 = vld [vmem:[#allocation6 + $0x38] sm:$0xff]
        %v2408 = vld [vmem:[#allocation6 + $0x40] sm:$0xff]
        %v2409 = vld [vmem:[#allocation6 + $0x48] sm:$0xff]
        %v2410 = vld [vmem:[#allocation6 + $0x50] sm:$0xff]
        %v2411 = vld [vmem:[#allocation6 + $0x58] sm:$0xff]
        %v2412 = vld [vmem:[#allocation6 + $0x60] sm:$0xff]
        %v2413 = vld [vmem:[#allocation6 + $0x68] sm:$0xff]
        %v2414 = vld [vmem:[#allocation6 + $0x70] sm:$0xff]
        %v2415 = vld [vmem:[#allocation6 + $0x78] sm:$0xff]
        %v2416 = vld [vmem:[#allocation6 + $0x80] sm:$0xff]
        %v2417 = vld [vmem:[#allocation6 + $0x88] sm:$0xff]
        %v2418 = vld [vmem:[#allocation6 + $0x90] sm:$0xff]
        %v2419 = vld [vmem:[#allocation6 + $0x98] sm:$0xff]
        %v2420 = vld [vmem:[#allocation6 + $0xa0] sm:$0xff]
        %v2421 = vld [vmem:[#allocation6 + $0xa8] sm:$0xff]
        %v2422 = vld [vmem:[#allocation6 + $0xb0] sm:$0xff]
        %v2423 = vld [vmem:[#allocation6 + $0xb8] sm:$0xff]
        %v2424 = vld [vmem:[#allocation6 + $0xc0] sm:$0xff]
        %v2425 = vld [vmem:[#allocation6 + $0xc8] sm:$0xff]
        %v2426 = vld [vmem:[#allocation6 + $0xd0] sm:$0xff]
        %v2427 = vld [vmem:[#allocation6 + $0xd8] sm:$0xff]
        %v2428 = vld [vmem:[#allocation6 + $0xe0] sm:$0xff]
        %v2429 = vld [vmem:[#allocation6 + $0xe8] sm:$0xff]
        %v2430 = vld [vmem:[#allocation6 + $0xf0] sm:$0xff]
        %v2431 = vld [vmem:[#allocation6 + $0xf8] sm:$0xff]
        %v2432 = vld [vmem:[#allocation6 + $0x100] sm:$0xff]
        %v2433 = vld [vmem:[#allocation6 + $0x108] sm:$0xff]
        %v2434 = vld [vmem:[#allocation6 + $0x110] sm:$0xff]
        %v2435 = vld [vmem:[#allocation6 + $0x118] sm:$0xff]
        %v2436 = vld [vmem:[#allocation6 + $0x120] sm:$0xff]
        %v2437 = vld [vmem:[#allocation6 + $0x128] sm:$0xff]
        %v2438 = vld [vmem:[#allocation6 + $0x130] sm:$0xff]
        %v2439 = vld [vmem:[#allocation6 + $0x138] sm:$0xff]
        %v2440 = vld [vmem:[#allocation6 + $0x140] sm:$0xff]
        %v2441 = vld [vmem:[#allocation6 + $0x148] sm:$0xff]
        %v2442 = vld [vmem:[#allocation6 + $0x150] sm:$0xff]
        %v2443 = vld [vmem:[#allocation6 + $0x158] sm:$0xff]
        %v2444 = vld [vmem:[#allocation6 + $0x160] sm:$0xff]
        %v2445 = vld [vmem:[#allocation6 + $0x168] sm:$0xff]
        %v2446 = vld [vmem:[#allocation6 + $0x170] sm:$0xff]
        %v2447 = vld [vmem:[#allocation6 + $0x178] sm:$0xff]
        %v2448 = vld [vmem:[#allocation6 + $0x180] sm:$0xff]
        %v2449 = vld [vmem:[#allocation6 + $0x188] sm:$0xff]
        %v2450 = vld [vmem:[#allocation6 + $0x190] sm:$0xff]
        %v2451 = vld [vmem:[#allocation6 + $0x198] sm:$0xff]
        %v2452 = vld [vmem:[#allocation6 + $0x1a0] sm:$0xff]
        %v2453 = vld [vmem:[#allocation6 + $0x1a8] sm:$0xff]
        %v2454 = vld [vmem:[#allocation6 + $0x1b0] sm:$0xff]
        %v2455 = vld [vmem:[#allocation6 + $0x1b8] sm:$0xff]
        %v2456 = vld [vmem:[#allocation6 + $0x1c0] sm:$0xff]
        %v2457 = vld [vmem:[#allocation6 + $0x1c8] sm:$0xff]
        %v2458 = vld [vmem:[#allocation6 + $0x1d0] sm:$0xff]
        %v2459 = vld [vmem:[#allocation6 + $0x1d8] sm:$0xff]
        %v2460 = vld [vmem:[#allocation6 + $0x1e0] sm:$0xff]
        %v2461 = vld [vmem:[#allocation6 + $0x1e8] sm:$0xff]
        %v2462 = vld [vmem:[#allocation6 + $0x1f0] sm:$0xff]
        %v2463 = vld [vmem:[#allocation6 + $0x1f8] sm:$0xff]
        %v2464 = vld [vmem:[#allocation6 + $0x200] sm:$0xff]
        %v2465 = vld [vmem:[#allocation6 + $0x208] sm:$0xff]
        %v2466 = vld [vmem:[#allocation6 + $0x210] sm:$0xff]
        %v2467 = vld [vmem:[#allocation6 + $0x218] sm:$0xff]
        %v2468 = vld [vmem:[#allocation6 + $0x220] sm:$0xff]
        %v2469 = vld [vmem:[#allocation6 + $0x228] sm:$0xff]
        %v2470 = vld [vmem:[#allocation6 + $0x230] sm:$0xff]
        %v2471 = vld [vmem:[#allocation6 + $0x238] sm:$0xff]
        %v2472 = vld [vmem:[#allocation6 + $0x240] sm:$0xff]
        %v2473 = vld [vmem:[#allocation6 + $0x248] sm:$0xff]
        %v2474 = vld [vmem:[#allocation6 + $0x250] sm:$0xff]
        %v2475 = vld [vmem:[#allocation6 + $0x258] sm:$0xff]
        %v2476 = vld [vmem:[#allocation6 + $0x260] sm:$0xff]
        %v2477 = vld [vmem:[#allocation6 + $0x268] sm:$0xff]
        %v2478 = vld [vmem:[#allocation6 + $0x270] sm:$0xff]
        %v2479 = vld [vmem:[#allocation6 + $0x278] sm:$0xff]
        %v2480 = vld [vmem:[#allocation6 + $0x280] sm:$0xff]
        %v2481 = vld [vmem:[#allocation6 + $0x288] sm:$0xff]
        %v2482 = vld [vmem:[#allocation6 + $0x290] sm:$0xff]
        %v2483 = vld [vmem:[#allocation6 + $0x298] sm:$0xff]
        %v2484 = vld [vmem:[#allocation6 + $0x2a0] sm:$0xff]
        %v2485 = vld [vmem:[#allocation6 + $0x2a8] sm:$0xff]
        %v2486 = vld [vmem:[#allocation6 + $0x2b0] sm:$0xff]
        %v2487 = vld [vmem:[#allocation6 + $0x2b8] sm:$0xff]
        %v2488 = vld [vmem:[#allocation6 + $0x2c0] sm:$0xff]
        %v2489 = vld [vmem:[#allocation6 + $0x2c8] sm:$0xff]
        %v2490 = vld [vmem:[#allocation6 + $0x2d0] sm:$0xff]
        %v2491 = vld [vmem:[#allocation6 + $0x2d8] sm:$0xff]
        %v2492 = vld [vmem:[#allocation6 + $0x2e0] sm:$0xff]
        %v2493 = vld [vmem:[#allocation6 + $0x2e8] sm:$0xff]
        %v2494 = vld [vmem:[#allocation6 + $0x2f0] sm:$0xff]
        %v2495 = vld [vmem:[#allocation6 + $0x2f8] sm:$0xff]
        %v2496 = vld [vmem:[#allocation6 + $0x300] sm:$0xff]
        %v2497 = vld [vmem:[#allocation6 + $0x308] sm:$0xff]
        %v2498 = vld [vmem:[#allocation6 + $0x310] sm:$0xff]
        %v2499 = vld [vmem:[#allocation6 + $0x318] sm:$0xff]
        %v2500 = vld [vmem:[#allocation6 + $0x320] sm:$0xff]
        %v2501 = vld [vmem:[#allocation6 + $0x328] sm:$0xff]
        %v2502 = vld [vmem:[#allocation6 + $0x330] sm:$0xff]
        %v2503 = vld [vmem:[#allocation6 + $0x338] sm:$0xff]
        %v2504 = vld [vmem:[#allocation6 + $0x340] sm:$0xff]
        %v2505 = vld [vmem:[#allocation6 + $0x348] sm:$0xff]
        %v2506 = vld [vmem:[#allocation6 + $0x350] sm:$0xff]
        %v2507 = vld [vmem:[#allocation6 + $0x358] sm:$0xff]
        %v2508 = vld [vmem:[#allocation6 + $0x360] sm:$0xff]
        %v2509 = vld [vmem:[#allocation6 + $0x368] sm:$0xff]
        %v2510 = vld [vmem:[#allocation6 + $0x370] sm:$0xff]
        %v2511 = vld [vmem:[#allocation6 + $0x378] sm:$0xff]
        %v2512 = vld [vmem:[#allocation6 + $0x380] sm:$0xff]
        %v2513 = vld [vmem:[#allocation6 + $0x388] sm:$0xff]
        %v2514 = vld [vmem:[#allocation6 + $0x390] sm:$0xff]
        %v2515 = vld [vmem:[#allocation6 + $0x398] sm:$0xff]
        %v2516 = vld [vmem:[#allocation6 + $0x3a0] sm:$0xff]
        %v2517 = vld [vmem:[#allocation6 + $0x3a8] sm:$0xff]
        %v2518 = vld [vmem:[#allocation6 + $0x3b0] sm:$0xff]
        %v2519 = vld [vmem:[#allocation6 + $0x3b8] sm:$0xff]
        %v2520 = vld [vmem:[#allocation6 + $0x3c0] sm:$0xff]
        %v2521 = vld [vmem:[#allocation6 + $0x3c8] sm:$0xff]
        %v2522 = vld [vmem:[#allocation6 + $0x3d0] sm:$0xff]
        %v2523 = vld [vmem:[#allocation6 + $0x3d8] sm:$0xff]
        %v2524 = vld [vmem:[#allocation6 + $0x3e0] sm:$0xff]
        %v2525 = vld [vmem:[#allocation6 + $0x3e8] sm:$0xff]
        %v2526 = vld [vmem:[#allocation6 + $0x3f0] sm:$0xff]
        %v2527 = vld [vmem:[#allocation6 + $0x3f8] sm:$0xff]
        %v2656 = vunpack.c.l.b16 %v2400
        %v2657 = vunpack.c.h.b16 %v2400
        %v2658 = vunpack.c.l.b16 %v2401
        %v2659 = vunpack.c.h.b16 %v2401
        %v2660 = vunpack.c.l.b16 %v2402
        %v2661 = vunpack.c.h.b16 %v2402
        %v2662 = vunpack.c.l.b16 %v2403
        %v2663 = vunpack.c.h.b16 %v2403
        %v2664 = vunpack.c.l.b16 %v2404
        %v2665 = vunpack.c.h.b16 %v2404
        %v2666 = vunpack.c.l.b16 %v2405
        %v2667 = vunpack.c.h.b16 %v2405
        %v2668 = vunpack.c.l.b16 %v2406
        %v2669 = vunpack.c.h.b16 %v2406
        %v2670 = vunpack.c.l.b16 %v2407
        %v2671 = vunpack.c.h.b16 %v2407
        %v2672 = vunpack.c.l.b16 %v2408
        %v2673 = vunpack.c.h.b16 %v2408
        %v2674 = vunpack.c.l.b16 %v2409
        %v2675 = vunpack.c.h.b16 %v2409
        %v2676 = vunpack.c.l.b16 %v2410
        %v2677 = vunpack.c.h.b16 %v2410
        %v2678 = vunpack.c.l.b16 %v2411
        %v2679 = vunpack.c.h.b16 %v2411
        %v2680 = vunpack.c.l.b16 %v2412
        %v2681 = vunpack.c.h.b16 %v2412
        %v2682 = vunpack.c.l.b16 %v2413
        %v2683 = vunpack.c.h.b16 %v2413
        %v2684 = vunpack.c.l.b16 %v2414
        %v2685 = vunpack.c.h.b16 %v2414
        %v2686 = vunpack.c.l.b16 %v2415
        %v2687 = vunpack.c.h.b16 %v2415
        %v2688 = vunpack.c.l.b16 %v2416
        %v2689 = vunpack.c.h.b16 %v2416
        %v2690 = vunpack.c.l.b16 %v2417
        %v2691 = vunpack.c.h.b16 %v2417
        %v2692 = vunpack.c.l.b16 %v2418
        %v2693 = vunpack.c.h.b16 %v2418
        %v2694 = vunpack.c.l.b16 %v2419
        %v2695 = vunpack.c.h.b16 %v2419
        %v2696 = vunpack.c.l.b16 %v2420
        %v2697 = vunpack.c.h.b16 %v2420
        %v2698 = vunpack.c.l.b16 %v2421
        %v2699 = vunpack.c.h.b16 %v2421
        %v2700 = vunpack.c.l.b16 %v2422
        %v2701 = vunpack.c.h.b16 %v2422
        %v2702 = vunpack.c.l.b16 %v2423
        %v2703 = vunpack.c.h.b16 %v2423
        %v2704 = vunpack.c.l.b16 %v2424
        %v2705 = vunpack.c.h.b16 %v2424
        %v2706 = vunpack.c.l.b16 %v2425
        %v2707 = vunpack.c.h.b16 %v2425
        %v2708 = vunpack.c.l.b16 %v2426
        %v2709 = vunpack.c.h.b16 %v2426
        %v2710 = vunpack.c.l.b16 %v2427
        %v2711 = vunpack.c.h.b16 %v2427
        %v2712 = vunpack.c.l.b16 %v2428
        %v2713 = vunpack.c.h.b16 %v2428
        %v2714 = vunpack.c.l.b16 %v2429
        %v2715 = vunpack.c.h.b16 %v2429
        %v2716 = vunpack.c.l.b16 %v2430
        %v2717 = vunpack.c.h.b16 %v2430
        %v2718 = vunpack.c.l.b16 %v2431
        %v2719 = vunpack.c.h.b16 %v2431
        %v2720 = vunpack.c.l.b16 %v2432
        %v2721 = vunpack.c.h.b16 %v2432
        %v2722 = vunpack.c.l.b16 %v2433
        %v2723 = vunpack.c.h.b16 %v2433
        %v2724 = vunpack.c.l.b16 %v2434
        %v2725 = vunpack.c.h.b16 %v2434
        %v2726 = vunpack.c.l.b16 %v2435
        %v2727 = vunpack.c.h.b16 %v2435
        %v2728 = vunpack.c.l.b16 %v2436
        %v2729 = vunpack.c.h.b16 %v2436
        %v2730 = vunpack.c.l.b16 %v2437
        %v2731 = vunpack.c.h.b16 %v2437
        %v2732 = vunpack.c.l.b16 %v2438
        %v2733 = vunpack.c.h.b16 %v2438
        %v2734 = vunpack.c.l.b16 %v2439
        %v2735 = vunpack.c.h.b16 %v2439
        %v2736 = vunpack.c.l.b16 %v2440
        %v2737 = vunpack.c.h.b16 %v2440
        %v2738 = vunpack.c.l.b16 %v2441
        %v2739 = vunpack.c.h.b16 %v2441
        %v2740 = vunpack.c.l.b16 %v2442
        %v2741 = vunpack.c.h.b16 %v2442
        %v2742 = vunpack.c.l.b16 %v2443
        %v2743 = vunpack.c.h.b16 %v2443
        %v2744 = vunpack.c.l.b16 %v2444
        %v2745 = vunpack.c.h.b16 %v2444
        %v2746 = vunpack.c.l.b16 %v2445
        %v2747 = vunpack.c.h.b16 %v2445
        %v2748 = vunpack.c.l.b16 %v2446
        %v2749 = vunpack.c.h.b16 %v2446
        %v2750 = vunpack.c.l.b16 %v2447
        %v2751 = vunpack.c.h.b16 %v2447
        %v2752 = vunpack.c.l.b16 %v2448
        %v2753 = vunpack.c.h.b16 %v2448
        %v2754 = vunpack.c.l.b16 %v2449
        %v2755 = vunpack.c.h.b16 %v2449
        %v2756 = vunpack.c.l.b16 %v2450
        %v2757 = vunpack.c.h.b16 %v2450
        %v2758 = vunpack.c.l.b16 %v2451
        %v2759 = vunpack.c.h.b16 %v2451
        %v2760 = vunpack.c.l.b16 %v2452
        %v2761 = vunpack.c.h.b16 %v2452
        %v2762 = vunpack.c.l.b16 %v2453
        %v2763 = vunpack.c.h.b16 %v2453
        %v2764 = vunpack.c.l.b16 %v2454
        %v2765 = vunpack.c.h.b16 %v2454
        %v2766 = vunpack.c.l.b16 %v2455
        %v2767 = vunpack.c.h.b16 %v2455
        %v2768 = vunpack.c.l.b16 %v2456
        %v2769 = vunpack.c.h.b16 %v2456
        %v2770 = vunpack.c.l.b16 %v2457
        %v2771 = vunpack.c.h.b16 %v2457
        %v2772 = vunpack.c.l.b16 %v2458
        %v2773 = vunpack.c.h.b16 %v2458
        %v2774 = vunpack.c.l.b16 %v2459
        %v2775 = vunpack.c.h.b16 %v2459
        %v2776 = vunpack.c.l.b16 %v2460
        %v2777 = vunpack.c.h.b16 %v2460
        %v2778 = vunpack.c.l.b16 %v2461
        %v2779 = vunpack.c.h.b16 %v2461
        %v2780 = vunpack.c.l.b16 %v2462
        %v2781 = vunpack.c.h.b16 %v2462
        %v2782 = vunpack.c.l.b16 %v2463
        %v2783 = vunpack.c.h.b16 %v2463
        %v2784 = vunpack.c.l.b16 %v2464
        %v2785 = vunpack.c.h.b16 %v2464
        %v2786 = vunpack.c.l.b16 %v2465
        %v2787 = vunpack.c.h.b16 %v2465
        %v2788 = vunpack.c.l.b16 %v2466
        %v2789 = vunpack.c.h.b16 %v2466
        %v2790 = vunpack.c.l.b16 %v2467
        %v2791 = vunpack.c.h.b16 %v2467
        %v2792 = vunpack.c.l.b16 %v2468
        %v2793 = vunpack.c.h.b16 %v2468
        %v2794 = vunpack.c.l.b16 %v2469
        %v2795 = vunpack.c.h.b16 %v2469
        %v2796 = vunpack.c.l.b16 %v2470
        %v2797 = vunpack.c.h.b16 %v2470
        %v2798 = vunpack.c.l.b16 %v2471
        %v2799 = vunpack.c.h.b16 %v2471
        %v2800 = vunpack.c.l.b16 %v2472
        %v2801 = vunpack.c.h.b16 %v2472
        %v2802 = vunpack.c.l.b16 %v2473
        %v2803 = vunpack.c.h.b16 %v2473
        %v2804 = vunpack.c.l.b16 %v2474
        %v2805 = vunpack.c.h.b16 %v2474
        %v2806 = vunpack.c.l.b16 %v2475
        %v2807 = vunpack.c.h.b16 %v2475
        %v2808 = vunpack.c.l.b16 %v2476
        %v2809 = vunpack.c.h.b16 %v2476
        %v2810 = vunpack.c.l.b16 %v2477
        %v2811 = vunpack.c.h.b16 %v2477
        %v2812 = vunpack.c.l.b16 %v2478
        %v2813 = vunpack.c.h.b16 %v2478
        %v2814 = vunpack.c.l.b16 %v2479
        %v2815 = vunpack.c.h.b16 %v2479
        %v2816 = vunpack.c.l.b16 %v2480
        %v2817 = vunpack.c.h.b16 %v2480
        %v2818 = vunpack.c.l.b16 %v2481
        %v2819 = vunpack.c.h.b16 %v2481
        %v2820 = vunpack.c.l.b16 %v2482
        %v2821 = vunpack.c.h.b16 %v2482
        %v2822 = vunpack.c.l.b16 %v2483
        %v2823 = vunpack.c.h.b16 %v2483
        %v2824 = vunpack.c.l.b16 %v2484
        %v2825 = vunpack.c.h.b16 %v2484
        %v2826 = vunpack.c.l.b16 %v2485
        %v2827 = vunpack.c.h.b16 %v2485
        %v2828 = vunpack.c.l.b16 %v2486
        %v2829 = vunpack.c.h.b16 %v2486
        %v2830 = vunpack.c.l.b16 %v2487
        %v2831 = vunpack.c.h.b16 %v2487
        %v2832 = vunpack.c.l.b16 %v2488
        %v2833 = vunpack.c.h.b16 %v2488
        %v2834 = vunpack.c.l.b16 %v2489
        %v2835 = vunpack.c.h.b16 %v2489
        %v2836 = vunpack.c.l.b16 %v2490
        %v2837 = vunpack.c.h.b16 %v2490
        %v2838 = vunpack.c.l.b16 %v2491
        %v2839 = vunpack.c.h.b16 %v2491
        %v2840 = vunpack.c.l.b16 %v2492
        %v2841 = vunpack.c.h.b16 %v2492
        %v2842 = vunpack.c.l.b16 %v2493
        %v2843 = vunpack.c.h.b16 %v2493
        %v2844 = vunpack.c.l.b16 %v2494
        %v2845 = vunpack.c.h.b16 %v2494
        %v2846 = vunpack.c.l.b16 %v2495
        %v2847 = vunpack.c.h.b16 %v2495
        %v2848 = vunpack.c.l.b16 %v2496
        %v2849 = vunpack.c.h.b16 %v2496
        %v2850 = vunpack.c.l.b16 %v2497
        %v2851 = vunpack.c.h.b16 %v2497
        %v2852 = vunpack.c.l.b16 %v2498
        %v2853 = vunpack.c.h.b16 %v2498
        %v2854 = vunpack.c.l.b16 %v2499
        %v2855 = vunpack.c.h.b16 %v2499
        %v2856 = vunpack.c.l.b16 %v2500
        %v2857 = vunpack.c.h.b16 %v2500
        %v2858 = vunpack.c.l.b16 %v2501
        %v2859 = vunpack.c.h.b16 %v2501
        %v2860 = vunpack.c.l.b16 %v2502
        %v2861 = vunpack.c.h.b16 %v2502
        %v2862 = vunpack.c.l.b16 %v2503
        %v2863 = vunpack.c.h.b16 %v2503
        %v2864 = vunpack.c.l.b16 %v2504
        %v2865 = vunpack.c.h.b16 %v2504
        %v2866 = vunpack.c.l.b16 %v2505
        %v2867 = vunpack.c.h.b16 %v2505
        %v2868 = vunpack.c.l.b16 %v2506
        %v2869 = vunpack.c.h.b16 %v2506
        %v2870 = vunpack.c.l.b16 %v2507
        %v2871 = vunpack.c.h.b16 %v2507
        %v2872 = vunpack.c.l.b16 %v2508
        %v2873 = vunpack.c.h.b16 %v2508
        %v2874 = vunpack.c.l.b16 %v2509
        %v2875 = vunpack.c.h.b16 %v2509
        %v2876 = vunpack.c.l.b16 %v2510
        %v2877 = vunpack.c.h.b16 %v2510
        %v2878 = vunpack.c.l.b16 %v2511
        %v2879 = vunpack.c.h.b16 %v2511
        %v2880 = vunpack.c.l.b16 %v2512
        %v2881 = vunpack.c.h.b16 %v2512
        %v2882 = vunpack.c.l.b16 %v2513
        %v2883 = vunpack.c.h.b16 %v2513
        %v2884 = vunpack.c.l.b16 %v2514
        %v2885 = vunpack.c.h.b16 %v2514
        %v2886 = vunpack.c.l.b16 %v2515
        %v2887 = vunpack.c.h.b16 %v2515
        %v2888 = vunpack.c.l.b16 %v2516
        %v2889 = vunpack.c.h.b16 %v2516
        %v2890 = vunpack.c.l.b16 %v2517
        %v2891 = vunpack.c.h.b16 %v2517
        %v2892 = vunpack.c.l.b16 %v2518
        %v2893 = vunpack.c.h.b16 %v2518
        %v2894 = vunpack.c.l.b16 %v2519
        %v2895 = vunpack.c.h.b16 %v2519
        %v2896 = vunpack.c.l.b16 %v2520
        %v2897 = vunpack.c.h.b16 %v2520
        %v2898 = vunpack.c.l.b16 %v2521
        %v2899 = vunpack.c.h.b16 %v2521
        %v2900 = vunpack.c.l.b16 %v2522
        %v2901 = vunpack.c.h.b16 %v2522
        %v2902 = vunpack.c.l.b16 %v2523
        %v2903 = vunpack.c.h.b16 %v2523
        %v2904 = vunpack.c.l.b16 %v2524
        %v2905 = vunpack.c.h.b16 %v2524
        %v2906 = vunpack.c.l.b16 %v2525
        %v2907 = vunpack.c.h.b16 %v2525
        %v2908 = vunpack.c.l.b16 %v2526
        %v2909 = vunpack.c.h.b16 %v2526
        %v2910 = vunpack.c.l.b16 %v2527
        %v2911 = vunpack.c.h.b16 %v2527
        %v2912 = vpack.c.b16 %v2664, %v2656
        %v2913 = vpack.c.b16 %v2665, %v2657
        %v2914 = vpack.c.b16 %v2666, %v2658
        %v2915 = vpack.c.b16 %v2667, %v2659
        %v2916 = vpack.c.b16 %v2668, %v2660
        %v2917 = vpack.c.b16 %v2669, %v2661
        %v2918 = vpack.c.b16 %v2670, %v2662
        %v2919 = vpack.c.b16 %v2671, %v2663
        %v2920 = vpack.c.b16 %v2680, %v2672
        %v2921 = vpack.c.b16 %v2681, %v2673
        %v2922 = vpack.c.b16 %v2682, %v2674
        %v2923 = vpack.c.b16 %v2683, %v2675
        %v2924 = vpack.c.b16 %v2684, %v2676
        %v2925 = vpack.c.b16 %v2685, %v2677
        %v2926 = vpack.c.b16 %v2686, %v2678
        %v2927 = vpack.c.b16 %v2687, %v2679
        %v2928 = vpack.c.b16 %v2696, %v2688
        %v2929 = vpack.c.b16 %v2697, %v2689
        %v2930 = vpack.c.b16 %v2698, %v2690
        %v2931 = vpack.c.b16 %v2699, %v2691
        %v2932 = vpack.c.b16 %v2700, %v2692
        %v2933 = vpack.c.b16 %v2701, %v2693
        %v2934 = vpack.c.b16 %v2702, %v2694
        %v2935 = vpack.c.b16 %v2703, %v2695
        %v2936 = vpack.c.b16 %v2712, %v2704
        %v2937 = vpack.c.b16 %v2713, %v2705
        %v2938 = vpack.c.b16 %v2714, %v2706
        %v2939 = vpack.c.b16 %v2715, %v2707
        %v2940 = vpack.c.b16 %v2716, %v2708
        %v2941 = vpack.c.b16 %v2717, %v2709
        %v2942 = vpack.c.b16 %v2718, %v2710
        %v2943 = vpack.c.b16 %v2719, %v2711
        %v2944 = vpack.c.b16 %v2728, %v2720
        %v2945 = vpack.c.b16 %v2729, %v2721
        %v2946 = vpack.c.b16 %v2730, %v2722
        %v2947 = vpack.c.b16 %v2731, %v2723
        %v2948 = vpack.c.b16 %v2732, %v2724
        %v2949 = vpack.c.b16 %v2733, %v2725
        %v2950 = vpack.c.b16 %v2734, %v2726
        %v2951 = vpack.c.b16 %v2735, %v2727
        %v2952 = vpack.c.b16 %v2744, %v2736
        %v2953 = vpack.c.b16 %v2745, %v2737
        %v2954 = vpack.c.b16 %v2746, %v2738
        %v2955 = vpack.c.b16 %v2747, %v2739
        %v2956 = vpack.c.b16 %v2748, %v2740
        %v2957 = vpack.c.b16 %v2749, %v2741
        %v2958 = vpack.c.b16 %v2750, %v2742
        %v2959 = vpack.c.b16 %v2751, %v2743
        %v2960 = vpack.c.b16 %v2760, %v2752
        %v2961 = vpack.c.b16 %v2761, %v2753
        %v2962 = vpack.c.b16 %v2762, %v2754
        %v2963 = vpack.c.b16 %v2763, %v2755
        %v2964 = vpack.c.b16 %v2764, %v2756
        %v2965 = vpack.c.b16 %v2765, %v2757
        %v2966 = vpack.c.b16 %v2766, %v2758
        %v2967 = vpack.c.b16 %v2767, %v2759
        %v2968 = vpack.c.b16 %v2776, %v2768
        %v2969 = vpack.c.b16 %v2777, %v2769
        %v2970 = vpack.c.b16 %v2778, %v2770
        %v2971 = vpack.c.b16 %v2779, %v2771
        %v2972 = vpack.c.b16 %v2780, %v2772
        %v2973 = vpack.c.b16 %v2781, %v2773
        %v2974 = vpack.c.b16 %v2782, %v2774
        %v2975 = vpack.c.b16 %v2783, %v2775
        %v2976 = vpack.c.b16 %v2792, %v2784
        %v2977 = vpack.c.b16 %v2793, %v2785
        %v2978 = vpack.c.b16 %v2794, %v2786
        %v2979 = vpack.c.b16 %v2795, %v2787
        %v2980 = vpack.c.b16 %v2796, %v2788
        %v2981 = vpack.c.b16 %v2797, %v2789
        %v2982 = vpack.c.b16 %v2798, %v2790
        %v2983 = vpack.c.b16 %v2799, %v2791
        %v2984 = vpack.c.b16 %v2808, %v2800
        %v2985 = vpack.c.b16 %v2809, %v2801
        %v2986 = vpack.c.b16 %v2810, %v2802
        %v2987 = vpack.c.b16 %v2811, %v2803
        %v2988 = vpack.c.b16 %v2812, %v2804
        %v2989 = vpack.c.b16 %v2813, %v2805
        %v2990 = vpack.c.b16 %v2814, %v2806
        %v2991 = vpack.c.b16 %v2815, %v2807
        %v2992 = vpack.c.b16 %v2824, %v2816
        %v2993 = vpack.c.b16 %v2825, %v2817
        %v2994 = vpack.c.b16 %v2826, %v2818
        %v2995 = vpack.c.b16 %v2827, %v2819
        %v2996 = vpack.c.b16 %v2828, %v2820
        %v2997 = vpack.c.b16 %v2829, %v2821
        %v2998 = vpack.c.b16 %v2830, %v2822
        %v2999 = vpack.c.b16 %v2831, %v2823
        %v3000 = vpack.c.b16 %v2840, %v2832
        %v3001 = vpack.c.b16 %v2841, %v2833
        %v3002 = vpack.c.b16 %v2842, %v2834
        %v3003 = vpack.c.b16 %v2843, %v2835
        %v3004 = vpack.c.b16 %v2844, %v2836
        %v3005 = vpack.c.b16 %v2845, %v2837
        %v3006 = vpack.c.b16 %v2846, %v2838
        %v3007 = vpack.c.b16 %v2847, %v2839
        %v3008 = vpack.c.b16 %v2856, %v2848
        %v3009 = vpack.c.b16 %v2857, %v2849
        %v3010 = vpack.c.b16 %v2858, %v2850
        %v3011 = vpack.c.b16 %v2859, %v2851
        %v3012 = vpack.c.b16 %v2860, %v2852
        %v3013 = vpack.c.b16 %v2861, %v2853
        %v3014 = vpack.c.b16 %v2862, %v2854
        %v3015 = vpack.c.b16 %v2863, %v2855
        %v3016 = vpack.c.b16 %v2872, %v2864
        %v3017 = vpack.c.b16 %v2873, %v2865
        %v3018 = vpack.c.b16 %v2874, %v2866
        %v3019 = vpack.c.b16 %v2875, %v2867
        %v3020 = vpack.c.b16 %v2876, %v2868
        %v3021 = vpack.c.b16 %v2877, %v2869
        %v3022 = vpack.c.b16 %v2878, %v2870
        %v3023 = vpack.c.b16 %v2879, %v2871
        %v3024 = vpack.c.b16 %v2888, %v2880
        %v3025 = vpack.c.b16 %v2889, %v2881
        %v3026 = vpack.c.b16 %v2890, %v2882
        %v3027 = vpack.c.b16 %v2891, %v2883
        %v3028 = vpack.c.b16 %v2892, %v2884
        %v3029 = vpack.c.b16 %v2893, %v2885
        %v3030 = vpack.c.b16 %v2894, %v2886
        %v3031 = vpack.c.b16 %v2895, %v2887
        %v3032 = vpack.c.b16 %v2904, %v2896
        %v3033 = vpack.c.b16 %v2905, %v2897
        %v3034 = vpack.c.b16 %v2906, %v2898
        %v3035 = vpack.c.b16 %v2907, %v2899
        %v3036 = vpack.c.b16 %v2908, %v2900
        %v3037 = vpack.c.b16 %v2909, %v2901
        %v3038 = vpack.c.b16 %v2910, %v2902
        %v3039 = vpack.c.b16 %v2911, %v2903
        %3168 = vmatpush.bf16.msra.mxu0 %v2968
        %3169 = vmatpush.bf16.msra.mxu0 %v2960
        %3170 = vmatpush.bf16.msra.mxu0 %v2952
        %3171 = vmatpush.bf16.msra.mxu0 %v2944
        %3172 = vmatpush.bf16.msra.mxu0 %v2936
        %3173 = vmatpush.bf16.msra.mxu0 %v2928
        %3174 = vmatpush.bf16.msra.mxu0 %v2920
        %3175 = vmatpush.bf16.msra.mxu0 %v2912
        %3176 = vmatmul.bf16.gmra.mxu0 %v2398
        %v3177 = vpop.f32.mrf.mxu0
        %v3178 = vadd.f32 0.0, %v3177
        %v3179 = vpop.f32.mrf.mxu0
        %3180 = vdwg.mxu0
        %3181 = vmatpush.bf16.msra.mxu0 %v3032
        %3182 = vmatpush.bf16.msra.mxu0 %v3024
        %3183 = vmatpush.bf16.msra.mxu0 %v3016
        %3184 = vmatpush.bf16.msra.mxu0 %v3008
        %3185 = vmatpush.bf16.msra.mxu0 %v3000
        %3186 = vmatpush.bf16.msra.mxu0 %v2992
        %3187 = vmatpush.bf16.msra.mxu0 %v2984
        %3188 = vmatpush.bf16.msra.mxu0 %v2976
        %3189 = vmatmul.bf16.gmra.mxu0 %v2399
        %v3190 = vpop.f32.mrf.mxu0
        %v3191 = vadd.f32 %v3178, %v3190
        %v3192 = vpop.f32.mrf.mxu0
        %3193 = vdwg.mxu0
        %3194 = vmatpush.bf16.msra.mxu0 %v2969
        %3195 = vmatpush.bf16.msra.mxu0 %v2961
        %3196 = vmatpush.bf16.msra.mxu0 %v2953
        %3197 = vmatpush.bf16.msra.mxu0 %v2945
        %3198 = vmatpush.bf16.msra.mxu0 %v2937
        %3199 = vmatpush.bf16.msra.mxu0 %v2929
        %3200 = vmatpush.bf16.msra.mxu0 %v2921
        %3201 = vmatpush.bf16.msra.mxu0 %v2913
        %3202 = vmatmul.bf16.gmra.mxu0 %v2398
        %v3203 = vpop.f32.mrf.mxu0
        %v3204 = vadd.f32 0.0, %v3203
        %v3205 = vpop.f32.mrf.mxu0
        %3206 = vdwg.mxu0
        %3207 = vmatpush.bf16.msra.mxu0 %v3033
        %3208 = vmatpush.bf16.msra.mxu0 %v3025
        %3209 = vmatpush.bf16.msra.mxu0 %v3017
        %3210 = vmatpush.bf16.msra.mxu0 %v3009
        %3211 = vmatpush.bf16.msra.mxu0 %v3001
        %3212 = vmatpush.bf16.msra.mxu0 %v2993
        %3213 = vmatpush.bf16.msra.mxu0 %v2985
        %3214 = vmatpush.bf16.msra.mxu0 %v2977
        %3215 = vmatmul.bf16.gmra.mxu0 %v2399
        %v3216 = vpop.f32.mrf.mxu0
        %v3217 = vadd.f32 %v3204, %v3216
        %v3218 = vpop.f32.mrf.mxu0
        %3219 = vdwg.mxu0
        %3220 = vmatpush.bf16.msra.mxu0 %v2970
        %3221 = vmatpush.bf16.msra.mxu0 %v2962
        %3222 = vmatpush.bf16.msra.mxu0 %v2954
        %3223 = vmatpush.bf16.msra.mxu0 %v2946
        %3224 = vmatpush.bf16.msra.mxu0 %v2938
        %3225 = vmatpush.bf16.msra.mxu0 %v2930
        %3226 = vmatpush.bf16.msra.mxu0 %v2922
        %3227 = vmatpush.bf16.msra.mxu0 %v2914
        %3228 = vmatmul.bf16.gmra.mxu0 %v2398
        %v3229 = vpop.f32.mrf.mxu0
        %v3230 = vadd.f32 0.0, %v3229
        %v3231 = vpop.f32.mrf.mxu0
        %3232 = vdwg.mxu0
        %3233 = vmatpush.bf16.msra.mxu0 %v3034
        %3234 = vmatpush.bf16.msra.mxu0 %v3026
        %3235 = vmatpush.bf16.msra.mxu0 %v3018
        %3236 = vmatpush.bf16.msra.mxu0 %v3010
        %3237 = vmatpush.bf16.msra.mxu0 %v3002
        %3238 = vmatpush.bf16.msra.mxu0 %v2994
        %3239 = vmatpush.bf16.msra.mxu0 %v2986
        %3240 = vmatpush.bf16.msra.mxu0 %v2978
        %3241 = vmatmul.bf16.gmra.mxu0 %v2399
        %v3242 = vpop.f32.mrf.mxu0
        %v3243 = vadd.f32 %v3230, %v3242
        %v3244 = vpop.f32.mrf.mxu0
        %3245 = vdwg.mxu0
        %3246 = vmatpush.bf16.msra.mxu0 %v2971
        %3247 = vmatpush.bf16.msra.mxu0 %v2963
        %3248 = vmatpush.bf16.msra.mxu0 %v2955
        %3249 = vmatpush.bf16.msra.mxu0 %v2947
        %3250 = vmatpush.bf16.msra.mxu0 %v2939
        %3251 = vmatpush.bf16.msra.mxu0 %v2931
        %3252 = vmatpush.bf16.msra.mxu0 %v2923
        %3253 = vmatpush.bf16.msra.mxu0 %v2915
        %3254 = vmatmul.bf16.gmra.mxu0 %v2398
        %v3255 = vpop.f32.mrf.mxu0
        %v3256 = vadd.f32 0.0, %v3255
        %v3257 = vpop.f32.mrf.mxu0
        %3258 = vdwg.mxu0
        %3259 = vmatpush.bf16.msra.mxu0 %v3035
        %3260 = vmatpush.bf16.msra.mxu0 %v3027
        %3261 = vmatpush.bf16.msra.mxu0 %v3019
        %3262 = vmatpush.bf16.msra.mxu0 %v3011
        %3263 = vmatpush.bf16.msra.mxu0 %v3003
        %3264 = vmatpush.bf16.msra.mxu0 %v2995
        %3265 = vmatpush.bf16.msra.mxu0 %v2987
        %3266 = vmatpush.bf16.msra.mxu0 %v2979
        %3267 = vmatmul.bf16.gmra.mxu0 %v2399
        %v3268 = vpop.f32.mrf.mxu0
        %v3269 = vadd.f32 %v3256, %v3268
        %v3270 = vpop.f32.mrf.mxu0
        %3271 = vdwg.mxu0
        %3272 = vmatpush.bf16.msra.mxu0 %v2972
        %3273 = vmatpush.bf16.msra.mxu0 %v2964
        %3274 = vmatpush.bf16.msra.mxu0 %v2956
        %3275 = vmatpush.bf16.msra.mxu0 %v2948
        %3276 = vmatpush.bf16.msra.mxu0 %v2940
        %3277 = vmatpush.bf16.msra.mxu0 %v2932
        %3278 = vmatpush.bf16.msra.mxu0 %v2924
        %3279 = vmatpush.bf16.msra.mxu0 %v2916
        %3280 = vmatmul.bf16.gmra.mxu0 %v2398
        %v3281 = vpop.f32.mrf.mxu0
        %v3282 = vadd.f32 0.0, %v3281
        %v3283 = vpop.f32.mrf.mxu0
        %3284 = vdwg.mxu0
        %3285 = vmatpush.bf16.msra.mxu0 %v3036
        %3286 = vmatpush.bf16.msra.mxu0 %v3028
        %3287 = vmatpush.bf16.msra.mxu0 %v3020
        %3288 = vmatpush.bf16.msra.mxu0 %v3012
        %3289 = vmatpush.bf16.msra.mxu0 %v3004
        %3290 = vmatpush.bf16.msra.mxu0 %v2996
        %3291 = vmatpush.bf16.msra.mxu0 %v2988
        %3292 = vmatpush.bf16.msra.mxu0 %v2980
        %3293 = vmatmul.bf16.gmra.mxu0 %v2399
        %v3294 = vpop.f32.mrf.mxu0
        %v3295 = vadd.f32 %v3282, %v3294
        %v3296 = vpop.f32.mrf.mxu0
        %3297 = vdwg.mxu0
        %3298 = vmatpush.bf16.msra.mxu0 %v2973
        %3299 = vmatpush.bf16.msra.mxu0 %v2965
        %3300 = vmatpush.bf16.msra.mxu0 %v2957
        %3301 = vmatpush.bf16.msra.mxu0 %v2949
        %3302 = vmatpush.bf16.msra.mxu0 %v2941
        %3303 = vmatpush.bf16.msra.mxu0 %v2933
        %3304 = vmatpush.bf16.msra.mxu0 %v2925
        %3305 = vmatpush.bf16.msra.mxu0 %v2917
        %3306 = vmatmul.bf16.gmra.mxu0 %v2398
        %v3307 = vpop.f32.mrf.mxu0
        %v3308 = vadd.f32 0.0, %v3307
        %v3309 = vpop.f32.mrf.mxu0
        %3310 = vdwg.mxu0
        %3311 = vmatpush.bf16.msra.mxu0 %v3037
        %3312 = vmatpush.bf16.msra.mxu0 %v3029
        %3313 = vmatpush.bf16.msra.mxu0 %v3021
        %3314 = vmatpush.bf16.msra.mxu0 %v3013
        %3315 = vmatpush.bf16.msra.mxu0 %v3005
        %3316 = vmatpush.bf16.msra.mxu0 %v2997
        %3317 = vmatpush.bf16.msra.mxu0 %v2989
        %3318 = vmatpush.bf16.msra.mxu0 %v2981
        %3319 = vmatmul.bf16.gmra.mxu0 %v2399
        %v3320 = vpop.f32.mrf.mxu0
        %v3321 = vadd.f32 %v3308, %v3320
        %v3322 = vpop.f32.mrf.mxu0
        %3323 = vdwg.mxu0
        %3324 = vmatpush.bf16.msra.mxu0 %v2974
        %3325 = vmatpush.bf16.msra.mxu0 %v2966
        %3326 = vmatpush.bf16.msra.mxu0 %v2958
        %3327 = vmatpush.bf16.msra.mxu0 %v2950
        %3328 = vmatpush.bf16.msra.mxu0 %v2942
        %3329 = vmatpush.bf16.msra.mxu0 %v2934
        %3330 = vmatpush.bf16.msra.mxu0 %v2926
        %3331 = vmatpush.bf16.msra.mxu0 %v2918
        %3332 = vmatmul.bf16.gmra.mxu0 %v2398
        %v3333 = vpop.f32.mrf.mxu0
        %v3334 = vadd.f32 0.0, %v3333
        %v3335 = vpop.f32.mrf.mxu0
        %3336 = vdwg.mxu0
        %3337 = vmatpush.bf16.msra.mxu0 %v3038
        %3338 = vmatpush.bf16.msra.mxu0 %v3030
        %3339 = vmatpush.bf16.msra.mxu0 %v3022
        %3340 = vmatpush.bf16.msra.mxu0 %v3014
        %3341 = vmatpush.bf16.msra.mxu0 %v3006
        %3342 = vmatpush.bf16.msra.mxu0 %v2998
        %3343 = vmatpush.bf16.msra.mxu0 %v2990
        %3344 = vmatpush.bf16.msra.mxu0 %v2982
        %3345 = vmatmul.bf16.gmra.mxu0 %v2399
        %v3346 = vpop.f32.mrf.mxu0
        %v3347 = vadd.f32 %v3334, %v3346
        %v3348 = vpop.f32.mrf.mxu0
        %3349 = vdwg.mxu0
        %3350 = vmatpush.bf16.msra.mxu0 %v2975
        %3351 = vmatpush.bf16.msra.mxu0 %v2967
        %3352 = vmatpush.bf16.msra.mxu0 %v2959
        %3353 = vmatpush.bf16.msra.mxu0 %v2951
        %3354 = vmatpush.bf16.msra.mxu0 %v2943
        %3355 = vmatpush.bf16.msra.mxu0 %v2935
        %3356 = vmatpush.bf16.msra.mxu0 %v2927
        %3357 = vmatpush.bf16.msra.mxu0 %v2919
        %3358 = vmatmul.bf16.gmra.mxu0 %v2398
        %v3359 = vpop.f32.mrf.mxu0
        %v3360 = vadd.f32 0.0, %v3359
        %v3361 = vpop.f32.mrf.mxu0
        %3362 = vdwg.mxu0
        %3363 = vmatpush.bf16.msra.mxu0 %v3039
        %3364 = vmatpush.bf16.msra.mxu0 %v3031
        %3365 = vmatpush.bf16.msra.mxu0 %v3023
        %3366 = vmatpush.bf16.msra.mxu0 %v3015
        %3367 = vmatpush.bf16.msra.mxu0 %v3007
        %3368 = vmatpush.bf16.msra.mxu0 %v2999
        %3369 = vmatpush.bf16.msra.mxu0 %v2991
        %3370 = vmatpush.bf16.msra.mxu0 %v2983
        %3371 = vmatmul.bf16.gmra.mxu0 %v2399
        %v3372 = vpop.f32.mrf.mxu0
        %v3373 = vadd.f32 %v3360, %v3372
        %v3374 = vpop.f32.mrf.mxu0
        %3375 = vdwg.mxu0
        %v3376 = vld [vmem:[%s11] sm:$0xff]
        %v3377 = vld [vmem:[%s11 + $0x8] sm:$0xff]
        %s3378 = scalar_lea.vmem %s11, 16
        %v3379 = vld [vmem:[%s3378] sm:$0xff]
        %v3380 = vld [vmem:[%s3378 + $0x8] sm:$0xff]
        %v3382 = vsel %vm1012, %v3379, 0
        %v3385 = vsel %vm1012, %v3380, 0
        %3387 = vmatpush.msra.mxu0 0.0
        %3388 = vmatpush.msra.mxu0 0.0
        %3389 = vmatpush.msra.mxu0 0.0
        %3390 = vmatpush.msra.mxu0 0.0
        %3391 = vmatpush.msra.mxu0 0.0
        %3392 = vmatpush.msra.mxu0 0.0
        %3393 = vmatpush.msra.mxu0 0.0
        %3394 = vmatpush.msra.mxu0 0.0
        %3395 = vmatpush.msra.mxu0 0.0
        %3396 = vmatpush.msra.mxu0 0.0
        %3397 = vmatpush.msra.mxu0 0.0
        %3398 = vmatpush.msra.mxu0 0.0
        %3399 = vmatpush.msra.mxu0 0.0
        %3400 = vmatpush.msra.mxu0 0.0
        %3401 = vmatpush.msra.mxu0 0.0
        %3402 = vmatpush.msra.mxu0 %v3243
        %3403 = vmatmul.f32.gmra.mxu0 %v3382
        %v3404 = vpop.f32.mrf.mxu0
        %v3405 = vadd.f32 0.0, %v3404
        %3406 = vmatmul.f32.gmra.mxu0 %v3385
        %v3407 = vpop.f32.mrf.mxu0
        %v3408 = vadd.f32 0.0, %v3407
        %3409 = vdwg.mxu0
        %3410 = vmatpush.msra.mxu0 0.0
        %3411 = vmatpush.msra.mxu0 0.0
        %3412 = vmatpush.msra.mxu0 0.0
        %3413 = vmatpush.msra.mxu0 0.0
        %3414 = vmatpush.msra.mxu0 0.0
        %3415 = vmatpush.msra.mxu0 0.0
        %3416 = vmatpush.msra.mxu0 0.0
        %3417 = vmatpush.msra.mxu0 0.0
        %3418 = vmatpush.msra.mxu0 0.0
        %3419 = vmatpush.msra.mxu0 0.0
        %3420 = vmatpush.msra.mxu0 0.0
        %3421 = vmatpush.msra.mxu0 0.0
        %3422 = vmatpush.msra.mxu0 0.0
        %3423 = vmatpush.msra.mxu0 0.0
        %3424 = vmatpush.msra.mxu0 0.0
        %3425 = vmatpush.msra.mxu0 %v3269
        %3426 = vmatmul.f32.gmra.mxu0 %v3382
        %v3427 = vpop.f32.mrf.mxu0
        %v3428 = vadd.f32 0.0, %v3427
        %3429 = vmatmul.f32.gmra.mxu0 %v3385
        %v3430 = vpop.f32.mrf.mxu0
        %v3431 = vadd.f32 0.0, %v3430
        %3432 = vdwg.mxu0
        %v3434 = vsel %vm1012, %v3376, 0
        %v3437 = vsel %vm1012, %v3377, 0
        %3439 = vmatpush.msra.mxu0 0.0
        %3440 = vmatpush.msra.mxu0 0.0
        %3441 = vmatpush.msra.mxu0 0.0
        %3442 = vmatpush.msra.mxu0 0.0
        %3443 = vmatpush.msra.mxu0 0.0
        %3444 = vmatpush.msra.mxu0 0.0
        %3445 = vmatpush.msra.mxu0 0.0
        %3446 = vmatpush.msra.mxu0 0.0
        %3447 = vmatpush.msra.mxu0 0.0
        %3448 = vmatpush.msra.mxu0 0.0
        %3449 = vmatpush.msra.mxu0 0.0
        %3450 = vmatpush.msra.mxu0 0.0
        %3451 = vmatpush.msra.mxu0 0.0
        %3452 = vmatpush.msra.mxu0 0.0
        %3453 = vmatpush.msra.mxu0 0.0
        %3454 = vmatpush.msra.mxu0 %v3191
        %3455 = vmatmul.f32.gmra.mxu0 %v3434
        %v3456 = vpop.f32.mrf.mxu0
        %v3457 = vadd.f32 %v3405, %v3456
        %3458 = vmatmul.f32.gmra.mxu0 %v3437
        %v3459 = vpop.f32.mrf.mxu0
        %v3460 = vadd.f32 %v3408, %v3459
        %3461 = vdwg.mxu0
        %3462 = vmatpush.msra.mxu0 0.0
        %3463 = vmatpush.msra.mxu0 0.0
        %3464 = vmatpush.msra.mxu0 0.0
        %3465 = vmatpush.msra.mxu0 0.0
        %3466 = vmatpush.msra.mxu0 0.0
        %3467 = vmatpush.msra.mxu0 0.0
        %3468 = vmatpush.msra.mxu0 0.0
        %3469 = vmatpush.msra.mxu0 0.0
        %3470 = vmatpush.msra.mxu0 0.0
        %3471 = vmatpush.msra.mxu0 0.0
        %3472 = vmatpush.msra.mxu0 0.0
        %3473 = vmatpush.msra.mxu0 0.0
        %3474 = vmatpush.msra.mxu0 0.0
        %3475 = vmatpush.msra.mxu0 0.0
        %3476 = vmatpush.msra.mxu0 0.0
        %3477 = vmatpush.msra.mxu0 %v3217
        %3478 = vmatmul.f32.gmra.mxu0 %v3434
        %v3479 = vpop.f32.mrf.mxu0
        %v3480 = vadd.f32 %v3428, %v3479
        %3481 = vmatmul.f32.gmra.mxu0 %v3437
        %v3482 = vpop.f32.mrf.mxu0
        %v3483 = vadd.f32 %v3431, %v3482
        %3484 = vdwg.mxu0
        %s3485 = scalar_lea.vmem %s11, 32
        %v3486 = vld [vmem:[%s3485] sm:$0xff]
        %v3487 = vld [vmem:[%s3485 + $0x8] sm:$0xff]
        %v3489 = vsel %vm1012, %v3486, 0
        %v3492 = vsel %vm1012, %v3487, 0
        %3494 = vmatpush.msra.mxu0 0.0
        %3495 = vmatpush.msra.mxu0 0.0
        %3496 = vmatpush.msra.mxu0 0.0
        %3497 = vmatpush.msra.mxu0 0.0
        %3498 = vmatpush.msra.mxu0 0.0
        %3499 = vmatpush.msra.mxu0 0.0
        %3500 = vmatpush.msra.mxu0 0.0
        %3501 = vmatpush.msra.mxu0 0.0
        %3502 = vmatpush.msra.mxu0 0.0
        %3503 = vmatpush.msra.mxu0 0.0
        %3504 = vmatpush.msra.mxu0 0.0
        %3505 = vmatpush.msra.mxu0 0.0
        %3506 = vmatpush.msra.mxu0 0.0
        %3507 = vmatpush.msra.mxu0 0.0
        %3508 = vmatpush.msra.mxu0 0.0
        %3509 = vmatpush.msra.mxu0 %v3295
        %3510 = vmatmul.f32.gmra.mxu0 %v3489
        %v3511 = vpop.f32.mrf.mxu0
        %v3512 = vadd.f32 0.0, %v3511
        %3513 = vmatmul.f32.gmra.mxu0 %v3492
        %v3514 = vpop.f32.mrf.mxu0
        %v3515 = vadd.f32 0.0, %v3514
        %3516 = vdwg.mxu0
        %3517 = vmatpush.msra.mxu0 0.0
        %3518 = vmatpush.msra.mxu0 0.0
        %3519 = vmatpush.msra.mxu0 0.0
        %3520 = vmatpush.msra.mxu0 0.0
        %3521 = vmatpush.msra.mxu0 0.0
        %3522 = vmatpush.msra.mxu0 0.0
        %3523 = vmatpush.msra.mxu0 0.0
        %3524 = vmatpush.msra.mxu0 0.0
        %3525 = vmatpush.msra.mxu0 0.0
        %3526 = vmatpush.msra.mxu0 0.0
        %3527 = vmatpush.msra.mxu0 0.0
        %3528 = vmatpush.msra.mxu0 0.0
        %3529 = vmatpush.msra.mxu0 0.0
        %3530 = vmatpush.msra.mxu0 0.0
        %3531 = vmatpush.msra.mxu0 0.0
        %3532 = vmatpush.msra.mxu0 %v3321
        %3533 = vmatmul.f32.gmra.mxu0 %v3489
        %v3534 = vpop.f32.mrf.mxu0
        %v3535 = vadd.f32 0.0, %v3534
        %3536 = vmatmul.f32.gmra.mxu0 %v3492
        %v3537 = vpop.f32.mrf.mxu0
        %v3538 = vadd.f32 0.0, %v3537
        %3539 = vdwg.mxu0
        %v3540 = vadd.f32 %v3457, %v3512
        %v3541 = vadd.f32 %v3480, %v3535
        %v3542 = vadd.f32 %v3460, %v3515
        %v3543 = vadd.f32 %v3483, %v3538
        %s3544 = scalar_lea.vmem %s11, 48
        %v3545 = vld [vmem:[%s3544] sm:$0xff]
        %v3546 = vld [vmem:[%s3544 + $0x8] sm:$0xff]
        %v3548 = vsel %vm1012, %v3545, 0
        %v3551 = vsel %vm1012, %v3546, 0
        %3553 = vmatpush.msra.mxu0 0.0
        %3554 = vmatpush.msra.mxu0 0.0
        %3555 = vmatpush.msra.mxu0 0.0
        %3556 = vmatpush.msra.mxu0 0.0
        %3557 = vmatpush.msra.mxu0 0.0
        %3558 = vmatpush.msra.mxu0 0.0
        %3559 = vmatpush.msra.mxu0 0.0
        %3560 = vmatpush.msra.mxu0 0.0
        %3561 = vmatpush.msra.mxu0 0.0
        %3562 = vmatpush.msra.mxu0 0.0
        %3563 = vmatpush.msra.mxu0 0.0
        %3564 = vmatpush.msra.mxu0 0.0
        %3565 = vmatpush.msra.mxu0 0.0
        %3566 = vmatpush.msra.mxu0 0.0
        %3567 = vmatpush.msra.mxu0 0.0
        %3568 = vmatpush.msra.mxu0 %v3347
        %3569 = vmatmul.f32.gmra.mxu0 %v3548
        %v3570 = vpop.f32.mrf.mxu0
        %v3571 = vadd.f32 0.0, %v3570
        %3572 = vmatmul.f32.gmra.mxu0 %v3551
        %v3573 = vpop.f32.mrf.mxu0
        %v3574 = vadd.f32 0.0, %v3573
        %3575 = vdwg.mxu0
        %3576 = vmatpush.msra.mxu0 0.0
        %3577 = vmatpush.msra.mxu0 0.0
        %3578 = vmatpush.msra.mxu0 0.0
        %3579 = vmatpush.msra.mxu0 0.0
        %3580 = vmatpush.msra.mxu0 0.0
        %3581 = vmatpush.msra.mxu0 0.0
        %3582 = vmatpush.msra.mxu0 0.0
        %3583 = vmatpush.msra.mxu0 0.0
        %3584 = vmatpush.msra.mxu0 0.0
        %3585 = vmatpush.msra.mxu0 0.0
        %3586 = vmatpush.msra.mxu0 0.0
        %3587 = vmatpush.msra.mxu0 0.0
        %3588 = vmatpush.msra.mxu0 0.0
        %3589 = vmatpush.msra.mxu0 0.0
        %3590 = vmatpush.msra.mxu0 0.0
        %3591 = vmatpush.msra.mxu0 %v3373
        %3592 = vmatmul.f32.gmra.mxu0 %v3548
        %v3593 = vpop.f32.mrf.mxu0
        %v3594 = vadd.f32 0.0, %v3593
        %3595 = vmatmul.f32.gmra.mxu0 %v3551
        %v3596 = vpop.f32.mrf.mxu0
        %v3597 = vadd.f32 0.0, %v3596
        %3598 = vdwg.mxu0
        %v3599 = vadd.f32 %v3540, %v3571
        %v3600 = vadd.f32 %v3541, %v3594
        %v3601 = vadd.f32 %v3542, %v3574
        %v3602 = vadd.f32 %v3543, %v3597
        %v3603 = vld [vmem:[%s10] sm:$0x3]
        %v3605 = vperm.slane %v3603, 0
        %v3606 = vperm.slane %v3603, 1
        %v3609 = vadd.f32 %v3599, %v3605
        %v3610 = vadd.f32 %v3600, %v3606
        %v3611 = vadd.f32 %v3601, %v3605
        %v3612 = vadd.f32 %v3602, %v3606
        %vm3613 = vcmp.ge.f32.partialorder %v3609, 0.0
        %vm3614 = vcmp.ge.f32.partialorder %v3610, 0.0
        %vm3615 = vcmp.ge.f32.partialorder %v3611, 0.0
        %vm3616 = vcmp.ge.f32.partialorder %v3612, 0.0
        %v3617 = vmul.f32 %v3609, 0.01
        %v3618 = vmul.f32 %v3610, 0.01
        %v3619 = vmul.f32 %v3611, 0.01
        %v3620 = vmul.f32 %v3612, 0.01
        %v3621 = vsel %vm3613, %v3609, %v3617
        %v3622 = vsel %vm3614, %v3610, %v3618
        %v3623 = vsel %vm3615, %v3611, %v3619
        %v3624 = vsel %vm3616, %v3612, %v3620
        %v3625 = vpack.c.bf16 %v3623, %v3621
        %v3626 = vpack.c.bf16 %v3624, %v3622
        %v3627 = vld [vmem:[#allocation7] sm:$0xff]
        %v3628 = vld [vmem:[#allocation7 + $0x8] sm:$0xff]
        %v3629 = vld [vmem:[#allocation7 + $0x10] sm:$0xff]
        %v3630 = vld [vmem:[#allocation7 + $0x18] sm:$0xff]
        %v3631 = vld [vmem:[#allocation7 + $0x20] sm:$0xff]
        %v3632 = vld [vmem:[#allocation7 + $0x28] sm:$0xff]
        %v3633 = vld [vmem:[#allocation7 + $0x30] sm:$0xff]
        %v3634 = vld [vmem:[#allocation7 + $0x38] sm:$0xff]
        %v3635 = vld [vmem:[#allocation7 + $0x40] sm:$0xff]
        %v3636 = vld [vmem:[#allocation7 + $0x48] sm:$0xff]
        %v3637 = vld [vmem:[#allocation7 + $0x50] sm:$0xff]
        %v3638 = vld [vmem:[#allocation7 + $0x58] sm:$0xff]
        %v3639 = vld [vmem:[#allocation7 + $0x60] sm:$0xff]
        %v3640 = vld [vmem:[#allocation7 + $0x68] sm:$0xff]
        %v3641 = vld [vmem:[#allocation7 + $0x70] sm:$0xff]
        %v3642 = vld [vmem:[#allocation7 + $0x78] sm:$0xff]
        %v3643 = vld [vmem:[#allocation7 + $0x80] sm:$0xff]
        %v3644 = vld [vmem:[#allocation7 + $0x88] sm:$0xff]
        %v3645 = vld [vmem:[#allocation7 + $0x90] sm:$0xff]
        %v3646 = vld [vmem:[#allocation7 + $0x98] sm:$0xff]
        %v3647 = vld [vmem:[#allocation7 + $0xa0] sm:$0xff]
        %v3648 = vld [vmem:[#allocation7 + $0xa8] sm:$0xff]
        %v3649 = vld [vmem:[#allocation7 + $0xb0] sm:$0xff]
        %v3650 = vld [vmem:[#allocation7 + $0xb8] sm:$0xff]
        %v3651 = vld [vmem:[#allocation7 + $0xc0] sm:$0xff]
        %v3652 = vld [vmem:[#allocation7 + $0xc8] sm:$0xff]
        %v3653 = vld [vmem:[#allocation7 + $0xd0] sm:$0xff]
        %v3654 = vld [vmem:[#allocation7 + $0xd8] sm:$0xff]
        %v3655 = vld [vmem:[#allocation7 + $0xe0] sm:$0xff]
        %v3656 = vld [vmem:[#allocation7 + $0xe8] sm:$0xff]
        %v3657 = vld [vmem:[#allocation7 + $0xf0] sm:$0xff]
        %v3658 = vld [vmem:[#allocation7 + $0xf8] sm:$0xff]
        %v3659 = vld [vmem:[#allocation7 + $0x100] sm:$0xff]
        %v3660 = vld [vmem:[#allocation7 + $0x108] sm:$0xff]
        %v3661 = vld [vmem:[#allocation7 + $0x110] sm:$0xff]
        %v3662 = vld [vmem:[#allocation7 + $0x118] sm:$0xff]
        %v3663 = vld [vmem:[#allocation7 + $0x120] sm:$0xff]
        %v3664 = vld [vmem:[#allocation7 + $0x128] sm:$0xff]
        %v3665 = vld [vmem:[#allocation7 + $0x130] sm:$0xff]
        %v3666 = vld [vmem:[#allocation7 + $0x138] sm:$0xff]
        %v3667 = vld [vmem:[#allocation7 + $0x140] sm:$0xff]
        %v3668 = vld [vmem:[#allocation7 + $0x148] sm:$0xff]
        %v3669 = vld [vmem:[#allocation7 + $0x150] sm:$0xff]
        %v3670 = vld [vmem:[#allocation7 + $0x158] sm:$0xff]
        %v3671 = vld [vmem:[#allocation7 + $0x160] sm:$0xff]
        %v3672 = vld [vmem:[#allocation7 + $0x168] sm:$0xff]
        %v3673 = vld [vmem:[#allocation7 + $0x170] sm:$0xff]
        %v3674 = vld [vmem:[#allocation7 + $0x178] sm:$0xff]
        %v3675 = vld [vmem:[#allocation7 + $0x180] sm:$0xff]
        %v3676 = vld [vmem:[#allocation7 + $0x188] sm:$0xff]
        %v3677 = vld [vmem:[#allocation7 + $0x190] sm:$0xff]
        %v3678 = vld [vmem:[#allocation7 + $0x198] sm:$0xff]
        %v3679 = vld [vmem:[#allocation7 + $0x1a0] sm:$0xff]
        %v3680 = vld [vmem:[#allocation7 + $0x1a8] sm:$0xff]
        %v3681 = vld [vmem:[#allocation7 + $0x1b0] sm:$0xff]
        %v3682 = vld [vmem:[#allocation7 + $0x1b8] sm:$0xff]
        %v3683 = vld [vmem:[#allocation7 + $0x1c0] sm:$0xff]
        %v3684 = vld [vmem:[#allocation7 + $0x1c8] sm:$0xff]
        %v3685 = vld [vmem:[#allocation7 + $0x1d0] sm:$0xff]
        %v3686 = vld [vmem:[#allocation7 + $0x1d8] sm:$0xff]
        %v3687 = vld [vmem:[#allocation7 + $0x1e0] sm:$0xff]
        %v3688 = vld [vmem:[#allocation7 + $0x1e8] sm:$0xff]
        %v3689 = vld [vmem:[#allocation7 + $0x1f0] sm:$0xff]
        %v3690 = vld [vmem:[#allocation7 + $0x1f8] sm:$0xff]
        %v3691 = vld [vmem:[#allocation7 + $0x200] sm:$0xff]
        %v3692 = vld [vmem:[#allocation7 + $0x208] sm:$0xff]
        %v3693 = vld [vmem:[#allocation7 + $0x210] sm:$0xff]
        %v3694 = vld [vmem:[#allocation7 + $0x218] sm:$0xff]
        %v3695 = vld [vmem:[#allocation7 + $0x220] sm:$0xff]
        %v3696 = vld [vmem:[#allocation7 + $0x228] sm:$0xff]
        %v3697 = vld [vmem:[#allocation7 + $0x230] sm:$0xff]
        %v3698 = vld [vmem:[#allocation7 + $0x238] sm:$0xff]
        %v3699 = vld [vmem:[#allocation7 + $0x240] sm:$0xff]
        %v3700 = vld [vmem:[#allocation7 + $0x248] sm:$0xff]
        %v3701 = vld [vmem:[#allocation7 + $0x250] sm:$0xff]
        %v3702 = vld [vmem:[#allocation7 + $0x258] sm:$0xff]
        %v3703 = vld [vmem:[#allocation7 + $0x260] sm:$0xff]
        %v3704 = vld [vmem:[#allocation7 + $0x268] sm:$0xff]
        %v3705 = vld [vmem:[#allocation7 + $0x270] sm:$0xff]
        %v3706 = vld [vmem:[#allocation7 + $0x278] sm:$0xff]
        %v3707 = vld [vmem:[#allocation7 + $0x280] sm:$0xff]
        %v3708 = vld [vmem:[#allocation7 + $0x288] sm:$0xff]
        %v3709 = vld [vmem:[#allocation7 + $0x290] sm:$0xff]
        %v3710 = vld [vmem:[#allocation7 + $0x298] sm:$0xff]
        %v3711 = vld [vmem:[#allocation7 + $0x2a0] sm:$0xff]
        %v3712 = vld [vmem:[#allocation7 + $0x2a8] sm:$0xff]
        %v3713 = vld [vmem:[#allocation7 + $0x2b0] sm:$0xff]
        %v3714 = vld [vmem:[#allocation7 + $0x2b8] sm:$0xff]
        %v3715 = vld [vmem:[#allocation7 + $0x2c0] sm:$0xff]
        %v3716 = vld [vmem:[#allocation7 + $0x2c8] sm:$0xff]
        %v3717 = vld [vmem:[#allocation7 + $0x2d0] sm:$0xff]
        %v3718 = vld [vmem:[#allocation7 + $0x2d8] sm:$0xff]
        %v3719 = vld [vmem:[#allocation7 + $0x2e0] sm:$0xff]
        %v3720 = vld [vmem:[#allocation7 + $0x2e8] sm:$0xff]
        %v3721 = vld [vmem:[#allocation7 + $0x2f0] sm:$0xff]
        %v3722 = vld [vmem:[#allocation7 + $0x2f8] sm:$0xff]
        %v3723 = vld [vmem:[#allocation7 + $0x300] sm:$0xff]
        %v3724 = vld [vmem:[#allocation7 + $0x308] sm:$0xff]
        %v3725 = vld [vmem:[#allocation7 + $0x310] sm:$0xff]
        %v3726 = vld [vmem:[#allocation7 + $0x318] sm:$0xff]
        %v3727 = vld [vmem:[#allocation7 + $0x320] sm:$0xff]
        %v3728 = vld [vmem:[#allocation7 + $0x328] sm:$0xff]
        %v3729 = vld [vmem:[#allocation7 + $0x330] sm:$0xff]
        %v3730 = vld [vmem:[#allocation7 + $0x338] sm:$0xff]
        %v3731 = vld [vmem:[#allocation7 + $0x340] sm:$0xff]
        %v3732 = vld [vmem:[#allocation7 + $0x348] sm:$0xff]
        %v3733 = vld [vmem:[#allocation7 + $0x350] sm:$0xff]
        %v3734 = vld [vmem:[#allocation7 + $0x358] sm:$0xff]
        %v3735 = vld [vmem:[#allocation7 + $0x360] sm:$0xff]
        %v3736 = vld [vmem:[#allocation7 + $0x368] sm:$0xff]
        %v3737 = vld [vmem:[#allocation7 + $0x370] sm:$0xff]
        %v3738 = vld [vmem:[#allocation7 + $0x378] sm:$0xff]
        %v3739 = vld [vmem:[#allocation7 + $0x380] sm:$0xff]
        %v3740 = vld [vmem:[#allocation7 + $0x388] sm:$0xff]
        %v3741 = vld [vmem:[#allocation7 + $0x390] sm:$0xff]
        %v3742 = vld [vmem:[#allocation7 + $0x398] sm:$0xff]
        %v3743 = vld [vmem:[#allocation7 + $0x3a0] sm:$0xff]
        %v3744 = vld [vmem:[#allocation7 + $0x3a8] sm:$0xff]
        %v3745 = vld [vmem:[#allocation7 + $0x3b0] sm:$0xff]
        %v3746 = vld [vmem:[#allocation7 + $0x3b8] sm:$0xff]
        %v3747 = vld [vmem:[#allocation7 + $0x3c0] sm:$0xff]
        %v3748 = vld [vmem:[#allocation7 + $0x3c8] sm:$0xff]
        %v3749 = vld [vmem:[#allocation7 + $0x3d0] sm:$0xff]
        %v3750 = vld [vmem:[#allocation7 + $0x3d8] sm:$0xff]
        %v3751 = vld [vmem:[#allocation7 + $0x3e0] sm:$0xff]
        %v3752 = vld [vmem:[#allocation7 + $0x3e8] sm:$0xff]
        %v3753 = vld [vmem:[#allocation7 + $0x3f0] sm:$0xff]
        %v3754 = vld [vmem:[#allocation7 + $0x3f8] sm:$0xff]
        %v3883 = vunpack.c.l.b16 %v3627
        %v3884 = vunpack.c.h.b16 %v3627
        %v3885 = vunpack.c.l.b16 %v3628
        %v3886 = vunpack.c.h.b16 %v3628
        %v3887 = vunpack.c.l.b16 %v3629
        %v3888 = vunpack.c.h.b16 %v3629
        %v3889 = vunpack.c.l.b16 %v3630
        %v3890 = vunpack.c.h.b16 %v3630
        %v3891 = vunpack.c.l.b16 %v3631
        %v3892 = vunpack.c.h.b16 %v3631
        %v3893 = vunpack.c.l.b16 %v3632
        %v3894 = vunpack.c.h.b16 %v3632
        %v3895 = vunpack.c.l.b16 %v3633
        %v3896 = vunpack.c.h.b16 %v3633
        %v3897 = vunpack.c.l.b16 %v3634
        %v3898 = vunpack.c.h.b16 %v3634
        %v3899 = vunpack.c.l.b16 %v3635
        %v3900 = vunpack.c.h.b16 %v3635
        %v3901 = vunpack.c.l.b16 %v3636
        %v3902 = vunpack.c.h.b16 %v3636
        %v3903 = vunpack.c.l.b16 %v3637
        %v3904 = vunpack.c.h.b16 %v3637
        %v3905 = vunpack.c.l.b16 %v3638
        %v3906 = vunpack.c.h.b16 %v3638
        %v3907 = vunpack.c.l.b16 %v3639
        %v3908 = vunpack.c.h.b16 %v3639
        %v3909 = vunpack.c.l.b16 %v3640
        %v3910 = vunpack.c.h.b16 %v3640
        %v3911 = vunpack.c.l.b16 %v3641
        %v3912 = vunpack.c.h.b16 %v3641
        %v3913 = vunpack.c.l.b16 %v3642
        %v3914 = vunpack.c.h.b16 %v3642
        %v3915 = vunpack.c.l.b16 %v3643
        %v3916 = vunpack.c.h.b16 %v3643
        %v3917 = vunpack.c.l.b16 %v3644
        %v3918 = vunpack.c.h.b16 %v3644
        %v3919 = vunpack.c.l.b16 %v3645
        %v3920 = vunpack.c.h.b16 %v3645
        %v3921 = vunpack.c.l.b16 %v3646
        %v3922 = vunpack.c.h.b16 %v3646
        %v3923 = vunpack.c.l.b16 %v3647
        %v3924 = vunpack.c.h.b16 %v3647
        %v3925 = vunpack.c.l.b16 %v3648
        %v3926 = vunpack.c.h.b16 %v3648
        %v3927 = vunpack.c.l.b16 %v3649
        %v3928 = vunpack.c.h.b16 %v3649
        %v3929 = vunpack.c.l.b16 %v3650
        %v3930 = vunpack.c.h.b16 %v3650
        %v3931 = vunpack.c.l.b16 %v3651
        %v3932 = vunpack.c.h.b16 %v3651
        %v3933 = vunpack.c.l.b16 %v3652
        %v3934 = vunpack.c.h.b16 %v3652
        %v3935 = vunpack.c.l.b16 %v3653
        %v3936 = vunpack.c.h.b16 %v3653
        %v3937 = vunpack.c.l.b16 %v3654
        %v3938 = vunpack.c.h.b16 %v3654
        %v3939 = vunpack.c.l.b16 %v3655
        %v3940 = vunpack.c.h.b16 %v3655
        %v3941 = vunpack.c.l.b16 %v3656
        %v3942 = vunpack.c.h.b16 %v3656
        %v3943 = vunpack.c.l.b16 %v3657
        %v3944 = vunpack.c.h.b16 %v3657
        %v3945 = vunpack.c.l.b16 %v3658
        %v3946 = vunpack.c.h.b16 %v3658
        %v3947 = vunpack.c.l.b16 %v3659
        %v3948 = vunpack.c.h.b16 %v3659
        %v3949 = vunpack.c.l.b16 %v3660
        %v3950 = vunpack.c.h.b16 %v3660
        %v3951 = vunpack.c.l.b16 %v3661
        %v3952 = vunpack.c.h.b16 %v3661
        %v3953 = vunpack.c.l.b16 %v3662
        %v3954 = vunpack.c.h.b16 %v3662
        %v3955 = vunpack.c.l.b16 %v3663
        %v3956 = vunpack.c.h.b16 %v3663
        %v3957 = vunpack.c.l.b16 %v3664
        %v3958 = vunpack.c.h.b16 %v3664
        %v3959 = vunpack.c.l.b16 %v3665
        %v3960 = vunpack.c.h.b16 %v3665
        %v3961 = vunpack.c.l.b16 %v3666
        %v3962 = vunpack.c.h.b16 %v3666
        %v3963 = vunpack.c.l.b16 %v3667
        %v3964 = vunpack.c.h.b16 %v3667
        %v3965 = vunpack.c.l.b16 %v3668
        %v3966 = vunpack.c.h.b16 %v3668
        %v3967 = vunpack.c.l.b16 %v3669
        %v3968 = vunpack.c.h.b16 %v3669
        %v3969 = vunpack.c.l.b16 %v3670
        %v3970 = vunpack.c.h.b16 %v3670
        %v3971 = vunpack.c.l.b16 %v3671
        %v3972 = vunpack.c.h.b16 %v3671
        %v3973 = vunpack.c.l.b16 %v3672
        %v3974 = vunpack.c.h.b16 %v3672
        %v3975 = vunpack.c.l.b16 %v3673
        %v3976 = vunpack.c.h.b16 %v3673
        %v3977 = vunpack.c.l.b16 %v3674
        %v3978 = vunpack.c.h.b16 %v3674
        %v3979 = vunpack.c.l.b16 %v3675
        %v3980 = vunpack.c.h.b16 %v3675
        %v3981 = vunpack.c.l.b16 %v3676
        %v3982 = vunpack.c.h.b16 %v3676
        %v3983 = vunpack.c.l.b16 %v3677
        %v3984 = vunpack.c.h.b16 %v3677
        %v3985 = vunpack.c.l.b16 %v3678
        %v3986 = vunpack.c.h.b16 %v3678
        %v3987 = vunpack.c.l.b16 %v3679
        %v3988 = vunpack.c.h.b16 %v3679
        %v3989 = vunpack.c.l.b16 %v3680
        %v3990 = vunpack.c.h.b16 %v3680
        %v3991 = vunpack.c.l.b16 %v3681
        %v3992 = vunpack.c.h.b16 %v3681
        %v3993 = vunpack.c.l.b16 %v3682
        %v3994 = vunpack.c.h.b16 %v3682
        %v3995 = vunpack.c.l.b16 %v3683
        %v3996 = vunpack.c.h.b16 %v3683
        %v3997 = vunpack.c.l.b16 %v3684
        %v3998 = vunpack.c.h.b16 %v3684
        %v3999 = vunpack.c.l.b16 %v3685
        %v4000 = vunpack.c.h.b16 %v3685
        %v4001 = vunpack.c.l.b16 %v3686
        %v4002 = vunpack.c.h.b16 %v3686
        %v4003 = vunpack.c.l.b16 %v3687
        %v4004 = vunpack.c.h.b16 %v3687
        %v4005 = vunpack.c.l.b16 %v3688
        %v4006 = vunpack.c.h.b16 %v3688
        %v4007 = vunpack.c.l.b16 %v3689
        %v4008 = vunpack.c.h.b16 %v3689
        %v4009 = vunpack.c.l.b16 %v3690
        %v4010 = vunpack.c.h.b16 %v3690
        %v4011 = vunpack.c.l.b16 %v3691
        %v4012 = vunpack.c.h.b16 %v3691
        %v4013 = vunpack.c.l.b16 %v3692
        %v4014 = vunpack.c.h.b16 %v3692
        %v4015 = vunpack.c.l.b16 %v3693
        %v4016 = vunpack.c.h.b16 %v3693
        %v4017 = vunpack.c.l.b16 %v3694
        %v4018 = vunpack.c.h.b16 %v3694
        %v4019 = vunpack.c.l.b16 %v3695
        %v4020 = vunpack.c.h.b16 %v3695
        %v4021 = vunpack.c.l.b16 %v3696
        %v4022 = vunpack.c.h.b16 %v3696
        %v4023 = vunpack.c.l.b16 %v3697
        %v4024 = vunpack.c.h.b16 %v3697
        %v4025 = vunpack.c.l.b16 %v3698
        %v4026 = vunpack.c.h.b16 %v3698
        %v4027 = vunpack.c.l.b16 %v3699
        %v4028 = vunpack.c.h.b16 %v3699
        %v4029 = vunpack.c.l.b16 %v3700
        %v4030 = vunpack.c.h.b16 %v3700
        %v4031 = vunpack.c.l.b16 %v3701
        %v4032 = vunpack.c.h.b16 %v3701
        %v4033 = vunpack.c.l.b16 %v3702
        %v4034 = vunpack.c.h.b16 %v3702
        %v4035 = vunpack.c.l.b16 %v3703
        %v4036 = vunpack.c.h.b16 %v3703
        %v4037 = vunpack.c.l.b16 %v3704
        %v4038 = vunpack.c.h.b16 %v3704
        %v4039 = vunpack.c.l.b16 %v3705
        %v4040 = vunpack.c.h.b16 %v3705
        %v4041 = vunpack.c.l.b16 %v3706
        %v4042 = vunpack.c.h.b16 %v3706
        %v4043 = vunpack.c.l.b16 %v3707
        %v4044 = vunpack.c.h.b16 %v3707
        %v4045 = vunpack.c.l.b16 %v3708
        %v4046 = vunpack.c.h.b16 %v3708
        %v4047 = vunpack.c.l.b16 %v3709
        %v4048 = vunpack.c.h.b16 %v3709
        %v4049 = vunpack.c.l.b16 %v3710
        %v4050 = vunpack.c.h.b16 %v3710
        %v4051 = vunpack.c.l.b16 %v3711
        %v4052 = vunpack.c.h.b16 %v3711
        %v4053 = vunpack.c.l.b16 %v3712
        %v4054 = vunpack.c.h.b16 %v3712
        %v4055 = vunpack.c.l.b16 %v3713
        %v4056 = vunpack.c.h.b16 %v3713
        %v4057 = vunpack.c.l.b16 %v3714
        %v4058 = vunpack.c.h.b16 %v3714
        %v4059 = vunpack.c.l.b16 %v3715
        %v4060 = vunpack.c.h.b16 %v3715
        %v4061 = vunpack.c.l.b16 %v3716
        %v4062 = vunpack.c.h.b16 %v3716
        %v4063 = vunpack.c.l.b16 %v3717
        %v4064 = vunpack.c.h.b16 %v3717
        %v4065 = vunpack.c.l.b16 %v3718
        %v4066 = vunpack.c.h.b16 %v3718
        %v4067 = vunpack.c.l.b16 %v3719
        %v4068 = vunpack.c.h.b16 %v3719
        %v4069 = vunpack.c.l.b16 %v3720
        %v4070 = vunpack.c.h.b16 %v3720
        %v4071 = vunpack.c.l.b16 %v3721
        %v4072 = vunpack.c.h.b16 %v3721
        %v4073 = vunpack.c.l.b16 %v3722
        %v4074 = vunpack.c.h.b16 %v3722
        %v4075 = vunpack.c.l.b16 %v3723
        %v4076 = vunpack.c.h.b16 %v3723
        %v4077 = vunpack.c.l.b16 %v3724
        %v4078 = vunpack.c.h.b16 %v3724
        %v4079 = vunpack.c.l.b16 %v3725
        %v4080 = vunpack.c.h.b16 %v3725
        %v4081 = vunpack.c.l.b16 %v3726
        %v4082 = vunpack.c.h.b16 %v3726
        %v4083 = vunpack.c.l.b16 %v3727
        %v4084 = vunpack.c.h.b16 %v3727
        %v4085 = vunpack.c.l.b16 %v3728
        %v4086 = vunpack.c.h.b16 %v3728
        %v4087 = vunpack.c.l.b16 %v3729
        %v4088 = vunpack.c.h.b16 %v3729
        %v4089 = vunpack.c.l.b16 %v3730
        %v4090 = vunpack.c.h.b16 %v3730
        %v4091 = vunpack.c.l.b16 %v3731
        %v4092 = vunpack.c.h.b16 %v3731
        %v4093 = vunpack.c.l.b16 %v3732
        %v4094 = vunpack.c.h.b16 %v3732
        %v4095 = vunpack.c.l.b16 %v3733
        %v4096 = vunpack.c.h.b16 %v3733
        %v4097 = vunpack.c.l.b16 %v3734
        %v4098 = vunpack.c.h.b16 %v3734
        %v4099 = vunpack.c.l.b16 %v3735
        %v4100 = vunpack.c.h.b16 %v3735
        %v4101 = vunpack.c.l.b16 %v3736
        %v4102 = vunpack.c.h.b16 %v3736
        %v4103 = vunpack.c.l.b16 %v3737
        %v4104 = vunpack.c.h.b16 %v3737
        %v4105 = vunpack.c.l.b16 %v3738
        %v4106 = vunpack.c.h.b16 %v3738
        %v4107 = vunpack.c.l.b16 %v3739
        %v4108 = vunpack.c.h.b16 %v3739
        %v4109 = vunpack.c.l.b16 %v3740
        %v4110 = vunpack.c.h.b16 %v3740
        %v4111 = vunpack.c.l.b16 %v3741
        %v4112 = vunpack.c.h.b16 %v3741
        %v4113 = vunpack.c.l.b16 %v3742
        %v4114 = vunpack.c.h.b16 %v3742
        %v4115 = vunpack.c.l.b16 %v3743
        %v4116 = vunpack.c.h.b16 %v3743
        %v4117 = vunpack.c.l.b16 %v3744
        %v4118 = vunpack.c.h.b16 %v3744
        %v4119 = vunpack.c.l.b16 %v3745
        %v4120 = vunpack.c.h.b16 %v3745
        %v4121 = vunpack.c.l.b16 %v3746
        %v4122 = vunpack.c.h.b16 %v3746
        %v4123 = vunpack.c.l.b16 %v3747
        %v4124 = vunpack.c.h.b16 %v3747
        %v4125 = vunpack.c.l.b16 %v3748
        %v4126 = vunpack.c.h.b16 %v3748
        %v4127 = vunpack.c.l.b16 %v3749
        %v4128 = vunpack.c.h.b16 %v3749
        %v4129 = vunpack.c.l.b16 %v3750
        %v4130 = vunpack.c.h.b16 %v3750
        %v4131 = vunpack.c.l.b16 %v3751
        %v4132 = vunpack.c.h.b16 %v3751
        %v4133 = vunpack.c.l.b16 %v3752
        %v4134 = vunpack.c.h.b16 %v3752
        %v4135 = vunpack.c.l.b16 %v3753
        %v4136 = vunpack.c.h.b16 %v3753
        %v4137 = vunpack.c.l.b16 %v3754
        %v4138 = vunpack.c.h.b16 %v3754
        %v4139 = vpack.c.b16 %v3891, %v3883
        %v4140 = vpack.c.b16 %v3892, %v3884
        %v4141 = vpack.c.b16 %v3893, %v3885
        %v4142 = vpack.c.b16 %v3894, %v3886
        %v4143 = vpack.c.b16 %v3895, %v3887
        %v4144 = vpack.c.b16 %v3896, %v3888
        %v4145 = vpack.c.b16 %v3897, %v3889
        %v4146 = vpack.c.b16 %v3898, %v3890
        %v4147 = vpack.c.b16 %v3907, %v3899
        %v4148 = vpack.c.b16 %v3908, %v3900
        %v4149 = vpack.c.b16 %v3909, %v3901
        %v4150 = vpack.c.b16 %v3910, %v3902
        %v4151 = vpack.c.b16 %v3911, %v3903
        %v4152 = vpack.c.b16 %v3912, %v3904
        %v4153 = vpack.c.b16 %v3913, %v3905
        %v4154 = vpack.c.b16 %v3914, %v3906
        %v4155 = vpack.c.b16 %v3923, %v3915
        %v4156 = vpack.c.b16 %v3924, %v3916
        %v4157 = vpack.c.b16 %v3925, %v3917
        %v4158 = vpack.c.b16 %v3926, %v3918
        %v4159 = vpack.c.b16 %v3927, %v3919
        %v4160 = vpack.c.b16 %v3928, %v3920
        %v4161 = vpack.c.b16 %v3929, %v3921
        %v4162 = vpack.c.b16 %v3930, %v3922
        %v4163 = vpack.c.b16 %v3939, %v3931
        %v4164 = vpack.c.b16 %v3940, %v3932
        %v4165 = vpack.c.b16 %v3941, %v3933
        %v4166 = vpack.c.b16 %v3942, %v3934
        %v4167 = vpack.c.b16 %v3943, %v3935
        %v4168 = vpack.c.b16 %v3944, %v3936
        %v4169 = vpack.c.b16 %v3945, %v3937
        %v4170 = vpack.c.b16 %v3946, %v3938
        %v4171 = vpack.c.b16 %v3955, %v3947
        %v4172 = vpack.c.b16 %v3956, %v3948
        %v4173 = vpack.c.b16 %v3957, %v3949
        %v4174 = vpack.c.b16 %v3958, %v3950
        %v4175 = vpack.c.b16 %v3959, %v3951
        %v4176 = vpack.c.b16 %v3960, %v3952
        %v4177 = vpack.c.b16 %v3961, %v3953
        %v4178 = vpack.c.b16 %v3962, %v3954
        %v4179 = vpack.c.b16 %v3971, %v3963
        %v4180 = vpack.c.b16 %v3972, %v3964
        %v4181 = vpack.c.b16 %v3973, %v3965
        %v4182 = vpack.c.b16 %v3974, %v3966
        %v4183 = vpack.c.b16 %v3975, %v3967
        %v4184 = vpack.c.b16 %v3976, %v3968
        %v4185 = vpack.c.b16 %v3977, %v3969
        %v4186 = vpack.c.b16 %v3978, %v3970
        %v4187 = vpack.c.b16 %v3987, %v3979
        %v4188 = vpack.c.b16 %v3988, %v3980
        %v4189 = vpack.c.b16 %v3989, %v3981
        %v4190 = vpack.c.b16 %v3990, %v3982
        %v4191 = vpack.c.b16 %v3991, %v3983
        %v4192 = vpack.c.b16 %v3992, %v3984
        %v4193 = vpack.c.b16 %v3993, %v3985
        %v4194 = vpack.c.b16 %v3994, %v3986
        %v4195 = vpack.c.b16 %v4003, %v3995
        %v4196 = vpack.c.b16 %v4004, %v3996
        %v4197 = vpack.c.b16 %v4005, %v3997
        %v4198 = vpack.c.b16 %v4006, %v3998
        %v4199 = vpack.c.b16 %v4007, %v3999
        %v4200 = vpack.c.b16 %v4008, %v4000
        %v4201 = vpack.c.b16 %v4009, %v4001
        %v4202 = vpack.c.b16 %v4010, %v4002
        %v4203 = vpack.c.b16 %v4019, %v4011
        %v4204 = vpack.c.b16 %v4020, %v4012
        %v4205 = vpack.c.b16 %v4021, %v4013
        %v4206 = vpack.c.b16 %v4022, %v4014
        %v4207 = vpack.c.b16 %v4023, %v4015
        %v4208 = vpack.c.b16 %v4024, %v4016
        %v4209 = vpack.c.b16 %v4025, %v4017
        %v4210 = vpack.c.b16 %v4026, %v4018
        %v4211 = vpack.c.b16 %v4035, %v4027
        %v4212 = vpack.c.b16 %v4036, %v4028
        %v4213 = vpack.c.b16 %v4037, %v4029
        %v4214 = vpack.c.b16 %v4038, %v4030
        %v4215 = vpack.c.b16 %v4039, %v4031
        %v4216 = vpack.c.b16 %v4040, %v4032
        %v4217 = vpack.c.b16 %v4041, %v4033
        %v4218 = vpack.c.b16 %v4042, %v4034
        %v4219 = vpack.c.b16 %v4051, %v4043
        %v4220 = vpack.c.b16 %v4052, %v4044
        %v4221 = vpack.c.b16 %v4053, %v4045
        %v4222 = vpack.c.b16 %v4054, %v4046
        %v4223 = vpack.c.b16 %v4055, %v4047
        %v4224 = vpack.c.b16 %v4056, %v4048
        %v4225 = vpack.c.b16 %v4057, %v4049
        %v4226 = vpack.c.b16 %v4058, %v4050
        %v4227 = vpack.c.b16 %v4067, %v4059
        %v4228 = vpack.c.b16 %v4068, %v4060
        %v4229 = vpack.c.b16 %v4069, %v4061
        %v4230 = vpack.c.b16 %v4070, %v4062
        %v4231 = vpack.c.b16 %v4071, %v4063
        %v4232 = vpack.c.b16 %v4072, %v4064
        %v4233 = vpack.c.b16 %v4073, %v4065
        %v4234 = vpack.c.b16 %v4074, %v4066
        %v4235 = vpack.c.b16 %v4083, %v4075
        %v4236 = vpack.c.b16 %v4084, %v4076
        %v4237 = vpack.c.b16 %v4085, %v4077
        %v4238 = vpack.c.b16 %v4086, %v4078
        %v4239 = vpack.c.b16 %v4087, %v4079
        %v4240 = vpack.c.b16 %v4088, %v4080
        %v4241 = vpack.c.b16 %v4089, %v4081
        %v4242 = vpack.c.b16 %v4090, %v4082
        %v4243 = vpack.c.b16 %v4099, %v4091
        %v4244 = vpack.c.b16 %v4100, %v4092
        %v4245 = vpack.c.b16 %v4101, %v4093
        %v4246 = vpack.c.b16 %v4102, %v4094
        %v4247 = vpack.c.b16 %v4103, %v4095
        %v4248 = vpack.c.b16 %v4104, %v4096
        %v4249 = vpack.c.b16 %v4105, %v4097
        %v4250 = vpack.c.b16 %v4106, %v4098
        %v4251 = vpack.c.b16 %v4115, %v4107
        %v4252 = vpack.c.b16 %v4116, %v4108
        %v4253 = vpack.c.b16 %v4117, %v4109
        %v4254 = vpack.c.b16 %v4118, %v4110
        %v4255 = vpack.c.b16 %v4119, %v4111
        %v4256 = vpack.c.b16 %v4120, %v4112
        %v4257 = vpack.c.b16 %v4121, %v4113
        %v4258 = vpack.c.b16 %v4122, %v4114
        %v4259 = vpack.c.b16 %v4131, %v4123
        %v4260 = vpack.c.b16 %v4132, %v4124
        %v4261 = vpack.c.b16 %v4133, %v4125
        %v4262 = vpack.c.b16 %v4134, %v4126
        %v4263 = vpack.c.b16 %v4135, %v4127
        %v4264 = vpack.c.b16 %v4136, %v4128
        %v4265 = vpack.c.b16 %v4137, %v4129
        %v4266 = vpack.c.b16 %v4138, %v4130
        %4395 = vmatpush.bf16.msra.mxu0 %v4195
        %4396 = vmatpush.bf16.msra.mxu0 %v4187
        %4397 = vmatpush.bf16.msra.mxu0 %v4179
        %4398 = vmatpush.bf16.msra.mxu0 %v4171
        %4399 = vmatpush.bf16.msra.mxu0 %v4163
        %4400 = vmatpush.bf16.msra.mxu0 %v4155
        %4401 = vmatpush.bf16.msra.mxu0 %v4147
        %4402 = vmatpush.bf16.msra.mxu0 %v4139
        %4403 = vmatmul.bf16.gmra.mxu0 %v3625
        %v4404 = vpop.f32.mrf.mxu0
        %v4405 = vadd.f32 0.0, %v4404
        %v4406 = vpop.f32.mrf.mxu0
        %v4407 = vadd.f32 0.0, %v4406
        %4408 = vdwg.mxu0
        %4409 = vmatpush.bf16.msra.mxu0 %v4259
        %4410 = vmatpush.bf16.msra.mxu0 %v4251
        %4411 = vmatpush.bf16.msra.mxu0 %v4243
        %4412 = vmatpush.bf16.msra.mxu0 %v4235
        %4413 = vmatpush.bf16.msra.mxu0 %v4227
        %4414 = vmatpush.bf16.msra.mxu0 %v4219
        %4415 = vmatpush.bf16.msra.mxu0 %v4211
        %4416 = vmatpush.bf16.msra.mxu0 %v4203
        %4417 = vmatmul.bf16.gmra.mxu0 %v3626
        %v4418 = vpop.f32.mrf.mxu0
        %v4419 = vadd.f32 %v4405, %v4418
        %v4420 = vpop.f32.mrf.mxu0
        %v4421 = vadd.f32 %v4407, %v4420
        %4422 = vdwg.mxu0
        %4423 = vmatpush.bf16.msra.mxu0 %v4196
        %4424 = vmatpush.bf16.msra.mxu0 %v4188
        %4425 = vmatpush.bf16.msra.mxu0 %v4180
        %4426 = vmatpush.bf16.msra.mxu0 %v4172
        %4427 = vmatpush.bf16.msra.mxu0 %v4164
        %4428 = vmatpush.bf16.msra.mxu0 %v4156
        %4429 = vmatpush.bf16.msra.mxu0 %v4148
        %4430 = vmatpush.bf16.msra.mxu0 %v4140
        %4431 = vmatmul.bf16.gmra.mxu0 %v3625
        %v4432 = vpop.f32.mrf.mxu0
        %v4433 = vadd.f32 0.0, %v4432
        %v4434 = vpop.f32.mrf.mxu0
        %v4435 = vadd.f32 0.0, %v4434
        %4436 = vdwg.mxu0
        %4437 = vmatpush.bf16.msra.mxu0 %v4260
        %4438 = vmatpush.bf16.msra.mxu0 %v4252
        %4439 = vmatpush.bf16.msra.mxu0 %v4244
        %4440 = vmatpush.bf16.msra.mxu0 %v4236
        %4441 = vmatpush.bf16.msra.mxu0 %v4228
        %4442 = vmatpush.bf16.msra.mxu0 %v4220
        %4443 = vmatpush.bf16.msra.mxu0 %v4212
        %4444 = vmatpush.bf16.msra.mxu0 %v4204
        %4445 = vmatmul.bf16.gmra.mxu0 %v3626
        %v4446 = vpop.f32.mrf.mxu0
        %v4447 = vadd.f32 %v4433, %v4446
        %v4448 = vpop.f32.mrf.mxu0
        %v4449 = vadd.f32 %v4435, %v4448
        %4450 = vdwg.mxu0
        %4451 = vmatpush.bf16.msra.mxu0 %v4197
        %4452 = vmatpush.bf16.msra.mxu0 %v4189
        %4453 = vmatpush.bf16.msra.mxu0 %v4181
        %4454 = vmatpush.bf16.msra.mxu0 %v4173
        %4455 = vmatpush.bf16.msra.mxu0 %v4165
        %4456 = vmatpush.bf16.msra.mxu0 %v4157
        %4457 = vmatpush.bf16.msra.mxu0 %v4149
        %4458 = vmatpush.bf16.msra.mxu0 %v4141
        %4459 = vmatmul.bf16.gmra.mxu0 %v3625
        %v4460 = vpop.f32.mrf.mxu0
        %v4461 = vadd.f32 0.0, %v4460
        %v4462 = vpop.f32.mrf.mxu0
        %v4463 = vadd.f32 0.0, %v4462
        %4464 = vdwg.mxu0
        %4465 = vmatpush.bf16.msra.mxu0 %v4261
        %4466 = vmatpush.bf16.msra.mxu0 %v4253
        %4467 = vmatpush.bf16.msra.mxu0 %v4245
        %4468 = vmatpush.bf16.msra.mxu0 %v4237
        %4469 = vmatpush.bf16.msra.mxu0 %v4229
        %4470 = vmatpush.bf16.msra.mxu0 %v4221
        %4471 = vmatpush.bf16.msra.mxu0 %v4213
        %4472 = vmatpush.bf16.msra.mxu0 %v4205
        %4473 = vmatmul.bf16.gmra.mxu0 %v3626
        %v4474 = vpop.f32.mrf.mxu0
        %v4475 = vadd.f32 %v4461, %v4474
        %v4476 = vpop.f32.mrf.mxu0
        %v4477 = vadd.f32 %v4463, %v4476
        %4478 = vdwg.mxu0
        %4479 = vmatpush.bf16.msra.mxu0 %v4198
        %4480 = vmatpush.bf16.msra.mxu0 %v4190
        %4481 = vmatpush.bf16.msra.mxu0 %v4182
        %4482 = vmatpush.bf16.msra.mxu0 %v4174
        %4483 = vmatpush.bf16.msra.mxu0 %v4166
        %4484 = vmatpush.bf16.msra.mxu0 %v4158
        %4485 = vmatpush.bf16.msra.mxu0 %v4150
        %4486 = vmatpush.bf16.msra.mxu0 %v4142
        %4487 = vmatmul.bf16.gmra.mxu0 %v3625
        %v4488 = vpop.f32.mrf.mxu0
        %v4489 = vadd.f32 0.0, %v4488
        %v4490 = vpop.f32.mrf.mxu0
        %v4491 = vadd.f32 0.0, %v4490
        %4492 = vdwg.mxu0
        %4493 = vmatpush.bf16.msra.mxu0 %v4262
        %4494 = vmatpush.bf16.msra.mxu0 %v4254
        %4495 = vmatpush.bf16.msra.mxu0 %v4246
        %4496 = vmatpush.bf16.msra.mxu0 %v4238
        %4497 = vmatpush.bf16.msra.mxu0 %v4230
        %4498 = vmatpush.bf16.msra.mxu0 %v4222
        %4499 = vmatpush.bf16.msra.mxu0 %v4214
        %4500 = vmatpush.bf16.msra.mxu0 %v4206
        %4501 = vmatmul.bf16.gmra.mxu0 %v3626
        %v4502 = vpop.f32.mrf.mxu0
        %v4503 = vadd.f32 %v4489, %v4502
        %v4504 = vpop.f32.mrf.mxu0
        %v4505 = vadd.f32 %v4491, %v4504
        %4506 = vdwg.mxu0
        %4507 = vmatpush.bf16.msra.mxu0 %v4199
        %4508 = vmatpush.bf16.msra.mxu0 %v4191
        %4509 = vmatpush.bf16.msra.mxu0 %v4183
        %4510 = vmatpush.bf16.msra.mxu0 %v4175
        %4511 = vmatpush.bf16.msra.mxu0 %v4167
        %4512 = vmatpush.bf16.msra.mxu0 %v4159
        %4513 = vmatpush.bf16.msra.mxu0 %v4151
        %4514 = vmatpush.bf16.msra.mxu0 %v4143
        %4515 = vmatmul.bf16.gmra.mxu0 %v3625
        %v4516 = vpop.f32.mrf.mxu0
        %v4517 = vadd.f32 0.0, %v4516
        %v4518 = vpop.f32.mrf.mxu0
        %v4519 = vadd.f32 0.0, %v4518
        %4520 = vdwg.mxu0
        %4521 = vmatpush.bf16.msra.mxu0 %v4263
        %4522 = vmatpush.bf16.msra.mxu0 %v4255
        %4523 = vmatpush.bf16.msra.mxu0 %v4247
        %4524 = vmatpush.bf16.msra.mxu0 %v4239
        %4525 = vmatpush.bf16.msra.mxu0 %v4231
        %4526 = vmatpush.bf16.msra.mxu0 %v4223
        %4527 = vmatpush.bf16.msra.mxu0 %v4215
        %4528 = vmatpush.bf16.msra.mxu0 %v4207
        %4529 = vmatmul.bf16.gmra.mxu0 %v3626
        %v4530 = vpop.f32.mrf.mxu0
        %v4531 = vadd.f32 %v4517, %v4530
        %v4532 = vpop.f32.mrf.mxu0
        %v4533 = vadd.f32 %v4519, %v4532
        %4534 = vdwg.mxu0
        %4535 = vmatpush.bf16.msra.mxu0 %v4200
        %4536 = vmatpush.bf16.msra.mxu0 %v4192
        %4537 = vmatpush.bf16.msra.mxu0 %v4184
        %4538 = vmatpush.bf16.msra.mxu0 %v4176
        %4539 = vmatpush.bf16.msra.mxu0 %v4168
        %4540 = vmatpush.bf16.msra.mxu0 %v4160
        %4541 = vmatpush.bf16.msra.mxu0 %v4152
        %4542 = vmatpush.bf16.msra.mxu0 %v4144
        %4543 = vmatmul.bf16.gmra.mxu0 %v3625
        %v4544 = vpop.f32.mrf.mxu0
        %v4545 = vadd.f32 0.0, %v4544
        %v4546 = vpop.f32.mrf.mxu0
        %v4547 = vadd.f32 0.0, %v4546
        %4548 = vdwg.mxu0
        %4549 = vmatpush.bf16.msra.mxu0 %v4264
        %4550 = vmatpush.bf16.msra.mxu0 %v4256
        %4551 = vmatpush.bf16.msra.mxu0 %v4248
        %4552 = vmatpush.bf16.msra.mxu0 %v4240
        %4553 = vmatpush.bf16.msra.mxu0 %v4232
        %4554 = vmatpush.bf16.msra.mxu0 %v4224
        %4555 = vmatpush.bf16.msra.mxu0 %v4216
        %4556 = vmatpush.bf16.msra.mxu0 %v4208
        %4557 = vmatmul.bf16.gmra.mxu0 %v3626
        %v4558 = vpop.f32.mrf.mxu0
        %v4559 = vadd.f32 %v4545, %v4558
        %v4560 = vpop.f32.mrf.mxu0
        %v4561 = vadd.f32 %v4547, %v4560
        %4562 = vdwg.mxu0
        %4563 = vmatpush.bf16.msra.mxu0 %v4201
        %4564 = vmatpush.bf16.msra.mxu0 %v4193
        %4565 = vmatpush.bf16.msra.mxu0 %v4185
        %4566 = vmatpush.bf16.msra.mxu0 %v4177
        %4567 = vmatpush.bf16.msra.mxu0 %v4169
        %4568 = vmatpush.bf16.msra.mxu0 %v4161
        %4569 = vmatpush.bf16.msra.mxu0 %v4153
        %4570 = vmatpush.bf16.msra.mxu0 %v4145
        %4571 = vmatmul.bf16.gmra.mxu0 %v3625
        %v4572 = vpop.f32.mrf.mxu0
        %v4573 = vadd.f32 0.0, %v4572
        %v4574 = vpop.f32.mrf.mxu0
        %v4575 = vadd.f32 0.0, %v4574
        %4576 = vdwg.mxu0
        %4577 = vmatpush.bf16.msra.mxu0 %v4265
        %4578 = vmatpush.bf16.msra.mxu0 %v4257
        %4579 = vmatpush.bf16.msra.mxu0 %v4249
        %4580 = vmatpush.bf16.msra.mxu0 %v4241
        %4581 = vmatpush.bf16.msra.mxu0 %v4233
        %4582 = vmatpush.bf16.msra.mxu0 %v4225
        %4583 = vmatpush.bf16.msra.mxu0 %v4217
        %4584 = vmatpush.bf16.msra.mxu0 %v4209
        %4585 = vmatmul.bf16.gmra.mxu0 %v3626
        %v4586 = vpop.f32.mrf.mxu0
        %v4587 = vadd.f32 %v4573, %v4586
        %v4588 = vpop.f32.mrf.mxu0
        %v4589 = vadd.f32 %v4575, %v4588
        %4590 = vdwg.mxu0
        %4591 = vmatpush.bf16.msra.mxu0 %v4202
        %4592 = vmatpush.bf16.msra.mxu0 %v4194
        %4593 = vmatpush.bf16.msra.mxu0 %v4186
        %4594 = vmatpush.bf16.msra.mxu0 %v4178
        %4595 = vmatpush.bf16.msra.mxu0 %v4170
        %4596 = vmatpush.bf16.msra.mxu0 %v4162
        %4597 = vmatpush.bf16.msra.mxu0 %v4154
        %4598 = vmatpush.bf16.msra.mxu0 %v4146
        %4599 = vmatmul.bf16.gmra.mxu0 %v3625
        %v4600 = vpop.f32.mrf.mxu0
        %v4601 = vadd.f32 0.0, %v4600
        %v4602 = vpop.f32.mrf.mxu0
        %v4603 = vadd.f32 0.0, %v4602
        %4604 = vdwg.mxu0
        %4605 = vmatpush.bf16.msra.mxu0 %v4266
        %4606 = vmatpush.bf16.msra.mxu0 %v4258
        %4607 = vmatpush.bf16.msra.mxu0 %v4250
        %4608 = vmatpush.bf16.msra.mxu0 %v4242
        %4609 = vmatpush.bf16.msra.mxu0 %v4234
        %4610 = vmatpush.bf16.msra.mxu0 %v4226
        %4611 = vmatpush.bf16.msra.mxu0 %v4218
        %4612 = vmatpush.bf16.msra.mxu0 %v4210
        %4613 = vmatmul.bf16.gmra.mxu0 %v3626
        %v4614 = vpop.f32.mrf.mxu0
        %v4615 = vadd.f32 %v4601, %v4614
        %v4616 = vpop.f32.mrf.mxu0
        %v4617 = vadd.f32 %v4603, %v4616
        %4618 = vdwg.mxu0
        %v4619 = vld [vmem:[%s14] sm:$0xff]
        %v4620 = vld [vmem:[%s14 + $0x8] sm:$0xff]
        %v4621 = vld [vmem:[%s14 + $0x10] sm:$0xff]
        %v4622 = vld [vmem:[%s14 + $0x18] sm:$0xff]
        %s4623 = scalar_lea.vmem %s14, 32
        %v4624 = vld [vmem:[%s4623] sm:$0xff]
        %v4625 = vld [vmem:[%s4623 + $0x8] sm:$0xff]
        %v4626 = vld [vmem:[%s4623 + $0x10] sm:$0xff]
        %v4627 = vld [vmem:[%s4623 + $0x18] sm:$0xff]
        %vm4628 = vcmask 130048
        %v4630 = vsel %vm4628, %v4624, 0
        %v4633 = vsel %vm4628, %v4625, 0
        %v4636 = vsel %vm4628, %v4626, 0
        %v4639 = vsel %vm4628, %v4627, 0
        %4641 = vmatpush.msra.mxu0 0.0
        %4642 = vmatpush.msra.mxu0 0.0
        %4643 = vmatpush.msra.mxu0 0.0
        %4644 = vmatpush.msra.mxu0 0.0
        %4645 = vmatpush.msra.mxu0 0.0
        %4646 = vmatpush.msra.mxu0 0.0
        %4647 = vmatpush.msra.mxu0 0.0
        %4648 = vmatpush.msra.mxu0 0.0
        %4649 = vmatpush.msra.mxu0 0.0
        %4650 = vmatpush.msra.mxu0 0.0
        %4651 = vmatpush.msra.mxu0 0.0
        %4652 = vmatpush.msra.mxu0 0.0
        %4653 = vmatpush.msra.mxu0 0.0
        %4654 = vmatpush.msra.mxu0 0.0
        %4655 = vmatpush.msra.mxu0 %v4477
        %4656 = vmatpush.msra.mxu0 %v4475
        %4657 = vmatmul.f32.gmra.mxu0 %v4630
        %v4658 = vpop.f32.mrf.mxu0
        %v4659 = vadd.f32 0.0, %v4658
        %4660 = vmatmul.f32.gmra.mxu0 %v4633
        %v4661 = vpop.f32.mrf.mxu0
        %v4662 = vadd.f32 0.0, %v4661
        %4663 = vmatmul.f32.gmra.mxu0 %v4636
        %v4664 = vpop.f32.mrf.mxu0
        %v4665 = vadd.f32 0.0, %v4664
        %4666 = vmatmul.f32.gmra.mxu0 %v4639
        %v4667 = vpop.f32.mrf.mxu0
        %v4668 = vadd.f32 0.0, %v4667
        %4669 = vdwg.mxu0
        %4670 = vmatpush.msra.mxu0 0.0
        %4671 = vmatpush.msra.mxu0 0.0
        %4672 = vmatpush.msra.mxu0 0.0
        %4673 = vmatpush.msra.mxu0 0.0
        %4674 = vmatpush.msra.mxu0 0.0
        %4675 = vmatpush.msra.mxu0 0.0
        %4676 = vmatpush.msra.mxu0 0.0
        %4677 = vmatpush.msra.mxu0 0.0
        %4678 = vmatpush.msra.mxu0 0.0
        %4679 = vmatpush.msra.mxu0 0.0
        %4680 = vmatpush.msra.mxu0 0.0
        %4681 = vmatpush.msra.mxu0 0.0
        %4682 = vmatpush.msra.mxu0 0.0
        %4683 = vmatpush.msra.mxu0 0.0
        %4684 = vmatpush.msra.mxu0 %v4505
        %4685 = vmatpush.msra.mxu0 %v4503
        %4686 = vmatmul.f32.gmra.mxu0 %v4630
        %v4687 = vpop.f32.mrf.mxu0
        %v4688 = vadd.f32 0.0, %v4687
        %4689 = vmatmul.f32.gmra.mxu0 %v4633
        %v4690 = vpop.f32.mrf.mxu0
        %v4691 = vadd.f32 0.0, %v4690
        %4692 = vmatmul.f32.gmra.mxu0 %v4636
        %v4693 = vpop.f32.mrf.mxu0
        %v4694 = vadd.f32 0.0, %v4693
        %4695 = vmatmul.f32.gmra.mxu0 %v4639
        %v4696 = vpop.f32.mrf.mxu0
        %v4697 = vadd.f32 0.0, %v4696
        %4698 = vdwg.mxu0
        %v4700 = vsel %vm4628, %v4619, 0
        %v4703 = vsel %vm4628, %v4620, 0
        %v4706 = vsel %vm4628, %v4621, 0
        %v4709 = vsel %vm4628, %v4622, 0
        %4711 = vmatpush.msra.mxu0 0.0
        %4712 = vmatpush.msra.mxu0 0.0
        %4713 = vmatpush.msra.mxu0 0.0
        %4714 = vmatpush.msra.mxu0 0.0
        %4715 = vmatpush.msra.mxu0 0.0
        %4716 = vmatpush.msra.mxu0 0.0
        %4717 = vmatpush.msra.mxu0 0.0
        %4718 = vmatpush.msra.mxu0 0.0
        %4719 = vmatpush.msra.mxu0 0.0
        %4720 = vmatpush.msra.mxu0 0.0
        %4721 = vmatpush.msra.mxu0 0.0
        %4722 = vmatpush.msra.mxu0 0.0
        %4723 = vmatpush.msra.mxu0 0.0
        %4724 = vmatpush.msra.mxu0 0.0
        %4725 = vmatpush.msra.mxu0 %v4421
        %4726 = vmatpush.msra.mxu0 %v4419
        %4727 = vmatmul.f32.gmra.mxu0 %v4700
        %v4728 = vpop.f32.mrf.mxu0
        %v4729 = vadd.f32 %v4659, %v4728
        %4730 = vmatmul.f32.gmra.mxu0 %v4703
        %v4731 = vpop.f32.mrf.mxu0
        %v4732 = vadd.f32 %v4662, %v4731
        %4733 = vmatmul.f32.gmra.mxu0 %v4706
        %v4734 = vpop.f32.mrf.mxu0
        %v4735 = vadd.f32 %v4665, %v4734
        %4736 = vmatmul.f32.gmra.mxu0 %v4709
        %v4737 = vpop.f32.mrf.mxu0
        %v4738 = vadd.f32 %v4668, %v4737
        %4739 = vdwg.mxu0
        %4740 = vmatpush.msra.mxu0 0.0
        %4741 = vmatpush.msra.mxu0 0.0
        %4742 = vmatpush.msra.mxu0 0.0
        %4743 = vmatpush.msra.mxu0 0.0
        %4744 = vmatpush.msra.mxu0 0.0
        %4745 = vmatpush.msra.mxu0 0.0
        %4746 = vmatpush.msra.mxu0 0.0
        %4747 = vmatpush.msra.mxu0 0.0
        %4748 = vmatpush.msra.mxu0 0.0
        %4749 = vmatpush.msra.mxu0 0.0
        %4750 = vmatpush.msra.mxu0 0.0
        %4751 = vmatpush.msra.mxu0 0.0
        %4752 = vmatpush.msra.mxu0 0.0
        %4753 = vmatpush.msra.mxu0 0.0
        %4754 = vmatpush.msra.mxu0 %v4449
        %4755 = vmatpush.msra.mxu0 %v4447
        %4756 = vmatmul.f32.gmra.mxu0 %v4700
        %v4757 = vpop.f32.mrf.mxu0
        %v4758 = vadd.f32 %v4688, %v4757
        %4759 = vmatmul.f32.gmra.mxu0 %v4703
        %v4760 = vpop.f32.mrf.mxu0
        %v4761 = vadd.f32 %v4691, %v4760
        %4762 = vmatmul.f32.gmra.mxu0 %v4706
        %v4763 = vpop.f32.mrf.mxu0
        %v4764 = vadd.f32 %v4694, %v4763
        %4765 = vmatmul.f32.gmra.mxu0 %v4709
        %v4766 = vpop.f32.mrf.mxu0
        %v4767 = vadd.f32 %v4697, %v4766
        %4768 = vdwg.mxu0
        %s4769 = scalar_lea.vmem %s14, 64
        %v4770 = vld [vmem:[%s4769] sm:$0xff]
        %v4771 = vld [vmem:[%s4769 + $0x8] sm:$0xff]
        %v4772 = vld [vmem:[%s4769 + $0x10] sm:$0xff]
        %v4773 = vld [vmem:[%s4769 + $0x18] sm:$0xff]
        %v4775 = vsel %vm4628, %v4770, 0
        %v4778 = vsel %vm4628, %v4771, 0
        %v4781 = vsel %vm4628, %v4772, 0
        %v4784 = vsel %vm4628, %v4773, 0
        %4786 = vmatpush.msra.mxu0 0.0
        %4787 = vmatpush.msra.mxu0 0.0
        %4788 = vmatpush.msra.mxu0 0.0
        %4789 = vmatpush.msra.mxu0 0.0
        %4790 = vmatpush.msra.mxu0 0.0
        %4791 = vmatpush.msra.mxu0 0.0
        %4792 = vmatpush.msra.mxu0 0.0
        %4793 = vmatpush.msra.mxu0 0.0
        %4794 = vmatpush.msra.mxu0 0.0
        %4795 = vmatpush.msra.mxu0 0.0
        %4796 = vmatpush.msra.mxu0 0.0
        %4797 = vmatpush.msra.mxu0 0.0
        %4798 = vmatpush.msra.mxu0 0.0
        %4799 = vmatpush.msra.mxu0 0.0
        %4800 = vmatpush.msra.mxu0 %v4533
        %4801 = vmatpush.msra.mxu0 %v4531
        %4802 = vmatmul.f32.gmra.mxu0 %v4775
        %v4803 = vpop.f32.mrf.mxu0
        %v4804 = vadd.f32 0.0, %v4803
        %4805 = vmatmul.f32.gmra.mxu0 %v4778
        %v4806 = vpop.f32.mrf.mxu0
        %v4807 = vadd.f32 0.0, %v4806
        %4808 = vmatmul.f32.gmra.mxu0 %v4781
        %v4809 = vpop.f32.mrf.mxu0
        %v4810 = vadd.f32 0.0, %v4809
        %4811 = vmatmul.f32.gmra.mxu0 %v4784
        %v4812 = vpop.f32.mrf.mxu0
        %v4813 = vadd.f32 0.0, %v4812
        %4814 = vdwg.mxu0
        %4815 = vmatpush.msra.mxu0 0.0
        %4816 = vmatpush.msra.mxu0 0.0
        %4817 = vmatpush.msra.mxu0 0.0
        %4818 = vmatpush.msra.mxu0 0.0
        %4819 = vmatpush.msra.mxu0 0.0
        %4820 = vmatpush.msra.mxu0 0.0
        %4821 = vmatpush.msra.mxu0 0.0
        %4822 = vmatpush.msra.mxu0 0.0
        %4823 = vmatpush.msra.mxu0 0.0
        %4824 = vmatpush.msra.mxu0 0.0
        %4825 = vmatpush.msra.mxu0 0.0
        %4826 = vmatpush.msra.mxu0 0.0
        %4827 = vmatpush.msra.mxu0 0.0
        %4828 = vmatpush.msra.mxu0 0.0
        %4829 = vmatpush.msra.mxu0 %v4561
        %4830 = vmatpush.msra.mxu0 %v4559
        %4831 = vmatmul.f32.gmra.mxu0 %v4775
        %v4832 = vpop.f32.mrf.mxu0
        %v4833 = vadd.f32 0.0, %v4832
        %4834 = vmatmul.f32.gmra.mxu0 %v4778
        %v4835 = vpop.f32.mrf.mxu0
        %v4836 = vadd.f32 0.0, %v4835
        %4837 = vmatmul.f32.gmra.mxu0 %v4781
        %v4838 = vpop.f32.mrf.mxu0
        %v4839 = vadd.f32 0.0, %v4838
        %4840 = vmatmul.f32.gmra.mxu0 %v4784
        %v4841 = vpop.f32.mrf.mxu0
        %v4842 = vadd.f32 0.0, %v4841
        %4843 = vdwg.mxu0
        %v4844 = vadd.f32 %v4729, %v4804
        %v4845 = vadd.f32 %v4758, %v4833
        %v4846 = vadd.f32 %v4732, %v4807
        %v4847 = vadd.f32 %v4761, %v4836
        %v4848 = vadd.f32 %v4735, %v4810
        %v4849 = vadd.f32 %v4764, %v4839
        %v4850 = vadd.f32 %v4738, %v4813
        %v4851 = vadd.f32 %v4767, %v4842
        %s4852 = scalar_lea.vmem %s14, 96
        %v4853 = vld [vmem:[%s4852] sm:$0xff]
        %v4854 = vld [vmem:[%s4852 + $0x8] sm:$0xff]
        %v4855 = vld [vmem:[%s4852 + $0x10] sm:$0xff]
        %v4856 = vld [vmem:[%s4852 + $0x18] sm:$0xff]
        %v4858 = vsel %vm4628, %v4853, 0
        %v4861 = vsel %vm4628, %v4854, 0
        %v4864 = vsel %vm4628, %v4855, 0
        %v4867 = vsel %vm4628, %v4856, 0
        %4869 = vmatpush.msra.mxu0 0.0
        %4870 = vmatpush.msra.mxu0 0.0
        %4871 = vmatpush.msra.mxu0 0.0
        %4872 = vmatpush.msra.mxu0 0.0
        %4873 = vmatpush.msra.mxu0 0.0
        %4874 = vmatpush.msra.mxu0 0.0
        %4875 = vmatpush.msra.mxu0 0.0
        %4876 = vmatpush.msra.mxu0 0.0
        %4877 = vmatpush.msra.mxu0 0.0
        %4878 = vmatpush.msra.mxu0 0.0
        %4879 = vmatpush.msra.mxu0 0.0
        %4880 = vmatpush.msra.mxu0 0.0
        %4881 = vmatpush.msra.mxu0 0.0
        %4882 = vmatpush.msra.mxu0 0.0
        %4883 = vmatpush.msra.mxu0 %v4589
        %4884 = vmatpush.msra.mxu0 %v4587
        %4885 = vmatmul.f32.gmra.mxu0 %v4858
        %v4886 = vpop.f32.mrf.mxu0
        %v4887 = vadd.f32 0.0, %v4886
        %4888 = vmatmul.f32.gmra.mxu0 %v4861
        %v4889 = vpop.f32.mrf.mxu0
        %v4890 = vadd.f32 0.0, %v4889
        %4891 = vmatmul.f32.gmra.mxu0 %v4864
        %v4892 = vpop.f32.mrf.mxu0
        %v4893 = vadd.f32 0.0, %v4892
        %4894 = vmatmul.f32.gmra.mxu0 %v4867
        %v4895 = vpop.f32.mrf.mxu0
        %v4896 = vadd.f32 0.0, %v4895
        %4897 = vdwg.mxu0
        %4898 = vmatpush.msra.mxu0 0.0
        %4899 = vmatpush.msra.mxu0 0.0
        %4900 = vmatpush.msra.mxu0 0.0
        %4901 = vmatpush.msra.mxu0 0.0
        %4902 = vmatpush.msra.mxu0 0.0
        %4903 = vmatpush.msra.mxu0 0.0
        %4904 = vmatpush.msra.mxu0 0.0
        %4905 = vmatpush.msra.mxu0 0.0
        %4906 = vmatpush.msra.mxu0 0.0
        %4907 = vmatpush.msra.mxu0 0.0
        %4908 = vmatpush.msra.mxu0 0.0
        %4909 = vmatpush.msra.mxu0 0.0
        %4910 = vmatpush.msra.mxu0 0.0
        %4911 = vmatpush.msra.mxu0 0.0
        %4912 = vmatpush.msra.mxu0 %v4617
        %4913 = vmatpush.msra.mxu0 %v4615
        %4914 = vmatmul.f32.gmra.mxu0 %v4858
        %v4915 = vpop.f32.mrf.mxu0
        %v4916 = vadd.f32 0.0, %v4915
        %4917 = vmatmul.f32.gmra.mxu0 %v4861
        %v4918 = vpop.f32.mrf.mxu0
        %v4919 = vadd.f32 0.0, %v4918
        %4920 = vmatmul.f32.gmra.mxu0 %v4864
        %v4921 = vpop.f32.mrf.mxu0
        %v4922 = vadd.f32 0.0, %v4921
        %4923 = vmatmul.f32.gmra.mxu0 %v4867
        %v4924 = vpop.f32.mrf.mxu0
        %v4925 = vadd.f32 0.0, %v4924
        %4926 = vdwg.mxu0
        %v4927 = vadd.f32 %v4844, %v4887
        %v4928 = vadd.f32 %v4845, %v4916
        %v4929 = vadd.f32 %v4846, %v4890
        %v4930 = vadd.f32 %v4847, %v4919
        %v4931 = vadd.f32 %v4848, %v4893
        %v4932 = vadd.f32 %v4849, %v4922
        %v4933 = vadd.f32 %v4850, %v4896
        %v4934 = vadd.f32 %v4851, %v4925
        %v4935 = vld [vmem:[%s13] sm:$0x3]
        %v4937 = vperm.slane %v4935, 0
        %v4938 = vperm.slane %v4935, 1
        %v4941 = vadd.f32 %v4927, %v4937
        %v4942 = vadd.f32 %v4928, %v4938
        %v4943 = vadd.f32 %v4929, %v4937
        %v4944 = vadd.f32 %v4930, %v4938
        %v4945 = vadd.f32 %v4931, %v4937
        %v4946 = vadd.f32 %v4932, %v4938
        %v4947 = vadd.f32 %v4933, %v4937
        %v4948 = vadd.f32 %v4934, %v4938
        %vm4949 = vcmp.ge.f32.partialorder %v4941, 0.0
        %vm4950 = vcmp.ge.f32.partialorder %v4942, 0.0
        %vm4951 = vcmp.ge.f32.partialorder %v4943, 0.0
        %vm4952 = vcmp.ge.f32.partialorder %v4944, 0.0
        %vm4953 = vcmp.ge.f32.partialorder %v4945, 0.0
        %vm4954 = vcmp.ge.f32.partialorder %v4946, 0.0
        %vm4955 = vcmp.ge.f32.partialorder %v4947, 0.0
        %vm4956 = vcmp.ge.f32.partialorder %v4948, 0.0
        %v4957 = vmul.f32 %v4941, 0.01
        %v4958 = vmul.f32 %v4942, 0.01
        %v4959 = vmul.f32 %v4943, 0.01
        %v4960 = vmul.f32 %v4944, 0.01
        %v4961 = vmul.f32 %v4945, 0.01
        %v4962 = vmul.f32 %v4946, 0.01
        %v4963 = vmul.f32 %v4947, 0.01
        %v4964 = vmul.f32 %v4948, 0.01
        %v4965 = vsel %vm4949, %v4941, %v4957
        %v4966 = vsel %vm4950, %v4942, %v4958
        %v4967 = vsel %vm4951, %v4943, %v4959
        %v4968 = vsel %vm4952, %v4944, %v4960
        %v4969 = vsel %vm4953, %v4945, %v4961
        %v4970 = vsel %vm4954, %v4946, %v4962
        %v4971 = vsel %vm4955, %v4947, %v4963
        %v4972 = vsel %vm4956, %v4948, %v4964
        %v4973 = vpack.c.bf16 %v4967, %v4965
        %v4974 = vpack.c.bf16 %v4968, %v4966
        %v4975 = vpack.c.bf16 %v4971, %v4969
        %v4976 = vpack.c.bf16 %v4972, %v4970
        %v4977 = vld [vmem:[#allocation9] sm:$0xff]
        %v4978 = vld [vmem:[#allocation9 + $0x8] sm:$0xf]
        %v4979 = vld [vmem:[#allocation9 + $0xc] sm:$0xff]
        %v4980 = vld [vmem:[#allocation9 + $0x14] sm:$0xf]
        %v4981 = vld [vmem:[#allocation9 + $0x18] sm:$0xff]
        %v4982 = vld [vmem:[#allocation9 + $0x20] sm:$0xf]
        %v4983 = vld [vmem:[#allocation9 + $0x24] sm:$0xff]
        %v4984 = vld [vmem:[#allocation9 + $0x2c] sm:$0xf]
        %v4985 = vld [vmem:[#allocation9 + $0x30] sm:$0xff]
        %v4986 = vld [vmem:[#allocation9 + $0x38] sm:$0xf]
        %v4987 = vld [vmem:[#allocation9 + $0x3c] sm:$0xff]
        %v4988 = vld [vmem:[#allocation9 + $0x44] sm:$0xf]
        %v4989 = vld [vmem:[#allocation9 + $0x48] sm:$0xff]
        %v4990 = vld [vmem:[#allocation9 + $0x50] sm:$0xf]
        %v4991 = vld [vmem:[#allocation9 + $0x54] sm:$0xff]
        %v4992 = vld [vmem:[#allocation9 + $0x5c] sm:$0xf]
        %v4993 = vld [vmem:[#allocation9 + $0x60] sm:$0xff]
        %v4994 = vld [vmem:[#allocation9 + $0x68] sm:$0xf]
        %v4995 = vld [vmem:[#allocation9 + $0x6c] sm:$0xff]
        %v4996 = vld [vmem:[#allocation9 + $0x74] sm:$0xf]
        %v4997 = vld [vmem:[#allocation9 + $0x78] sm:$0xff]
        %v4998 = vld [vmem:[#allocation9 + $0x80] sm:$0xf]
        %v4999 = vld [vmem:[#allocation9 + $0x84] sm:$0xff]
        %v5000 = vld [vmem:[#allocation9 + $0x8c] sm:$0xf]
        %v5001 = vld [vmem:[#allocation9 + $0x90] sm:$0xff]
        %v5002 = vld [vmem:[#allocation9 + $0x98] sm:$0xf]
        %v5003 = vld [vmem:[#allocation9 + $0x9c] sm:$0xff]
        %v5004 = vld [vmem:[#allocation9 + $0xa4] sm:$0xf]
        %v5005 = vld [vmem:[#allocation9 + $0xa8] sm:$0xff]
        %v5006 = vld [vmem:[#allocation9 + $0xb0] sm:$0xf]
        %v5007 = vld [vmem:[#allocation9 + $0xb4] sm:$0xff]
        %v5008 = vld [vmem:[#allocation9 + $0xbc] sm:$0xf]
        %v5009 = vld [vmem:[#allocation9 + $0xc0] sm:$0xff]
        %v5010 = vld [vmem:[#allocation9 + $0xc8] sm:$0xf]
        %v5011 = vld [vmem:[#allocation9 + $0xcc] sm:$0xff]
        %v5012 = vld [vmem:[#allocation9 + $0xd4] sm:$0xf]
        %v5013 = vld [vmem:[#allocation9 + $0xd8] sm:$0xff]
        %v5014 = vld [vmem:[#allocation9 + $0xe0] sm:$0xf]
        %v5015 = vld [vmem:[#allocation9 + $0xe4] sm:$0xff]
        %v5016 = vld [vmem:[#allocation9 + $0xec] sm:$0xf]
        %v5017 = vld [vmem:[#allocation9 + $0xf0] sm:$0xff]
        %v5018 = vld [vmem:[#allocation9 + $0xf8] sm:$0xf]
        %v5019 = vld [vmem:[#allocation9 + $0xfc] sm:$0xff]
        %v5020 = vld [vmem:[#allocation9 + $0x104] sm:$0xf]
        %v5021 = vld [vmem:[#allocation9 + $0x108] sm:$0xff]
        %v5022 = vld [vmem:[#allocation9 + $0x110] sm:$0xf]
        %v5023 = vld [vmem:[#allocation9 + $0x114] sm:$0xff]
        %v5024 = vld [vmem:[#allocation9 + $0x11c] sm:$0xf]
        %v5025 = vld [vmem:[#allocation9 + $0x120] sm:$0xff]
        %v5026 = vld [vmem:[#allocation9 + $0x128] sm:$0xf]
        %v5027 = vld [vmem:[#allocation9 + $0x12c] sm:$0xff]
        %v5028 = vld [vmem:[#allocation9 + $0x134] sm:$0xf]
        %v5029 = vld [vmem:[#allocation9 + $0x138] sm:$0xff]
        %v5030 = vld [vmem:[#allocation9 + $0x140] sm:$0xf]
        %v5031 = vld [vmem:[#allocation9 + $0x144] sm:$0xff]
        %v5032 = vld [vmem:[#allocation9 + $0x14c] sm:$0xf]
        %v5033 = vld [vmem:[#allocation9 + $0x150] sm:$0xff]
        %v5034 = vld [vmem:[#allocation9 + $0x158] sm:$0xf]
        %v5035 = vld [vmem:[#allocation9 + $0x15c] sm:$0xff]
        %v5036 = vld [vmem:[#allocation9 + $0x164] sm:$0xf]
        %v5037 = vld [vmem:[#allocation9 + $0x168] sm:$0xff]
        %v5038 = vld [vmem:[#allocation9 + $0x170] sm:$0xf]
        %v5039 = vld [vmem:[#allocation9 + $0x174] sm:$0xff]
        %v5040 = vld [vmem:[#allocation9 + $0x17c] sm:$0xf]
        %v5105 = vunpack.c.l.b16 %v4977
        %v5106 = vunpack.c.h.b16 %v4977
        %v5107 = vunpack.c.l.b16 %v4978
        %v5108 = vunpack.c.l.b16 %v4979
        %v5109 = vunpack.c.h.b16 %v4979
        %v5110 = vunpack.c.l.b16 %v4980
        %v5111 = vunpack.c.l.b16 %v4981
        %v5112 = vunpack.c.h.b16 %v4981
        %v5113 = vunpack.c.l.b16 %v4982
        %v5114 = vunpack.c.l.b16 %v4983
        %v5115 = vunpack.c.h.b16 %v4983
        %v5116 = vunpack.c.l.b16 %v4984
        %v5117 = vunpack.c.l.b16 %v4985
        %v5118 = vunpack.c.h.b16 %v4985
        %v5119 = vunpack.c.l.b16 %v4986
        %v5120 = vunpack.c.l.b16 %v4987
        %v5121 = vunpack.c.h.b16 %v4987
        %v5122 = vunpack.c.l.b16 %v4988
        %v5123 = vunpack.c.l.b16 %v4989
        %v5124 = vunpack.c.h.b16 %v4989
        %v5125 = vunpack.c.l.b16 %v4990
        %v5126 = vunpack.c.l.b16 %v4991
        %v5127 = vunpack.c.h.b16 %v4991
        %v5128 = vunpack.c.l.b16 %v4992
        %v5129 = vunpack.c.l.b16 %v4993
        %v5130 = vunpack.c.h.b16 %v4993
        %v5131 = vunpack.c.l.b16 %v4994
        %v5132 = vunpack.c.l.b16 %v4995
        %v5133 = vunpack.c.h.b16 %v4995
        %v5134 = vunpack.c.l.b16 %v4996
        %v5135 = vunpack.c.l.b16 %v4997
        %v5136 = vunpack.c.h.b16 %v4997
        %v5137 = vunpack.c.l.b16 %v4998
        %v5138 = vunpack.c.l.b16 %v4999
        %v5139 = vunpack.c.h.b16 %v4999
        %v5140 = vunpack.c.l.b16 %v5000
        %v5141 = vunpack.c.l.b16 %v5001
        %v5142 = vunpack.c.h.b16 %v5001
        %v5143 = vunpack.c.l.b16 %v5002
        %v5144 = vunpack.c.l.b16 %v5003
        %v5145 = vunpack.c.h.b16 %v5003
        %v5146 = vunpack.c.l.b16 %v5004
        %v5147 = vunpack.c.l.b16 %v5005
        %v5148 = vunpack.c.h.b16 %v5005
        %v5149 = vunpack.c.l.b16 %v5006
        %v5150 = vunpack.c.l.b16 %v5007
        %v5151 = vunpack.c.h.b16 %v5007
        %v5152 = vunpack.c.l.b16 %v5008
        %v5153 = vunpack.c.l.b16 %v5009
        %v5154 = vunpack.c.h.b16 %v5009
        %v5155 = vunpack.c.l.b16 %v5010
        %v5156 = vunpack.c.l.b16 %v5011
        %v5157 = vunpack.c.h.b16 %v5011
        %v5158 = vunpack.c.l.b16 %v5012
        %v5159 = vunpack.c.l.b16 %v5013
        %v5160 = vunpack.c.h.b16 %v5013
        %v5161 = vunpack.c.l.b16 %v5014
        %v5162 = vunpack.c.l.b16 %v5015
        %v5163 = vunpack.c.h.b16 %v5015
        %v5164 = vunpack.c.l.b16 %v5016
        %v5165 = vunpack.c.l.b16 %v5017
        %v5166 = vunpack.c.h.b16 %v5017
        %v5167 = vunpack.c.l.b16 %v5018
        %v5168 = vunpack.c.l.b16 %v5019
        %v5169 = vunpack.c.h.b16 %v5019
        %v5170 = vunpack.c.l.b16 %v5020
        %v5171 = vunpack.c.l.b16 %v5021
        %v5172 = vunpack.c.h.b16 %v5021
        %v5173 = vunpack.c.l.b16 %v5022
        %v5174 = vunpack.c.l.b16 %v5023
        %v5175 = vunpack.c.h.b16 %v5023
        %v5176 = vunpack.c.l.b16 %v5024
        %v5177 = vunpack.c.l.b16 %v5025
        %v5178 = vunpack.c.h.b16 %v5025
        %v5179 = vunpack.c.l.b16 %v5026
        %v5180 = vunpack.c.l.b16 %v5027
        %v5181 = vunpack.c.h.b16 %v5027
        %v5182 = vunpack.c.l.b16 %v5028
        %v5183 = vunpack.c.l.b16 %v5029
        %v5184 = vunpack.c.h.b16 %v5029
        %v5185 = vunpack.c.l.b16 %v5030
        %v5186 = vunpack.c.l.b16 %v5031
        %v5187 = vunpack.c.h.b16 %v5031
        %v5188 = vunpack.c.l.b16 %v5032
        %v5189 = vunpack.c.l.b16 %v5033
        %v5190 = vunpack.c.h.b16 %v5033
        %v5191 = vunpack.c.l.b16 %v5034
        %v5192 = vunpack.c.l.b16 %v5035
        %v5193 = vunpack.c.h.b16 %v5035
        %v5194 = vunpack.c.l.b16 %v5036
        %v5195 = vunpack.c.l.b16 %v5037
        %v5196 = vunpack.c.h.b16 %v5037
        %v5197 = vunpack.c.l.b16 %v5038
        %v5198 = vunpack.c.l.b16 %v5039
        %v5199 = vunpack.c.h.b16 %v5039
        %v5200 = vunpack.c.l.b16 %v5040
        %v5201 = vpack.c.b16 %v5108, %v5105
        %v5202 = vpack.c.b16 %v5109, %v5106
        %v5203 = vpack.c.b16 %v5110, %v5107
        %v5204 = vpack.c.b16 %v5114, %v5111
        %v5205 = vpack.c.b16 %v5115, %v5112
        %v5206 = vpack.c.b16 %v5116, %v5113
        %v5207 = vpack.c.b16 %v5120, %v5117
        %v5208 = vpack.c.b16 %v5121, %v5118
        %v5209 = vpack.c.b16 %v5122, %v5119
        %v5210 = vpack.c.b16 %v5126, %v5123
        %v5211 = vpack.c.b16 %v5127, %v5124
        %v5212 = vpack.c.b16 %v5128, %v5125
        %v5213 = vpack.c.b16 %v5132, %v5129
        %v5214 = vpack.c.b16 %v5133, %v5130
        %v5215 = vpack.c.b16 %v5134, %v5131
        %v5216 = vpack.c.b16 %v5138, %v5135
        %v5217 = vpack.c.b16 %v5139, %v5136
        %v5218 = vpack.c.b16 %v5140, %v5137
        %v5219 = vpack.c.b16 %v5144, %v5141
        %v5220 = vpack.c.b16 %v5145, %v5142
        %v5221 = vpack.c.b16 %v5146, %v5143
        %v5222 = vpack.c.b16 %v5150, %v5147
        %v5223 = vpack.c.b16 %v5151, %v5148
        %v5224 = vpack.c.b16 %v5152, %v5149
        %v5225 = vpack.c.b16 %v5156, %v5153
        %v5226 = vpack.c.b16 %v5157, %v5154
        %v5227 = vpack.c.b16 %v5158, %v5155
        %v5228 = vpack.c.b16 %v5162, %v5159
        %v5229 = vpack.c.b16 %v5163, %v5160
        %v5230 = vpack.c.b16 %v5164, %v5161
        %v5231 = vpack.c.b16 %v5168, %v5165
        %v5232 = vpack.c.b16 %v5169, %v5166
        %v5233 = vpack.c.b16 %v5170, %v5167
        %v5234 = vpack.c.b16 %v5174, %v5171
        %v5235 = vpack.c.b16 %v5175, %v5172
        %v5236 = vpack.c.b16 %v5176, %v5173
        %v5237 = vpack.c.b16 %v5180, %v5177
        %v5238 = vpack.c.b16 %v5181, %v5178
        %v5239 = vpack.c.b16 %v5182, %v5179
        %v5240 = vpack.c.b16 %v5186, %v5183
        %v5241 = vpack.c.b16 %v5187, %v5184
        %v5242 = vpack.c.b16 %v5188, %v5185
        %v5243 = vpack.c.b16 %v5192, %v5189
        %v5244 = vpack.c.b16 %v5193, %v5190
        %v5245 = vpack.c.b16 %v5194, %v5191
        %v5246 = vpack.c.b16 %v5198, %v5195
        %v5247 = vpack.c.b16 %v5199, %v5196
        %v5248 = vpack.c.b16 %v5200, %v5197
        %5297 = vmatpush.bf16.msra.mxu0 %v5222
        %5298 = vmatpush.bf16.msra.mxu0 %v5219
        %5299 = vmatpush.bf16.msra.mxu0 %v5216
        %5300 = vmatpush.bf16.msra.mxu0 %v5213
        %5301 = vmatpush.bf16.msra.mxu0 %v5210
        %5302 = vmatpush.bf16.msra.mxu0 %v5207
        %5303 = vmatpush.bf16.msra.mxu0 %v5204
        %5304 = vmatpush.bf16.msra.mxu0 %v5201
        %5305 = vmatmul.bf16.gmra.mxu0 %v4973
        %v5306 = vpop.f32.mrf.mxu0
        %v5307 = vadd.f32 0.0, %v5306
        %v5308 = vpop.f32.mrf.mxu0
        %v5309 = vadd.f32 0.0, %v5308
        %5310 = vmatmul.bf16.gmra.mxu0 %v4975
        %v5311 = vpop.f32.mrf.mxu0
        %v5312 = vadd.f32 0.0, %v5311
        %v5313 = vpop.f32.mrf.mxu0
        %v5314 = vadd.f32 0.0, %v5313
        %5315 = vdwg.mxu0
        %5316 = vmatpush.bf16.msra.mxu0 %v5246
        %5317 = vmatpush.bf16.msra.mxu0 %v5243
        %5318 = vmatpush.bf16.msra.mxu0 %v5240
        %5319 = vmatpush.bf16.msra.mxu0 %v5237
        %5320 = vmatpush.bf16.msra.mxu0 %v5234
        %5321 = vmatpush.bf16.msra.mxu0 %v5231
        %5322 = vmatpush.bf16.msra.mxu0 %v5228
        %5323 = vmatpush.bf16.msra.mxu0 %v5225
        %5324 = vmatmul.bf16.gmra.mxu0 %v4974
        %v5325 = vpop.f32.mrf.mxu0
        %v5326 = vadd.f32 %v5307, %v5325
        %v5327 = vpop.f32.mrf.mxu0
        %v5328 = vadd.f32 %v5309, %v5327
        %5329 = vmatmul.bf16.gmra.mxu0 %v4976
        %v5330 = vpop.f32.mrf.mxu0
        %v5331 = vadd.f32 %v5312, %v5330
        %v5332 = vpop.f32.mrf.mxu0
        %v5333 = vadd.f32 %v5314, %v5332
        %5334 = vdwg.mxu0
        %5335 = vmatpush.bf16.msra.mxu0 %v5223
        %5336 = vmatpush.bf16.msra.mxu0 %v5220
        %5337 = vmatpush.bf16.msra.mxu0 %v5217
        %5338 = vmatpush.bf16.msra.mxu0 %v5214
        %5339 = vmatpush.bf16.msra.mxu0 %v5211
        %5340 = vmatpush.bf16.msra.mxu0 %v5208
        %5341 = vmatpush.bf16.msra.mxu0 %v5205
        %5342 = vmatpush.bf16.msra.mxu0 %v5202
        %5343 = vmatmul.bf16.gmra.mxu0 %v4973
        %v5344 = vpop.f32.mrf.mxu0
        %v5345 = vadd.f32 0.0, %v5344
        %v5346 = vpop.f32.mrf.mxu0
        %v5347 = vadd.f32 0.0, %v5346
        %5348 = vmatmul.bf16.gmra.mxu0 %v4975
        %v5349 = vpop.f32.mrf.mxu0
        %v5350 = vadd.f32 0.0, %v5349
        %v5351 = vpop.f32.mrf.mxu0
        %v5352 = vadd.f32 0.0, %v5351
        %5353 = vdwg.mxu0
        %5354 = vmatpush.bf16.msra.mxu0 %v5247
        %5355 = vmatpush.bf16.msra.mxu0 %v5244
        %5356 = vmatpush.bf16.msra.mxu0 %v5241
        %5357 = vmatpush.bf16.msra.mxu0 %v5238
        %5358 = vmatpush.bf16.msra.mxu0 %v5235
        %5359 = vmatpush.bf16.msra.mxu0 %v5232
        %5360 = vmatpush.bf16.msra.mxu0 %v5229
        %5361 = vmatpush.bf16.msra.mxu0 %v5226
        %5362 = vmatmul.bf16.gmra.mxu0 %v4974
        %v5363 = vpop.f32.mrf.mxu0
        %v5364 = vadd.f32 %v5345, %v5363
        %v5365 = vpop.f32.mrf.mxu0
        %v5366 = vadd.f32 %v5347, %v5365
        %5367 = vmatmul.bf16.gmra.mxu0 %v4976
        %v5368 = vpop.f32.mrf.mxu0
        %v5369 = vadd.f32 %v5350, %v5368
        %v5370 = vpop.f32.mrf.mxu0
        %v5371 = vadd.f32 %v5352, %v5370
        %5372 = vdwg.mxu0
        %5373 = vmatpush.bf16.msra.mxu0 %v5224
        %5374 = vmatpush.bf16.msra.mxu0 %v5221
        %5375 = vmatpush.bf16.msra.mxu0 %v5218
        %5376 = vmatpush.bf16.msra.mxu0 %v5215
        %5377 = vmatpush.bf16.msra.mxu0 %v5212
        %5378 = vmatpush.bf16.msra.mxu0 %v5209
        %5379 = vmatpush.bf16.msra.mxu0 %v5206
        %5380 = vmatpush.bf16.msra.mxu0 %v5203
        %5381 = vmatmul.bf16.gmra.mxu0 %v4973
        %v5382 = vpop.f32.mrf.mxu0
        %v5383 = vadd.f32 0.0, %v5382
        %v5384 = vpop.f32.mrf.mxu0
        %v5385 = vadd.f32 0.0, %v5384
        %5386 = vmatmul.bf16.gmra.mxu0 %v4975
        %v5387 = vpop.f32.mrf.mxu0
        %v5388 = vadd.f32 0.0, %v5387
        %v5389 = vpop.f32.mrf.mxu0
        %v5390 = vadd.f32 0.0, %v5389
        %5391 = vdwg.mxu0
        %5392 = vmatpush.bf16.msra.mxu0 %v5248
        %5393 = vmatpush.bf16.msra.mxu0 %v5245
        %5394 = vmatpush.bf16.msra.mxu0 %v5242
        %5395 = vmatpush.bf16.msra.mxu0 %v5239
        %5396 = vmatpush.bf16.msra.mxu0 %v5236
        %5397 = vmatpush.bf16.msra.mxu0 %v5233
        %5398 = vmatpush.bf16.msra.mxu0 %v5230
        %5399 = vmatpush.bf16.msra.mxu0 %v5227
        %5400 = vmatmul.bf16.gmra.mxu0 %v4974
        %v5401 = vpop.f32.mrf.mxu0
        %v5402 = vadd.f32 %v5383, %v5401
        %v5403 = vpop.f32.mrf.mxu0
        %v5404 = vadd.f32 %v5385, %v5403
        %5405 = vmatmul.bf16.gmra.mxu0 %v4976
        %v5406 = vpop.f32.mrf.mxu0
        %v5407 = vadd.f32 %v5388, %v5406
        %v5408 = vpop.f32.mrf.mxu0
        %v5409 = vadd.f32 %v5390, %v5408
        %5410 = vdwg.mxu0
        %v5411 = vld [vmem:[%s17] sm:$0xff]
        %v5412 = vld [vmem:[%s17 + $0x8] sm:$0xff]
        %v5413 = vld [vmem:[%s17 + $0x10] sm:$0xff]
        %v5414 = vld [vmem:[%s17 + $0x18] sm:$0xff]
        %vm5415 = vcmask 261120
        %v5417 = vsel %vm5415, %v5411, 0
        %v5420 = vsel %vm5415, %v5412, 0
        %v5423 = vsel %vm5415, %v5413, 0
        %v5426 = vsel %vm5415, %v5414, 0
        %5428 = vmatpush.msra.mxu0 0.0
        %5429 = vmatpush.msra.mxu0 0.0
        %5430 = vmatpush.msra.mxu0 0.0
        %5431 = vmatpush.msra.mxu0 0.0
        %5432 = vmatpush.msra.mxu0 0.0
        %5433 = vmatpush.msra.mxu0 0.0
        %5434 = vmatpush.msra.mxu0 0.0
        %5435 = vmatpush.msra.mxu0 0.0
        %5436 = vmatpush.msra.mxu0 0.0
        %5437 = vmatpush.msra.mxu0 0.0
        %5438 = vmatpush.msra.mxu0 0.0
        %5439 = vmatpush.msra.mxu0 0.0
        %5440 = vmatpush.msra.mxu0 %v5371
        %5441 = vmatpush.msra.mxu0 %v5369
        %5442 = vmatpush.msra.mxu0 %v5366
        %5443 = vmatpush.msra.mxu0 %v5364
        %5444 = vmatmul.f32.gmra.mxu0 %v5417
        %v5445 = vpop.f32.mrf.mxu0
        %v5446 = vadd.f32 0.0, %v5445
        %5447 = vmatmul.f32.gmra.mxu0 %v5420
        %v5448 = vpop.f32.mrf.mxu0
        %v5449 = vadd.f32 0.0, %v5448
        %5450 = vmatmul.f32.gmra.mxu0 %v5423
        %v5451 = vpop.f32.mrf.mxu0
        %v5452 = vadd.f32 0.0, %v5451
        %5453 = vmatmul.f32.gmra.mxu0 %v5426
        %v5454 = vpop.f32.mrf.mxu0
        %v5455 = vadd.f32 0.0, %v5454
        %5456 = vdwg.mxu0
        %v5457 = vadd.f32 %v5326, %v5446
        %v5458 = vadd.f32 %v5328, %v5449
        %v5459 = vadd.f32 %v5331, %v5452
        %v5460 = vadd.f32 %v5333, %v5455
        %s5461 = scalar_lea.vmem %s17, 32
        %v5462 = vld [vmem:[%s5461] sm:$0xff]
        %v5463 = vld [vmem:[%s5461 + $0x8] sm:$0xff]
        %v5464 = vld [vmem:[%s5461 + $0x10] sm:$0xff]
        %v5465 = vld [vmem:[%s5461 + $0x18] sm:$0xff]
        %v5467 = vsel %vm5415, %v5462, 0
        %v5470 = vsel %vm5415, %v5463, 0
        %v5473 = vsel %vm5415, %v5464, 0
        %v5476 = vsel %vm5415, %v5465, 0
        %5478 = vmatpush.msra.mxu0 0.0
        %5479 = vmatpush.msra.mxu0 0.0
        %5480 = vmatpush.msra.mxu0 0.0
        %5481 = vmatpush.msra.mxu0 0.0
        %5482 = vmatpush.msra.mxu0 0.0
        %5483 = vmatpush.msra.mxu0 0.0
        %5484 = vmatpush.msra.mxu0 0.0
        %5485 = vmatpush.msra.mxu0 0.0
        %5486 = vmatpush.msra.mxu0 0.0
        %5487 = vmatpush.msra.mxu0 0.0
        %5488 = vmatpush.msra.mxu0 0.0
        %5489 = vmatpush.msra.mxu0 0.0
        %5490 = vmatpush.msra.mxu0 %v5409
        %5491 = vmatpush.msra.mxu0 %v5407
        %5492 = vmatpush.msra.mxu0 %v5404
        %5493 = vmatpush.msra.mxu0 %v5402
        %5494 = vmatmul.f32.gmra.mxu0 %v5467
        %v5495 = vpop.f32.mrf.mxu0
        %v5496 = vadd.f32 0.0, %v5495
        %5497 = vmatmul.f32.gmra.mxu0 %v5470
        %v5498 = vpop.f32.mrf.mxu0
        %v5499 = vadd.f32 0.0, %v5498
        %5500 = vmatmul.f32.gmra.mxu0 %v5473
        %v5501 = vpop.f32.mrf.mxu0
        %v5502 = vadd.f32 0.0, %v5501
        %5503 = vmatmul.f32.gmra.mxu0 %v5476
        %v5504 = vpop.f32.mrf.mxu0
        %v5505 = vadd.f32 0.0, %v5504
        %5506 = vdwg.mxu0
        %v5507 = vadd.f32 %v5457, %v5496
        %v5508 = vadd.f32 %v5458, %v5499
        %v5509 = vadd.f32 %v5459, %v5502
        %v5510 = vadd.f32 %v5460, %v5505
        %v5511 = vld [vmem:[%s16] sm:$0x1]
        %v5513 = vperm.slane %v5511, 0
        %v5515 = vadd.f32 %v5507, %v5513
        %v5516 = vadd.f32 %v5508, %v5513
        %v5517 = vadd.f32 %v5509, %v5513
        %v5518 = vadd.f32 %v5510, %v5513
        %5519 = vst [vmem:[%s652] sm:$0xff] %v5515
        %5520 = vst [vmem:[%s652 + $0x8] sm:$0xff] %v5516
        %5521 = vst [vmem:[%s652 + $0x10] sm:$0xff] %v5517
        %5522 = vst [vmem:[%s652 + $0x18] sm:$0xff] %v5518
        %p5523 = scmp.lt.s32.totalorder %s32, 1
        %s5524 = scalar_select %p5523, %s32, 1
        %s5525 = smul.addr %s5524, 4
        %s5526 = smul.addr %s5525, 8
        %s5527 = scalar_lea.vmem %s18, %s5526
        // Predicated region
        $region113: #{forward.1} parent=91 // pred_check
          %p5528 = pneg %p433
        $region114: #{forward.1} parent=91 // pred_check_branch
          %5530 = sbr.rel (%p5528) target = $region116
        $region115: #{forward.1} parent=91 // pred_region
          _
        $region116: #{forward.1} parent=91 // pred_fallthru
          _
      $region92: #{forward.1} parent=5 // pred_fallthru
        _
      %p5531 = scmp.le.s32.totalorder 2, %s27
      // Predicated region
      $region117: #{forward.1} parent=5 // pred_check
        %p5532 = pneg %p5531
      $region118: #{forward.1} parent=5 // pred_check_branch
        %5534 = sbr.rel (%p5532) target = $region120
      $region119: #{forward.1} parent=5 // pred_region
        %s5535 = ssub.s32 %s27, 2
        // Predicated region
        $region121: #{forward.1} parent=119 // pred_check
          %p5536 = pneg %p439
        $region122: #{forward.1} parent=119 // pred_check_branch
          %5538 = sbr.rel (%p5536) target = $region124
        $region123: #{forward.1} parent=119 // pred_region
          %p5539 = scmp.lt.s32.totalorder %s33, 1
          %s5540 = scalar_select %p5539, %s33, 1
          %s5541 = smul.addr %s5540, 4
          %s5542 = smul.addr %s5541, 8
          %s5543 = scalar_lea.vmem %s18, %s5542
        $region124: #{forward.1} parent=119 // pred_fallthru
          _
      $region120: #{forward.1} parent=5 // pred_fallthru
        _
    $region6: #{forward.1} parent=1 // loop_footer
      %s31 = sadd.s32 1, %s27
    $region7: #{forward.1} parent=1 // loop_footer_branch
      %26 = sbr.rel target = $region3
    $region8: #{forward.1} parent=1 // loop_exit
      _
    %5544 = vsyncpa [#allocation3], 1
    %s5545 = scalar_lea.sflag [#allocation3], 1
    %5546 = vsyncpa %s5545, 1
    %5547 = vsyncpa [#allocation5], 1
    %5548 = vsyncpa [#allocation8], 1

</llo_original>
